<compile_context>
chip_gen: v7x
topology: tpu7x:2x2x1
jax: 0.10.0
libtpu: 0.0.40
codegen_flags: <defaults>
</compile_context>

<pallas_src>
import jax
import jax.numpy as jnp
import numpy as np
from jax.experimental import pallas as pl
from jax.experimental.pallas import tpu as pltpu

LINEAR_SIZE = 32   # original `linear_size = 0` is unusable
NUM_CLASSES = 10   # len(classes)
C_FEAT = 64


# ----------------------------------------------------------------------------
# Kernel 1: conv(3x3,pad=1) + bias + ReLU + maxpool(2,2) + avgpool(2,2)
#
# Patches arrive pre-grouped as (N, 16, K, 49) with
#   group   g = (ph*2+pw)*4 + (mh*2+mw)   (ph,pw): pos in 2x2 avg window,
#                                         (mh,mw): pos in 2x2 max window
#   column  b = bh*7 + bw                 the 7x7 avg-pool bin (row-major)
# so maxpool = max over the inner 4 groups, avgpool = mean over the outer 4,
# and the output tile (C, 49) is exactly torch's NCHW flatten order.
# ----------------------------------------------------------------------------
def _feature_kernel(p_ref, w_ref, b_ref, o_ref):
    w = w_ref[...]                     # (C, K)  bf16
    bias = b_ref[...]                  # (C, 1)  f32, broadcasts over lanes
    acc = None
    for a in range(4):                 # avg-pool positions
        m = None
        for bpos in range(4):          # max-pool positions
            g = a * 4 + bpos
            v = jnp.dot(w, p_ref[0, g, :, :],
                        preferred_element_type=jnp.float32) + bias
            v = jnp.maximum(v, 0.0)    # fused ReLU (f32)
            m = v if m is None else jnp.maximum(m, v)
        acc = m if acc is None else acc + m
    o_ref[0, :, :] = (acc * 0.25).astype(o_ref.dtype)


def conv_relu_pool(patches, conv_w, conv_b):
    N, G, K, B = patches.shape
    C = conv_w.shape[0]
    cost = pl.CostEstimate(
        flops=2 * N * G * C * K * B,
        transcendentals=0,
        bytes_accessed=(patches.size * 2 + conv_w.size * 2
                        + conv_b.size * 4 + N * C * B * 4),
    )
    return pl.pallas_call(
        _feature_kernel,
        grid=(N,),
        out_shape=jax.ShapeDtypeStruct((N, C, B), jnp.float32),
        in_specs=[
            pl.BlockSpec((1, G, K, B), lambda n: (n, 0, 0, 0)),
            pl.BlockSpec((C, K), lambda n: (0, 0)),
            pl.BlockSpec((C, 1), lambda n: (0, 0)),
        ],
        out_specs=pl.BlockSpec((1, C, B), lambda n: (n, 0, 0)),
        compiler_params=pltpu.CompilerParams(
            dimension_semantics=("parallel",),   # v7x: both TCs used
        ),
        cost_estimate=cost,
    )(patches, conv_w, conv_b)


# ----------------------------------------------------------------------------
# Kernel 2: classifier = Linear -> ReLU -> (Dropout: eval identity) -> Linear
# ----------------------------------------------------------------------------
def _classifier_kernel(x_ref, w1_ref, b1_ref, w2_ref, b2_ref, o_ref):
    h = jnp.dot(x_ref[...], w1_ref[...], preferred_element_type=jnp.float32)
    h = jnp.maximum(h + b1_ref[...], 0.0)
    # TODO(synk): training-mode dropout (p=0.5) not implemented; eval semantics.
    o = jnp.dot(h, w2_ref[...], preferred_element_type=jnp.float32) + b2_ref[...]
    o_ref[...] = o.astype(o_ref.dtype)


def classifier(x, w1, b1, w2, b2):
    M, K = x.shape
    Hd = w1.shape[1]
    O = w2.shape[1]
    return pl.pallas_call(
        _classifier_kernel,
        grid=(1,),
        out_shape=jax.ShapeDtypeStruct((M, O), jnp.float32),
        in_specs=[
            pl.BlockSpec((M, K), lambda i: (0, 0)),
            pl.BlockSpec((K, Hd), lambda i: (0, 0)),
            pl.BlockSpec((1, Hd), lambda i: (0, 0)),
            pl.BlockSpec((Hd, O), lambda i: (0, 0)),
            pl.BlockSpec((1, O), lambda i: (0, 0)),
        ],
        out_specs=pl.BlockSpec((M, O), lambda i: (0, 0)),
        compiler_params=pltpu.CompilerParams(
            dimension_semantics=("arbitrary",)),
    )(x, w1, b1, w2, b2)


# ----------------------------------------------------------------------------
# Wrapper glue: im2col for the 3x3/pad-1 conv, regrouped for fused pooling
# ----------------------------------------------------------------------------
def build_patches(x_nhwc):
    """Returns (N, 16, 9*Cin, 49) bf16 patches; see _feature_kernel layout."""
    N, H, W, C = x_nhwc.shape
    xp = jnp.pad(x_nhwc, ((0, 0), (1, 1), (1, 1), (0, 0)))
    cols = []
    for dy in range(3):
        for dx in range(3):
            cols.append(xp[:, dy:dy + H, dx:dx + W, :])
    p = jnp.concatenate(cols, axis=-1)                  # (N,H,W,9C), k=(ky,kx,cin)
    # pixel (h, w):  h = bh*4 + ph*2 + mh,  w = bw*4 + pw*2 + mw
    p = p.reshape(N, H // 4, 2, 2, W // 4, 2, 2, 9 * C)  # (n,bh,ph,mh,bw,pw,mw,k)
    p = jnp.transpose(p, (0, 2, 5, 3, 6, 7, 1, 4))       # (n,ph,pw,mh,mw,k,bh,bw)
    p = p.reshape(N, 16, 9 * C, (H // 4) * (W // 4))
    return p.astype(jnp.bfloat16)


# ----------------------------------------------------------------------------
# Parameter init (matches the torch module's init scheme, deterministic)
# ----------------------------------------------------------------------------
def init_params(key, c_in=3, c_feat=C_FEAT, linear_size=LINEAR_SIZE,
                num_classes=NUM_CLASSES):
    k1, k2, k3 = jax.random.split(key, 3)
    # Conv2d: kaiming_normal_(mode='fan_out', nonlinearity='relu'), bias 0
    fan_out = c_feat * 3 * 3
    w_oihw = jax.random.normal(k1, (c_feat, c_in, 3, 3), jnp.float32) * jnp.sqrt(
        2.0 / fan_out)
    # kernel layout: (Cout, k) with k = ky*3*Cin + kx*Cin + cin; bf16 operands
    conv_w = jnp.transpose(w_oihw, (0, 2, 3, 1)).reshape(c_feat, 9 * c_in)
    conv_w = conv_w.astype(jnp.bfloat16)
    conv_b = jnp.zeros((c_feat, 1), jnp.float32)
    # Linear: normal(0, 0.01), bias 0. Stored pre-transposed: [in, out].
    fc1_w = jax.random.normal(k2, (c_feat * 7 * 7, linear_size), jnp.float32) * 0.01
    fc1_b = jnp.zeros((1, linear_size), jnp.float32)
    fc2_w = jax.random.normal(k3, (linear_size, num_classes), jnp.float32) * 0.01
    fc2_b = jnp.zeros((1, num_classes), jnp.float32)
    return dict(conv_w=conv_w, conv_b=conv_b,
                fc1_w=fc1_w, fc1_b=fc1_b, fc2_w=fc2_w, fc2_b=fc2_b)


# ----------------------------------------------------------------------------
# Forward pass (two pallas_calls + tiny XLA glue, jitted)
# ----------------------------------------------------------------------------
@jax.jit
def vgg_forward(x_nchw, params):
    N, C_in, H, W = x_nchw.shape
    # This feature stack assumes 28x28 input so AdaptiveAvgPool2d((7,7)) is an
    # exact 2x2 mean over the 14x14 max-pooled map.
    assert H == 28 and W == 28, "feature stack assumes 28x28 input"
    x = jnp.transpose(x_nchw, (0, 2, 3, 1))              # NCHW -> NHWC
    patches = build_patches(x)                           # (N,16,27,49) bf16
    feat = conv_relu_pool(patches, params["conv_w"], params["conv_b"])
    flat = feat.reshape(N, -1)                           # already NCHW order
    return classifier(flat, params["fc1_w"], params["fc1_b"],
                      params["fc2_w"], params["fc2_b"])


# ----------------------------------------------------------------------------
# Pure-XLA reference (same bf16-rounded conv operands) for a sanity check
# ----------------------------------------------------------------------------
def reference_forward(x_nchw, params):
    N = x_nchw.shape[0]
    c_feat = params["conv_w"].shape[0]
    x = jnp.transpose(x_nchw, (0, 2, 3, 1)).astype(jnp.bfloat16).astype(jnp.float32)
    w_hwio = jnp.transpose(
        params["conv_w"].astype(jnp.float32).reshape(c_feat, 3, 3, -1),
        (1, 2, 3, 0))
    y = jax.lax.conv_general_dilated(
        x, w_hwio, window_strides=(1, 1), padding="SAME",
        dimension_numbers=("NHWC", "HWIO", "NHWC"),
        preferred_element_type=jnp.float32)
    y = jnp.maximum(y + params["conv_b"].reshape(1, 1, 1, c_feat), 0.0)
    y = jax.lax.reduce_window(y, -jnp.inf, jax.lax.max,
                              (1, 2, 2, 1), (1, 2, 2, 1), "VALID")
    y = jax.lax.reduce_window(y, 0.0, jax.lax.add,
                              (1, 2, 2, 1), (1, 2, 2, 1), "VALID") * 0.25
    flat = jnp.transpose(y, (0, 3, 1, 2)).reshape(N, -1)
    h = jnp.maximum(
        jnp.dot(flat, params["fc1_w"], precision=jax.lax.Precision.HIGHEST)
        + params["fc1_b"], 0.0)
    out = (jnp.dot(h, params["fc2_w"], precision=jax.lax.Precision.HIGHEST)
           + params["fc2_b"])
    return flat, out


if __name__ == "__main__":
    key = jax.random.PRNGKey(0)
    k_x, k_p = jax.random.split(key)
    x = jax.random.normal(k_x, (2, 3, 28, 28), jnp.float32)   # small NCHW input
    params = init_params(k_p)

    logits = vgg_forward(x, params)
    jax.block_until_ready(logits)
    assert logits.shape == (2, NUM_CLASSES), logits.shape

    # correctness sanity check against the pure-XLA reference
    ref_flat, ref_logits = reference_forward(x, params)
    kern_flat = conv_relu_pool(
        build_patches(jnp.transpose(x, (0, 2, 3, 1))),
        params["conv_w"], params["conv_b"]).reshape(2, -1)
    assert np.allclose(np.asarray(kern_flat), np.asarray(ref_flat),
                       atol=1e-3, rtol=1e-2), "feature mismatch"
    assert np.allclose(np.asarray(logits), np.asarray(ref_logits),
                       atol=1e-3, rtol=1e-2), "logits mismatch"
    print("KERNEL_OK")
</pallas_src>

<mosaic_0001>
module attributes {stable_mosaic.version = 11 : i64} {
  func.func @_feature_kernel(%arg0: i32, %arg1: memref<1x16x27x49xbf16, #tpu.memory_space<vmem>>, %arg2: memref<64x27xbf16, #tpu.memory_space<vmem>>, %arg3: memref<64x1xf32, #tpu.memory_space<vmem>>, %arg4: memref<1x64x49xf32, #tpu.memory_space<vmem>>) attributes {dimension_semantics = [#tpu.dimension_semantics<parallel>], iteration_bounds = array<i64: 2>, scalar_prefetch = 0 : i64, scratch_operands = 0 : i64, tpu.core_type = #tpu.core_type<tc>, window_params = [{transform_indices = @transform_0, window_bounds = array<i64: 1, 16, 27, 49>}, {pipeline_mode = #tpu.pipeline_mode<synchronous>, transform_indices = @transform_1, window_bounds = array<i64: 64, 27>}, {pipeline_mode = #tpu.pipeline_mode<synchronous>, transform_indices = @transform_2, window_bounds = array<i64: 64, 1>}, {transform_indices = @transform_3, window_bounds = array<i64: 1, 64, 49>}]} {
    %c0 = arith.constant 0 : index
    %c0_0 = arith.constant 0 : index
    %0 = vector.load %arg2[%c0, %c0_0] : memref<64x27xbf16, #tpu.memory_space<vmem>>, vector<64x27xbf16>
    %c0_1 = arith.constant 0 : index
    %c0_2 = arith.constant 0 : index
    %1 = vector.load %arg3[%c0_1, %c0_2] : memref<64x1xf32, #tpu.memory_space<vmem>>, vector<64x1xf32>
    %c0_3 = arith.constant 0 : index
    %c0_4 = arith.constant 0 : index
    %c0_5 = arith.constant 0 : index
    %c0_6 = arith.constant 0 : index
    %2 = vector.load %arg1[%c0_3, %c0_4, %c0_5, %c0_6] : memref<1x16x27x49xbf16, #tpu.memory_space<vmem>>, vector<1x1x27x49xbf16>
    %3 = vector.shape_cast %2 : vector<1x1x27x49xbf16> to vector<27x49xbf16>
    %cst = arith.constant dense<0.000000e+00> : vector<64x49xf32>
    %4 = tpu.matmul %0, %3, %cst {dimension_numbers = #tpu.dot_dimension_numbers<[1], [0], [0], [1], [0, 0, 1, 1], [], []>} : vector<64x27xbf16>, vector<27x49xbf16>, vector<64x49xf32> -> vector<64x49xf32>
    %5 = vector.broadcast %1 : vector<64x1xf32> to vector<64x49xf32>
    %6 = arith.addf %4, %5 : vector<64x49xf32>
    %cst_7 = arith.constant 0.000000e+00 : f32
    %7 = vector.broadcast %cst_7 : f32 to vector<64x49xf32>
    %8 = arith.maximumf %6, %7 : vector<64x49xf32>
    %c0_8 = arith.constant 0 : index
    %c1 = arith.constant 1 : index
    %c0_9 = arith.constant 0 : index
    %c0_10 = arith.constant 0 : index
    %9 = vector.load %arg1[%c0_8, %c1, %c0_9, %c0_10] : memref<1x16x27x49xbf16, #tpu.memory_space<vmem>>, vector<1x1x27x49xbf16>
    %10 = vector.shape_cast %9 : vector<1x1x27x49xbf16> to vector<27x49xbf16>
    %cst_11 = arith.constant dense<0.000000e+00> : vector<64x49xf32>
    %11 = tpu.matmul %0, %10, %cst_11 {dimension_numbers = #tpu.dot_dimension_numbers<[1], [0], [0], [1], [0, 0, 1, 1], [], []>} : vector<64x27xbf16>, vector<27x49xbf16>, vector<64x49xf32> -> vector<64x49xf32>
    %12 = vector.broadcast %1 : vector<64x1xf32> to vector<64x49xf32>
    %13 = arith.addf %11, %12 : vector<64x49xf32>
    %cst_12 = arith.constant 0.000000e+00 : f32
    %14 = vector.broadcast %cst_12 : f32 to vector<64x49xf32>
    %15 = arith.maximumf %13, %14 : vector<64x49xf32>
    %16 = arith.maximumf %8, %15 : vector<64x49xf32>
    %c0_13 = arith.constant 0 : index
    %c2 = arith.constant 2 : index
    %c0_14 = arith.constant 0 : index
    %c0_15 = arith.constant 0 : index
    %17 = vector.load %arg1[%c0_13, %c2, %c0_14, %c0_15] : memref<1x16x27x49xbf16, #tpu.memory_space<vmem>>, vector<1x1x27x49xbf16>
    %18 = vector.shape_cast %17 : vector<1x1x27x49xbf16> to vector<27x49xbf16>
    %cst_16 = arith.constant dense<0.000000e+00> : vector<64x49xf32>
    %19 = tpu.matmul %0, %18, %cst_16 {dimension_numbers = #tpu.dot_dimension_numbers<[1], [0], [0], [1], [0, 0, 1, 1], [], []>} : vector<64x27xbf16>, vector<27x49xbf16>, vector<64x49xf32> -> vector<64x49xf32>
    %20 = vector.broadcast %1 : vector<64x1xf32> to vector<64x49xf32>
    %21 = arith.addf %19, %20 : vector<64x49xf32>
    %cst_17 = arith.constant 0.000000e+00 : f32
    %22 = vector.broadcast %cst_17 : f32 to vector<64x49xf32>
    %23 = arith.maximumf %21, %22 : vector<64x49xf32>
    %24 = arith.maximumf %16, %23 : vector<64x49xf32>
    %c0_18 = arith.constant 0 : index
    %c3 = arith.constant 3 : index
    %c0_19 = arith.constant 0 : index
    %c0_20 = arith.constant 0 : index
    %25 = vector.load %arg1[%c0_18, %c3, %c0_19, %c0_20] : memref<1x16x27x49xbf16, #tpu.memory_space<vmem>>, vector<1x1x27x49xbf16>
    %26 = vector.shape_cast %25 : vector<1x1x27x49xbf16> to vector<27x49xbf16>
    %cst_21 = arith.constant dense<0.000000e+00> : vector<64x49xf32>
    %27 = tpu.matmul %0, %26, %cst_21 {dimension_numbers = #tpu.dot_dimension_numbers<[1], [0], [0], [1], [0, 0, 1, 1], [], []>} : vector<64x27xbf16>, vector<27x49xbf16>, vector<64x49xf32> -> vector<64x49xf32>
    %28 = vector.broadcast %1 : vector<64x1xf32> to vector<64x49xf32>
    %29 = arith.addf %27, %28 : vector<64x49xf32>
    %cst_22 = arith.constant 0.000000e+00 : f32
    %30 = vector.broadcast %cst_22 : f32 to vector<64x49xf32>
    %31 = arith.maximumf %29, %30 : vector<64x49xf32>
    %32 = arith.maximumf %24, %31 : vector<64x49xf32>
    %c0_23 = arith.constant 0 : index
    %c4 = arith.constant 4 : index
    %c0_24 = arith.constant 0 : index
    %c0_25 = arith.constant 0 : index
    %33 = vector.load %arg1[%c0_23, %c4, %c0_24, %c0_25] : memref<1x16x27x49xbf16, #tpu.memory_space<vmem>>, vector<1x1x27x49xbf16>
    %34 = vector.shape_cast %33 : vector<1x1x27x49xbf16> to vector<27x49xbf16>
    %cst_26 = arith.constant dense<0.000000e+00> : vector<64x49xf32>
    %35 = tpu.matmul %0, %34, %cst_26 {dimension_numbers = #tpu.dot_dimension_numbers<[1], [0], [0], [1], [0, 0, 1, 1], [], []>} : vector<64x27xbf16>, vector<27x49xbf16>, vector<64x49xf32> -> vector<64x49xf32>
    %36 = vector.broadcast %1 : vector<64x1xf32> to vector<64x49xf32>
    %37 = arith.addf %35, %36 : vector<64x49xf32>
    %cst_27 = arith.constant 0.000000e+00 : f32
    %38 = vector.broadcast %cst_27 : f32 to vector<64x49xf32>
    %39 = arith.maximumf %37, %38 : vector<64x49xf32>
    %c0_28 = arith.constant 0 : index
    %c5 = arith.constant 5 : index
    %c0_29 = arith.constant 0 : index
    %c0_30 = arith.constant 0 : index
    %40 = vector.load %arg1[%c0_28, %c5, %c0_29, %c0_30] : memref<1x16x27x49xbf16, #tpu.memory_space<vmem>>, vector<1x1x27x49xbf16>
    %41 = vector.shape_cast %40 : vector<1x1x27x49xbf16> to vector<27x49xbf16>
    %cst_31 = arith.constant dense<0.000000e+00> : vector<64x49xf32>
    %42 = tpu.matmul %0, %41, %cst_31 {dimension_numbers = #tpu.dot_dimension_numbers<[1], [0], [0], [1], [0, 0, 1, 1], [], []>} : vector<64x27xbf16>, vector<27x49xbf16>, vector<64x49xf32> -> vector<64x49xf32>
    %43 = vector.broadcast %1 : vector<64x1xf32> to vector<64x49xf32>
    %44 = arith.addf %42, %43 : vector<64x49xf32>
    %cst_32 = arith.constant 0.000000e+00 : f32
    %45 = vector.broadcast %cst_32 : f32 to vector<64x49xf32>
    %46 = arith.maximumf %44, %45 : vector<64x49xf32>
    %47 = arith.maximumf %39, %46 : vector<64x49xf32>
    %c0_33 = arith.constant 0 : index
    %c6 = arith.constant 6 : index
    %c0_34 = arith.constant 0 : index
    %c0_35 = arith.constant 0 : index
    %48 = vector.load %arg1[%c0_33, %c6, %c0_34, %c0_35] : memref<1x16x27x49xbf16, #tpu.memory_space<vmem>>, vector<1x1x27x49xbf16>
    %49 = vector.shape_cast %48 : vector<1x1x27x49xbf16> to vector<27x49xbf16>
    %cst_36 = arith.constant dense<0.000000e+00> : vector<64x49xf32>
    %50 = tpu.matmul %0, %49, %cst_36 {dimension_numbers = #tpu.dot_dimension_numbers<[1], [0], [0], [1], [0, 0, 1, 1], [], []>} : vector<64x27xbf16>, vector<27x49xbf16>, vector<64x49xf32> -> vector<64x49xf32>
    %51 = vector.broadcast %1 : vector<64x1xf32> to vector<64x49xf32>
    %52 = arith.addf %50, %51 : vector<64x49xf32>
    %cst_37 = arith.constant 0.000000e+00 : f32
    %53 = vector.broadcast %cst_37 : f32 to vector<64x49xf32>
    %54 = arith.maximumf %52, %53 : vector<64x49xf32>
    %55 = arith.maximumf %47, %54 : vector<64x49xf32>
    %c0_38 = arith.constant 0 : index
    %c7 = arith.constant 7 : index
    %c0_39 = arith.constant 0 : index
    %c0_40 = arith.constant 0 : index
    %56 = vector.load %arg1[%c0_38, %c7, %c0_39, %c0_40] : memref<1x16x27x49xbf16, #tpu.memory_space<vmem>>, vector<1x1x27x49xbf16>
    %57 = vector.shape_cast %56 : vector<1x1x27x49xbf16> to vector<27x49xbf16>
    %cst_41 = arith.constant dense<0.000000e+00> : vector<64x49xf32>
    %58 = tpu.matmul %0, %57, %cst_41 {dimension_numbers = #tpu.dot_dimension_numbers<[1], [0], [0], [1], [0, 0, 1, 1], [], []>} : vector<64x27xbf16>, vector<27x49xbf16>, vector<64x49xf32> -> vector<64x49xf32>
    %59 = vector.broadcast %1 : vector<64x1xf32> to vector<64x49xf32>
    %60 = arith.addf %58, %59 : vector<64x49xf32>
    %cst_42 = arith.constant 0.000000e+00 : f32
    %61 = vector.broadcast %cst_42 : f32 to vector<64x49xf32>
    %62 = arith.maximumf %60, %61 : vector<64x49xf32>
    %63 = arith.maximumf %55, %62 : vector<64x49xf32>
    %64 = arith.addf %32, %63 : vector<64x49xf32>
    %c0_43 = arith.constant 0 : index
    %c8 = arith.constant 8 : index
    %c0_44 = arith.constant 0 : index
    %c0_45 = arith.constant 0 : index
    %65 = vector.load %arg1[%c0_43, %c8, %c0_44, %c0_45] : memref<1x16x27x49xbf16, #tpu.memory_space<vmem>>, vector<1x1x27x49xbf16>
    %66 = vector.shape_cast %65 : vector<1x1x27x49xbf16> to vector<27x49xbf16>
    %cst_46 = arith.constant dense<0.000000e+00> : vector<64x49xf32>
    %67 = tpu.matmul %0, %66, %cst_46 {dimension_numbers = #tpu.dot_dimension_numbers<[1], [0], [0], [1], [0, 0, 1, 1], [], []>} : vector<64x27xbf16>, vector<27x49xbf16>, vector<64x49xf32> -> vector<64x49xf32>
    %68 = vector.broadcast %1 : vector<64x1xf32> to vector<64x49xf32>
    %69 = arith.addf %67, %68 : vector<64x49xf32>
    %cst_47 = arith.constant 0.000000e+00 : f32
    %70 = vector.broadcast %cst_47 : f32 to vector<64x49xf32>
    %71 = arith.maximumf %69, %70 : vector<64x49xf32>
    %c0_48 = arith.constant 0 : index
    %c9 = arith.constant 9 : index
    %c0_49 = arith.constant 0 : index
    %c0_50 = arith.constant 0 : index
    %72 = vector.load %arg1[%c0_48, %c9, %c0_49, %c0_50] : memref<1x16x27x49xbf16, #tpu.memory_space<vmem>>, vector<1x1x27x49xbf16>
    %73 = vector.shape_cast %72 : vector<1x1x27x49xbf16> to vector<27x49xbf16>
    %cst_51 = arith.constant dense<0.000000e+00> : vector<64x49xf32>
    %74 = tpu.matmul %0, %73, %cst_51 {dimension_numbers = #tpu.dot_dimension_numbers<[1], [0], [0], [1], [0, 0, 1, 1], [], []>} : vector<64x27xbf16>, vector<27x49xbf16>, vector<64x49xf32> -> vector<64x49xf32>
    %75 = vector.broadcast %1 : vector<64x1xf32> to vector<64x49xf32>
    %76 = arith.addf %74, %75 : vector<64x49xf32>
    %cst_52 = arith.constant 0.000000e+00 : f32
    %77 = vector.broadcast %cst_52 : f32 to vector<64x49xf32>
    %78 = arith.maximumf %76, %77 : vector<64x49xf32>
    %79 = arith.maximumf %71, %78 : vector<64x49xf32>
    %c0_53 = arith.constant 0 : index
    %c10 = arith.constant 10 : index
    %c0_54 = arith.constant 0 : index
    %c0_55 = arith.constant 0 : index
    %80 = vector.load %arg1[%c0_53, %c10, %c0_54, %c0_55] : memref<1x16x27x49xbf16, #tpu.memory_space<vmem>>, vector<1x1x27x49xbf16>
    %81 = vector.shape_cast %80 : vector<1x1x27x49xbf16> to vector<27x49xbf16>
    %cst_56 = arith.constant dense<0.000000e+00> : vector<64x49xf32>
    %82 = tpu.matmul %0, %81, %cst_56 {dimension_numbers = #tpu.dot_dimension_numbers<[1], [0], [0], [1], [0, 0, 1, 1], [], []>} : vector<64x27xbf16>, vector<27x49xbf16>, vector<64x49xf32> -> vector<64x49xf32>
    %83 = vector.broadcast %1 : vector<64x1xf32> to vector<64x49xf32>
    %84 = arith.addf %82, %83 : vector<64x49xf32>
    %cst_57 = arith.constant 0.000000e+00 : f32
    %85 = vector.broadcast %cst_57 : f32 to vector<64x49xf32>
    %86 = arith.maximumf %84, %85 : vector<64x49xf32>
    %87 = arith.maximumf %79, %86 : vector<64x49xf32>
    %c0_58 = arith.constant 0 : index
    %c11 = arith.constant 11 : index
    %c0_59 = arith.constant 0 : index
    %c0_60 = arith.constant 0 : index
    %88 = vector.load %arg1[%c0_58, %c11, %c0_59, %c0_60] : memref<1x16x27x49xbf16, #tpu.memory_space<vmem>>, vector<1x1x27x49xbf16>
    %89 = vector.shape_cast %88 : vector<1x1x27x49xbf16> to vector<27x49xbf16>
    %cst_61 = arith.constant dense<0.000000e+00> : vector<64x49xf32>
    %90 = tpu.matmul %0, %89, %cst_61 {dimension_numbers = #tpu.dot_dimension_numbers<[1], [0], [0], [1], [0, 0, 1, 1], [], []>} : vector<64x27xbf16>, vector<27x49xbf16>, vector<64x49xf32> -> vector<64x49xf32>
    %91 = vector.broadcast %1 : vector<64x1xf32> to vector<64x49xf32>
    %92 = arith.addf %90, %91 : vector<64x49xf32>
    %cst_62 = arith.constant 0.000000e+00 : f32
    %93 = vector.broadcast %cst_62 : f32 to vector<64x49xf32>
    %94 = arith.maximumf %92, %93 : vector<64x49xf32>
    %95 = arith.maximumf %87, %94 : vector<64x49xf32>
    %96 = arith.addf %64, %95 : vector<64x49xf32>
    %c0_63 = arith.constant 0 : index
    %c12 = arith.constant 12 : index
    %c0_64 = arith.constant 0 : index
    %c0_65 = arith.constant 0 : index
    %97 = vector.load %arg1[%c0_63, %c12, %c0_64, %c0_65] : memref<1x16x27x49xbf16, #tpu.memory_space<vmem>>, vector<1x1x27x49xbf16>
    %98 = vector.shape_cast %97 : vector<1x1x27x49xbf16> to vector<27x49xbf16>
    %cst_66 = arith.constant dense<0.000000e+00> : vector<64x49xf32>
    %99 = tpu.matmul %0, %98, %cst_66 {dimension_numbers = #tpu.dot_dimension_numbers<[1], [0], [0], [1], [0, 0, 1, 1], [], []>} : vector<64x27xbf16>, vector<27x49xbf16>, vector<64x49xf32> -> vector<64x49xf32>
    %100 = vector.broadcast %1 : vector<64x1xf32> to vector<64x49xf32>
    %101 = arith.addf %99, %100 : vector<64x49xf32>
    %cst_67 = arith.constant 0.000000e+00 : f32
    %102 = vector.broadcast %cst_67 : f32 to vector<64x49xf32>
    %103 = arith.maximumf %101, %102 : vector<64x49xf32>
    %c0_68 = arith.constant 0 : index
    %c13 = arith.constant 13 : index
    %c0_69 = arith.constant 0 : index
    %c0_70 = arith.constant 0 : index
    %104 = vector.load %arg1[%c0_68, %c13, %c0_69, %c0_70] : memref<1x16x27x49xbf16, #tpu.memory_space<vmem>>, vector<1x1x27x49xbf16>
    %105 = vector.shape_cast %104 : vector<1x1x27x49xbf16> to vector<27x49xbf16>
    %cst_71 = arith.constant dense<0.000000e+00> : vector<64x49xf32>
    %106 = tpu.matmul %0, %105, %cst_71 {dimension_numbers = #tpu.dot_dimension_numbers<[1], [0], [0], [1], [0, 0, 1, 1], [], []>} : vector<64x27xbf16>, vector<27x49xbf16>, vector<64x49xf32> -> vector<64x49xf32>
    %107 = vector.broadcast %1 : vector<64x1xf32> to vector<64x49xf32>
    %108 = arith.addf %106, %107 : vector<64x49xf32>
    %cst_72 = arith.constant 0.000000e+00 : f32
    %109 = vector.broadcast %cst_72 : f32 to vector<64x49xf32>
    %110 = arith.maximumf %108, %109 : vector<64x49xf32>
    %111 = arith.maximumf %103, %110 : vector<64x49xf32>
    %c0_73 = arith.constant 0 : index
    %c14 = arith.constant 14 : index
    %c0_74 = arith.constant 0 : index
    %c0_75 = arith.constant 0 : index
    %112 = vector.load %arg1[%c0_73, %c14, %c0_74, %c0_75] : memref<1x16x27x49xbf16, #tpu.memory_space<vmem>>, vector<1x1x27x49xbf16>
    %113 = vector.shape_cast %112 : vector<1x1x27x49xbf16> to vector<27x49xbf16>
    %cst_76 = arith.constant dense<0.000000e+00> : vector<64x49xf32>
    %114 = tpu.matmul %0, %113, %cst_76 {dimension_numbers = #tpu.dot_dimension_numbers<[1], [0], [0], [1], [0, 0, 1, 1], [], []>} : vector<64x27xbf16>, vector<27x49xbf16>, vector<64x49xf32> -> vector<64x49xf32>
    %115 = vector.broadcast %1 : vector<64x1xf32> to vector<64x49xf32>
    %116 = arith.addf %114, %115 : vector<64x49xf32>
    %cst_77 = arith.constant 0.000000e+00 : f32
    %117 = vector.broadcast %cst_77 : f32 to vector<64x49xf32>
    %118 = arith.maximumf %116, %117 : vector<64x49xf32>
    %119 = arith.maximumf %111, %118 : vector<64x49xf32>
    %c0_78 = arith.constant 0 : index
    %c15 = arith.constant 15 : index
    %c0_79 = arith.constant 0 : index
    %c0_80 = arith.constant 0 : index
    %120 = vector.load %arg1[%c0_78, %c15, %c0_79, %c0_80] : memref<1x16x27x49xbf16, #tpu.memory_space<vmem>>, vector<1x1x27x49xbf16>
    %121 = vector.shape_cast %120 : vector<1x1x27x49xbf16> to vector<27x49xbf16>
    %cst_81 = arith.constant dense<0.000000e+00> : vector<64x49xf32>
    %122 = tpu.matmul %0, %121, %cst_81 {dimension_numbers = #tpu.dot_dimension_numbers<[1], [0], [0], [1], [0, 0, 1, 1], [], []>} : vector<64x27xbf16>, vector<27x49xbf16>, vector<64x49xf32> -> vector<64x49xf32>
    %123 = vector.broadcast %1 : vector<64x1xf32> to vector<64x49xf32>
    %124 = arith.addf %122, %123 : vector<64x49xf32>
    %cst_82 = arith.constant 0.000000e+00 : f32
    %125 = vector.broadcast %cst_82 : f32 to vector<64x49xf32>
    %126 = arith.maximumf %124, %125 : vector<64x49xf32>
    %127 = arith.maximumf %119, %126 : vector<64x49xf32>
    %128 = arith.addf %96, %127 : vector<64x49xf32>
    %cst_83 = arith.constant 2.500000e-01 : f32
    %129 = vector.broadcast %cst_83 : f32 to vector<64x49xf32>
    %130 = arith.mulf %128, %129 : vector<64x49xf32>
    %c0_84 = arith.constant 0 : index
    %c0_85 = arith.constant 0 : index
    %c0_86 = arith.constant 0 : index
    %131 = vector.load %arg4[%c0_84, %c0_85, %c0_86] : memref<1x64x49xf32, #tpu.memory_space<vmem>>, vector<1x64x49xf32>
    %132 = vector.shape_cast %131 : vector<1x64x49xf32> to vector<64x49xf32>
    %133 = vector.shape_cast %130 : vector<64x49xf32> to vector<1x64x49xf32>
    tpu.vector_store %arg4[%c0_84, %c0_85, %c0_86], %133 {strides = array<i32>} : memref<1x64x49xf32, #tpu.memory_space<vmem>>, vector<1x64x49xf32>,
    return
  }
  func.func @transform_0(%arg0: i32) -> (i32, i32, i32, i32) {
    %c0_i32 = arith.constant 0 : i32
    %c0_i32_0 = arith.constant 0 : i32
    %c0_i32_1 = arith.constant 0 : i32
    %c0_i32_2 = arith.constant 0 : i32
    return %arg0, %c0_i32, %c0_i32_0, %c0_i32_1 : i32, i32, i32, i32
  }
  func.func @transform_1(%arg0: i32) -> (i32, i32) {
    %c0_i32 = arith.constant 0 : i32
    %c0_i32_0 = arith.constant 0 : i32
    %c0_i32_1 = arith.constant 0 : i32
    return %c0_i32, %c0_i32_0 : i32, i32
  }
  func.func @transform_2(%arg0: i32) -> (i32, i32) {
    %c0_i32 = arith.constant 0 : i32
    %c0_i32_0 = arith.constant 0 : i32
    %c0_i32_1 = arith.constant 0 : i32
    return %c0_i32, %c0_i32_0 : i32, i32
  }
  func.func @transform_3(%arg0: i32) -> (i32, i32, i32) {
    %c0_i32 = arith.constant 0 : i32
    %c0_i32_0 = arith.constant 0 : i32
    %c0_i32_1 = arith.constant 0 : i32
    return %arg0, %c0_i32, %c0_i32_0 : i32, i32, i32
  }
}

module attributes {stable_mosaic.version = 11 : i64} {
  func.func @_classifier_kernel(%arg0: i32, %arg1: memref<2x3136xf32, #tpu.memory_space<vmem>>, %arg2: memref<3136x32xf32, #tpu.memory_space<vmem>>, %arg3: memref<1x32xf32, #tpu.memory_space<vmem>>, %arg4: memref<32x10xf32, #tpu.memory_space<vmem>>, %arg5: memref<1x10xf32, #tpu.memory_space<vmem>>, %arg6: memref<2x10xf32, #tpu.memory_space<vmem>>) attributes {dimension_semantics = [#tpu.dimension_semantics<arbitrary>], iteration_bounds = array<i64: 1>, scalar_prefetch = 0 : i64, scratch_operands = 0 : i64, tpu.core_type = #tpu.core_type<tc>, window_params = [{pipeline_mode = #tpu.pipeline_mode<synchronous>, transform_indices = @transform_0, window_bounds = array<i64: 2, 3136>}, {pipeline_mode = #tpu.pipeline_mode<synchronous>, transform_indices = @transform_1, window_bounds = array<i64: 3136, 32>}, {pipeline_mode = #tpu.pipeline_mode<synchronous>, transform_indices = @transform_2, window_bounds = array<i64: 1, 32>}, {pipeline_mode = #tpu.pipeline_mode<synchronous>, transform_indices = @transform_3, window_bounds = array<i64: 32, 10>}, {pipeline_mode = #tpu.pipeline_mode<synchronous>, transform_indices = @transform_4, window_bounds = array<i64: 1, 10>}, {pipeline_mode = #tpu.pipeline_mode<synchronous>, transform_indices = @transform_5, window_bounds = array<i64: 2, 10>}]} {
    %c0 = arith.constant 0 : index
    %c0_0 = arith.constant 0 : index
    %0 = vector.load %arg1[%c0, %c0_0] : memref<2x3136xf32, #tpu.memory_space<vmem>>, vector<2x3136xf32>
    %c0_1 = arith.constant 0 : index
    %c0_2 = arith.constant 0 : index
    %1 = vector.load %arg2[%c0_1, %c0_2] : memref<3136x32xf32, #tpu.memory_space<vmem>>, vector<3136x32xf32>
    %cst = arith.constant dense<0.000000e+00> : vector<2x32xf32>
    %2 = tpu.matmul %0, %1, %cst {dimension_numbers = #tpu.dot_dimension_numbers<[1], [0], [0], [1], [0, 0, 1, 1], [], []>} : vector<2x3136xf32>, vector<3136x32xf32>, vector<2x32xf32> -> vector<2x32xf32>
    %c0_3 = arith.constant 0 : index
    %c0_4 = arith.constant 0 : index
    %3 = vector.load %arg3[%c0_3, %c0_4] : memref<1x32xf32, #tpu.memory_space<vmem>>, vector<1x32xf32>
    %4 = vector.broadcast %3 : vector<1x32xf32> to vector<2x32xf32>
    %5 = arith.addf %2, %4 : vector<2x32xf32>
    %cst_5 = arith.constant 0.000000e+00 : f32
    %6 = vector.broadcast %cst_5 : f32 to vector<2x32xf32>
    %7 = arith.maximumf %5, %6 : vector<2x32xf32>
    %c0_6 = arith.constant 0 : index
    %c0_7 = arith.constant 0 : index
    %8 = vector.load %arg4[%c0_6, %c0_7] : memref<32x10xf32, #tpu.memory_space<vmem>>, vector<32x10xf32>
    %cst_8 = arith.constant dense<0.000000e+00> : vector<2x10xf32>
    %9 = tpu.matmul %7, %8, %cst_8 {dimension_numbers = #tpu.dot_dimension_numbers<[1], [0], [0], [1], [0, 0, 1, 1], [], []>} : vector<2x32xf32>, vector<32x10xf32>, vector<2x10xf32> -> vector<2x10xf32>
    %c0_9 = arith.constant 0 : index
    %c0_10 = arith.constant 0 : index
    %10 = vector.load %arg5[%c0_9, %c0_10] : memref<1x10xf32, #tpu.memory_space<vmem>>, vector<1x10xf32>
    %11 = vector.broadcast %10 : vector<1x10xf32> to vector<2x10xf32>
    %12 = arith.addf %9, %11 : vector<2x10xf32>
    %c0_11 = arith.constant 0 : index
    %c0_12 = arith.constant 0 : index
    %13 = vector.load %arg6[%c0_11, %c0_12] : memref<2x10xf32, #tpu.memory_space<vmem>>, vector<2x10xf32>
    tpu.vector_store %arg6[%c0_11, %c0_12], %12 {strides = array<i32>} : memref<2x10xf32, #tpu.memory_space<vmem>>, vector<2x10xf32>,
    return
  }
  func.func @transform_0(%arg0: i32) -> (i32, i32) {
    %c0_i32 = arith.constant 0 : i32
    %c0_i32_0 = arith.constant 0 : i32
    %c0_i32_1 = arith.constant 0 : i32
    return %c0_i32, %c0_i32_0 : i32, i32
  }
  func.func @transform_1(%arg0: i32) -> (i32, i32) {
    %c0_i32 = arith.constant 0 : i32
    %c0_i32_0 = arith.constant 0 : i32
    %c0_i32_1 = arith.constant 0 : i32
    return %c0_i32, %c0_i32_0 : i32, i32
  }
  func.func @transform_2(%arg0: i32) -> (i32, i32) {
    %c0_i32 = arith.constant 0 : i32
    %c0_i32_0 = arith.constant 0 : i32
    %c0_i32_1 = arith.constant 0 : i32
    return %c0_i32, %c0_i32_0 : i32, i32
  }
  func.func @transform_3(%arg0: i32) -> (i32, i32) {
    %c0_i32 = arith.constant 0 : i32
    %c0_i32_0 = arith.constant 0 : i32
    %c0_i32_1 = arith.constant 0 : i32
    return %c0_i32, %c0_i32_0 : i32, i32
  }
  func.func @transform_4(%arg0: i32) -> (i32, i32) {
    %c0_i32 = arith.constant 0 : i32
    %c0_i32_0 = arith.constant 0 : i32
    %c0_i32_1 = arith.constant 0 : i32
    return %c0_i32, %c0_i32_0 : i32, i32
  }
  func.func @transform_5(%arg0: i32) -> (i32, i32) {
    %c0_i32 = arith.constant 0 : i32
    %c0_i32_0 = arith.constant 0 : i32
    %c0_i32_1 = arith.constant 0 : i32
    return %c0_i32, %c0_i32_0 : i32, i32
  }
}

</mosaic_0001>

<llo_original>
// kernel: vgg_forward.2
$region0: #{vgg_forward.2}
  #allocation0 [shape = 'u32[]', space=smem, size = 0x4, offset = 0x4, fixed_abs, tag = 'smem constant byte address 0x4 - core index']
  #allocation1 [shape = 'u32[144,128]{1,0:T(1,128)}', space=vmem, size = 0x12000, scoped, tag = 'internal scratch']
  %s0 = inlined_call_operand.vmem [shape: bf16[2,16,27,49], index: 0, kind: input, shape index: {}]
  %s1 = inlined_call_operand.vmem [shape: bf16[64,27], index: 1, kind: input, shape index: {}]
  %s2 = inlined_call_operand.vmem [shape: f32[64,1], index: 2, kind: input, shape index: {}]
  %s3 = inlined_call_operand.vmem [shape: f32[2,64,49], index: 3, kind: output, shape index: {}]
  %s4 = sld [smem:[#allocation0]]
  $region45: #{vgg_forward.2} parent=0
    _
  %s6 = ssub.s32 1, %s4
  %s7 = scalar_select 0, %s6, %s4
  loop: start=0, step=1, limit=4
  $region2: #{vgg_forward.2} parent=0 // loop_pre_header
    _
  $region3: #{vgg_forward.2} parent=0 // loop_header
    %s9 = sphi 0, %s13
    %p10 = scmp.ge.s32.totalorder %s9, 4
    %s19 = sphi 0, %s21
    %s22 = sphi 0, %s19
    %s23 = sphi 0, %s22
    %s39 = sphi 0, %s23
    %s43 = sphi 0, %s43
    %s45 = sphi 0, %s43
    %s46 = sphi 0, %s45
    %s60 = sphi 0, %s46
    %s64 = sphi 0, %s64
    %s66 = sphi 0, %s64
    %s67 = sphi 0, %s66
    %s81 = sphi 0, %s67
    %s87 = sphi 0, %s89
    %s90 = sphi 0, %s87
    %s91 = sphi 0, %s90
    %s107 = sphi 0, %s91
  $region4: #{vgg_forward.2} parent=0 // loop_header_branch
    %12 = sbr.rel (%p10) target = $region8
  $region5: #{vgg_forward.2} parent=0 // loop_body
    %s14 = ssub.s32 %s9, 1
    %s15 = ssub.s32 %s9, 2
    %s16 = sadd.s32 %s9, 1
    %s17 = ssub.s32 %s9, %s16
    %p18 = scmp.eq.s32.totalorder %s17, 0
    %s20 = sadd.s32 %s19, 1
    %s21 = scalar_select %p18, %s19, %s20
    %p24 = pneg %p18
    %p25 = scmp.eq.s32.totalorder %s9, 1
    %p26 = por %p24, %p25
    %p27 = scmp.ne.s32.totalorder %s19, %s22
    %p28 = scmp.eq.s32.totalorder %s9, 0
    %p29 = por %p27, %p28
    %p30 = scmp.ne.s32.totalorder %s19, %s22
    %p31 = scmp.eq.s32.totalorder %s14, 1
    %p32 = por %p30, %p31
    %p33 = scmp.ne.s32.totalorder %s22, %s23
    %p34 = scmp.eq.s32.totalorder %s14, 0
    %p35 = por %p33, %p34
    %p36 = scmp.ne.s32.totalorder %s22, %s23
    %p37 = scmp.eq.s32.totalorder %s15, 1
    %p38 = por %p36, %p37
    %p40 = scmp.ne.s32.totalorder %s23, %s39
    %p41 = scmp.eq.s32.totalorder %s15, 0
    %p42 = por %p40, %p41
    %s44 = sadd.s32 %s43, 1
    %p47 = scmp.eq.s32.totalorder %s9, 1
    %p48 = scmp.ne.s32.totalorder %s43, %s45
    %p49 = scmp.eq.s32.totalorder %s9, 0
    %p50 = por %p48, %p49
    %p51 = scmp.ne.s32.totalorder %s43, %s45
    %p52 = scmp.eq.s32.totalorder %s14, 1
    %p53 = por %p51, %p52
    %p54 = scmp.ne.s32.totalorder %s45, %s46
    %p55 = scmp.eq.s32.totalorder %s14, 0
    %p56 = por %p54, %p55
    %p57 = scmp.ne.s32.totalorder %s45, %s46
    %p58 = scmp.eq.s32.totalorder %s15, 1
    %p59 = por %p57, %p58
    %p61 = scmp.ne.s32.totalorder %s46, %s60
    %p62 = scmp.eq.s32.totalorder %s15, 0
    %p63 = por %p61, %p62
    %s65 = sadd.s32 %s64, 1
    %p68 = scmp.eq.s32.totalorder %s9, 1
    %p69 = scmp.ne.s32.totalorder %s64, %s66
    %p70 = scmp.eq.s32.totalorder %s9, 0
    %p71 = por %p69, %p70
    %p72 = scmp.ne.s32.totalorder %s64, %s66
    %p73 = scmp.eq.s32.totalorder %s14, 1
    %p74 = por %p72, %p73
    %p75 = scmp.ne.s32.totalorder %s66, %s67
    %p76 = scmp.eq.s32.totalorder %s14, 0
    %p77 = por %p75, %p76
    %p78 = scmp.ne.s32.totalorder %s66, %s67
    %p79 = scmp.eq.s32.totalorder %s15, 1
    %p80 = por %p78, %p79
    %p82 = scmp.ne.s32.totalorder %s67, %s81
    %p83 = scmp.eq.s32.totalorder %s15, 0
    %p84 = por %p82, %p83
    %s85 = ssub.s32 %s9, %s16
    %p86 = scmp.eq.s32.totalorder %s85, 0
    %s88 = sadd.s32 %s87, 1
    %s89 = scalar_select %p86, %s87, %s88
    %p92 = pneg %p86
    %p93 = scmp.eq.s32.totalorder %s9, 1
    %p94 = por %p92, %p93
    %p95 = scmp.ne.s32.totalorder %s87, %s90
    %p96 = scmp.eq.s32.totalorder %s9, 0
    %p97 = por %p95, %p96
    %p98 = scmp.ne.s32.totalorder %s87, %s90
    %p99 = scmp.eq.s32.totalorder %s14, 1
    %p100 = por %p98, %p99
    %p101 = scmp.ne.s32.totalorder %s90, %s91
    %p102 = scmp.eq.s32.totalorder %s14, 0
    %p103 = por %p101, %p102
    %p104 = scmp.ne.s32.totalorder %s90, %s91
    %p105 = scmp.eq.s32.totalorder %s15, 1
    %p106 = por %p104, %p105
    %p108 = scmp.ne.s32.totalorder %s91, %s107
    %p109 = scmp.eq.s32.totalorder %s15, 0
    %p110 = por %p108, %p109
    %p111 = scmp.le.s32.totalorder 1, %s9
    %p112 = scmp.lt.s32.totalorder %s9, 3
    %p113 = pnand %p111, %p112
    %p114 = pneg %p113
    // Predicated region
    $region9: #{vgg_forward.2} parent=5 // pred_check
      _
    $region10: #{vgg_forward.2} parent=5 // pred_check_branch
      %116 = sbr.rel (%p113) target = $region12
    $region11: #{vgg_forward.2} parent=5 // pred_region
      %s117 = ssub.s32 %s9, 1
      // Predicated region
      $region13: #{vgg_forward.2} parent=11 // pred_check
        %p118 = pneg %p56
      $region14: #{vgg_forward.2} parent=11 // pred_check_branch
        %120 = sbr.rel (%p118) target = $region16
      $region15: #{vgg_forward.2} parent=11 // pred_region
        _
      $region16: #{vgg_forward.2} parent=11 // pred_fallthru
        _
      // Predicated region
      $region17: #{vgg_forward.2} parent=11 // pred_check
        %p121 = pneg %p77
      $region18: #{vgg_forward.2} parent=11 // pred_check_branch
        %123 = sbr.rel (%p121) target = $region20
      $region19: #{vgg_forward.2} parent=11 // pred_region
        _
      $region20: #{vgg_forward.2} parent=11 // pred_fallthru
        _
    $region12: #{vgg_forward.2} parent=5 // pred_fallthru
      _
    %p124 = scmp.lt.s32.totalorder %s9, 2
    // Predicated region
    $region21: #{vgg_forward.2} parent=5 // pred_check
      %p125 = pneg %p124
    $region22: #{vgg_forward.2} parent=5 // pred_check_branch
      %127 = sbr.rel (%p125) target = $region24
    $region23: #{vgg_forward.2} parent=5 // pred_region
      // Predicated region
      $region25: #{vgg_forward.2} parent=23 // pred_check
        %p128 = pneg %p29
      $region26: #{vgg_forward.2} parent=23 // pred_check_branch
        %130 = sbr.rel (%p128) target = $region28
      $region27: #{vgg_forward.2} parent=23 // pred_region
        %p131 = scmp.lt.s32.totalorder %s9, 1
        %s132 = scalar_select %p131, %s9, 1
        %s133 = smul.addr %s132, 64
        %s134 = smul.addr %s133, 4
        %s135 = scalar_lea.vmem %s0, %s134
      $region28: #{vgg_forward.2} parent=23 // pred_fallthru
        _
    $region24: #{vgg_forward.2} parent=5 // pred_fallthru
      _
    %p136 = scmp.le.s32.totalorder 1, %s9
    %p137 = scmp.lt.s32.totalorder %s9, 3
    %p138 = pnand %p136, %p137
    %p139 = pneg %p138
    // Predicated region
    $region29: #{vgg_forward.2} parent=5 // pred_check
      _
    $region30: #{vgg_forward.2} parent=5 // pred_check_branch
      %141 = sbr.rel (%p138) target = $region32
    $region31: #{vgg_forward.2} parent=5 // pred_region
      %s142 = ssub.s32 %s9, 1
      %p143 = scmp.lt.s32.totalorder %s14, 1
      %s144 = scalar_select %p143, %s14, 1
      %s145 = smul.addr %s144, 64
      %s146 = smul.addr %s145, 4
      %s147 = scalar_lea.vmem %s0, %s146
      %p148 = pneg %p35
      %p149 = pneg %p32
      %p150 = pneg %p56
      %p151 = pneg %p53
      %p152 = pneg %p77
      %p153 = pneg %p74
      %p154 = pneg %p103
      %p155 = pneg %p100
      %p156 = scmp.lt.s32.totalorder %s14, 1
      %s157 = scalar_select %p156, %s14, 1
      %s158 = smul.addr %s157, 8
      %s159 = smul.addr %s158, 8
      %s160 = scalar_lea.vmem %s3, %s159
      %p161 = scmp.lt.s32.totalorder %s14, 1
      %s162 = scalar_select %p161, %s14, 1
      %s163 = smul.addr %s162, 64
      %s164 = smul.addr %s163, 4
      %s165 = scalar_lea.vmem %s0, %s164
      %p166 = scmp.lt.s32.totalorder %s14, 1
      %s167 = scalar_select %p166, %s14, 1
      %s168 = smul.addr %s167, 8
      %s169 = smul.addr %s168, 8
      %s170 = scalar_lea.vmem %s3, %s169
      %v172 = vld [vmem:[%s1] sm:$0xf]
      %v173 = vld [vmem:[%s1 + $0x4] sm:$0xf]
      %v174 = vld [vmem:[%s1 + $0x8] sm:$0xf]
      %v175 = vld [vmem:[%s1 + $0xc] sm:$0xf]
      %v176 = vld [vmem:[%s1 + $0x10] sm:$0xf]
      %v177 = vld [vmem:[%s1 + $0x14] sm:$0xf]
      %v178 = vld [vmem:[%s1 + $0x18] sm:$0xf]
      %v179 = vld [vmem:[%s1 + $0x1c] sm:$0xf]
      %v180 = vld [vmem:[%s2] sm:$0xff]
      %v181 = vld [vmem:[%s2 + $0x8] sm:$0xff]
      %v182 = vld [vmem:[%s2 + $0x10] sm:$0xff]
      %v183 = vld [vmem:[%s2 + $0x18] sm:$0xff]
      %v184 = vld [vmem:[%s2 + $0x20] sm:$0xff]
      %v185 = vld [vmem:[%s2 + $0x28] sm:$0xff]
      %v186 = vld [vmem:[%s2 + $0x30] sm:$0xff]
      %v187 = vld [vmem:[%s2 + $0x38] sm:$0xff]
      %v188 = vld [vmem:[%s165] sm:$0xf]
      %v189 = vld [vmem:[%s165 + $0x4] sm:$0xf]
      %v190 = vld [vmem:[%s165 + $0x8] sm:$0xf]
      %v191 = vld [vmem:[%s165 + $0xc] sm:$0x3]
      %193 = vset.pattern.permute.xlu0 0
      %194 = vperm.xlu0 %193, %v180
      %v195 = vpop.permute.xlu0 %194
      %198 = vset.pattern.permute.xlu0 0
      %199 = vperm.xlu0 %198, %v181
      %v200 = vpop.permute.xlu0 %199
      %203 = vset.pattern.permute.xlu0 0
      %204 = vperm.xlu0 %203, %v182
      %v205 = vpop.permute.xlu0 %204
      %208 = vset.pattern.permute.xlu0 0
      %209 = vperm.xlu0 %208, %v183
      %v210 = vpop.permute.xlu0 %209
      %213 = vset.pattern.permute.xlu0 0
      %214 = vperm.xlu0 %213, %v184
      %v215 = vpop.permute.xlu0 %214
      %218 = vset.pattern.permute.xlu0 0
      %219 = vperm.xlu0 %218, %v185
      %v220 = vpop.permute.xlu0 %219
      %223 = vset.pattern.permute.xlu0 0
      %224 = vperm.xlu0 %223, %v186
      %v225 = vpop.permute.xlu0 %224
      %228 = vset.pattern.permute.xlu0 0
      %229 = vperm.xlu0 %228, %v187
      %v230 = vpop.permute.xlu0 %229
      %v240 = vunpack.c.l.b16 %v172
      %v241 = vunpack.c.l.b16 %v173
      %v242 = vunpack.c.l.b16 %v174
      %v243 = vunpack.c.l.b16 %v175
      %v244 = vunpack.c.l.b16 %v176
      %v245 = vunpack.c.l.b16 %v177
      %v246 = vunpack.c.l.b16 %v178
      %v247 = vunpack.c.l.b16 %v179
      %v248 = vpack.c.b16 %v241, %v240
      %v249 = vpack.c.b16 %v243, %v242
      %v250 = vpack.c.b16 %v245, %v244
      %v251 = vpack.c.b16 %v247, %v246
      %v256 = vunpack.c.l.b16 %v188
      %v257 = vunpack.c.l.b16 %v189
      %v258 = vunpack.c.l.b16 %v190
      %v259 = vunpack.c.l.b16 %v191
      %v260 = vpack.c.b16 %v257, %v256
      %v261 = vpack.c.b16 %v259, %v258
      %vm263 = vcmask 220160
      %v265 = vsel %vm263, %v248, 0
      %v268 = vsel %vm263, %v249, 0
      %v271 = vsel %vm263, %v250, 0
      %v274 = vsel %vm263, %v251, 0
      %vm276 = vcmask 1044480
      %vm277 = vcmask 1045504
      %v278 = vsel %vm276, 4294967295, 65535
      %v279 = vsel %vm277, %v278, 0
      %v281 = vand.u32 %v261, %v279
      %283 = vmatprep.subr.bf16.mxu0 0
      %284 = vmatpush1.bf16.msra.mxu0 %v260
      %285 = vmatprep.subr.bf16.mxu0 0
      %286 = vmatpush1.bf16.msra.mxu0 %v281
      %287 = vmatprep.subr.bf16.mxu0 0
      %288 = vmatpush1.bf16.msra.mxu0 0
      %289 = vmatprep.subr.bf16.mxu0 0
      %290 = vmatpush1.bf16.msra.mxu0 0
      %291 = vmatprep.subr.bf16.mxu0 0
      %292 = vmatpush1.bf16.msra.mxu0 0
      %293 = vmatprep.subr.bf16.mxu0 0
      %294 = vmatpush1.bf16.msra.mxu0 0
      %295 = vmatprep.subr.bf16.mxu0 0
      %296 = vmatpush1.bf16.msra.mxu0 0
      %297 = vmatprep.subr.bf16.mxu0 0
      %298 = vmatpush1.bf16.msra.mxu0 0
      %299 = vmatprep.subr.bf16.mxu0 0
      %300 = vmatpush1.bf16.msra.mxu0 0
      %301 = vmatprep.subr.bf16.mxu0 0
      %302 = vmatpush1.bf16.msra.mxu0 0
      %303 = vmatprep.subr.bf16.mxu0 0
      %304 = vmatpush1.bf16.msra.mxu0 0
      %305 = vmatprep.subr.bf16.mxu0 0
      %306 = vmatpush1.bf16.msra.mxu0 0
      %307 = vmatprep.subr.bf16.mxu0 0
      %308 = vmatpush1.bf16.msra.mxu0 0
      %309 = vmatprep.subr.bf16.mxu0 0
      %310 = vmatpush1.bf16.msra.mxu0 0
      %311 = vmatprep.subr.bf16.mxu0 0
      %312 = vmatpush1.bf16.msra.mxu0 0
      %313 = vmatprep.subr.bf16.mxu0 0
      %314 = vmatpush1.bf16.msra.mxu0 0
      %315 = vmatprep.mubr.bf16.mxu0 0
      %316 = vmatmul.mubr.bf16.gmra.mrb[0].mxu0 %v265
      %v317 = vpop.f32.mrb[0].mxu0
      %v318 = vadd.f32 %v195, %v317
      %v319 = vpop.f32.mrb[0].mxu0
      %v320 = vpop.f32.mrb[0].mxu0
      %v321 = vadd.f32 %v200, %v320
      %v322 = vpop.f32.mrb[0].mxu0
      %323 = vmatprep.mubr.bf16.mxu0 0
      %324 = vmatmul.mubr.bf16.gmra.mrb[0].mxu0 %v268
      %v325 = vpop.f32.mrb[0].mxu0
      %v326 = vadd.f32 %v205, %v325
      %v327 = vpop.f32.mrb[0].mxu0
      %v328 = vpop.f32.mrb[0].mxu0
      %v329 = vadd.f32 %v210, %v328
      %v330 = vpop.f32.mrb[0].mxu0
      %331 = vmatprep.mubr.bf16.mxu0 0
      %332 = vmatmul.mubr.bf16.gmra.mrb[0].mxu0 %v271
      %v333 = vpop.f32.mrb[0].mxu0
      %v334 = vadd.f32 %v215, %v333
      %v335 = vpop.f32.mrb[0].mxu0
      %v336 = vpop.f32.mrb[0].mxu0
      %v337 = vadd.f32 %v220, %v336
      %v338 = vpop.f32.mrb[0].mxu0
      %339 = vmatprep.mubr.bf16.mxu0 0
      %340 = vmatmul.mubr.bf16.gmra.mrb[0].mxu0 %v274
      %v341 = vpop.f32.mrb[0].mxu0
      %v342 = vadd.f32 %v225, %v341
      %v343 = vpop.f32.mrb[0].mxu0
      %v344 = vpop.f32.mrb[0].mxu0
      %v345 = vadd.f32 %v230, %v344
      %v346 = vpop.f32.mrb[0].mxu0
      %347 = vdwg.mxu0
      %v348 = vmax.f32 %v318, 0.0
      %v349 = vmax.f32 %v321, 0.0
      %v350 = vmax.f32 %v326, 0.0
      %v351 = vmax.f32 %v329, 0.0
      %v352 = vmax.f32 %v334, 0.0
      %v353 = vmax.f32 %v337, 0.0
      %v354 = vmax.f32 %v342, 0.0
      %v355 = vmax.f32 %v345, 0.0
      %s356 = scalar_lea.vmem %s165, 16
      %v357 = vld [vmem:[%s356] sm:$0xf]
      %v358 = vld [vmem:[%s356 + $0x4] sm:$0xf]
      %v359 = vld [vmem:[%s356 + $0x8] sm:$0xf]
      %v360 = vld [vmem:[%s356 + $0xc] sm:$0x3]
      %v365 = vunpack.c.l.b16 %v357
      %v366 = vunpack.c.l.b16 %v358
      %v367 = vunpack.c.l.b16 %v359
      %v368 = vunpack.c.l.b16 %v360
      %v369 = vpack.c.b16 %v366, %v365
      %v370 = vpack.c.b16 %v368, %v367
      %v373 = vand.u32 %v370, %v279
      %375 = vmatprep.subr.bf16.mxu0 0
      %376 = vmatpush1.bf16.msra.mxu0 %v369
      %377 = vmatprep.subr.bf16.mxu0 0
      %378 = vmatpush1.bf16.msra.mxu0 %v373
      %379 = vmatprep.subr.bf16.mxu0 0
      %380 = vmatpush1.bf16.msra.mxu0 0
      %381 = vmatprep.subr.bf16.mxu0 0
      %382 = vmatpush1.bf16.msra.mxu0 0
      %383 = vmatprep.subr.bf16.mxu0 0
      %384 = vmatpush1.bf16.msra.mxu0 0
      %385 = vmatprep.subr.bf16.mxu0 0
      %386 = vmatpush1.bf16.msra.mxu0 0
      %387 = vmatprep.subr.bf16.mxu0 0
      %388 = vmatpush1.bf16.msra.mxu0 0
      %389 = vmatprep.subr.bf16.mxu0 0
      %390 = vmatpush1.bf16.msra.mxu0 0
      %391 = vmatprep.subr.bf16.mxu0 0
      %392 = vmatpush1.bf16.msra.mxu0 0
      %393 = vmatprep.subr.bf16.mxu0 0
      %394 = vmatpush1.bf16.msra.mxu0 0
      %395 = vmatprep.subr.bf16.mxu0 0
      %396 = vmatpush1.bf16.msra.mxu0 0
      %397 = vmatprep.subr.bf16.mxu0 0
      %398 = vmatpush1.bf16.msra.mxu0 0
      %399 = vmatprep.subr.bf16.mxu0 0
      %400 = vmatpush1.bf16.msra.mxu0 0
      %401 = vmatprep.subr.bf16.mxu0 0
      %402 = vmatpush1.bf16.msra.mxu0 0
      %403 = vmatprep.subr.bf16.mxu0 0
      %404 = vmatpush1.bf16.msra.mxu0 0
      %405 = vmatprep.subr.bf16.mxu0 0
      %406 = vmatpush1.bf16.msra.mxu0 0
      %407 = vmatprep.mubr.bf16.mxu0 0
      %408 = vmatmul.mubr.bf16.gmra.mrb[0].mxu0 %v265
      %v409 = vpop.f32.mrb[0].mxu0
      %v410 = vadd.f32 %v195, %v409
      %v411 = vpop.f32.mrb[0].mxu0
      %v412 = vpop.f32.mrb[0].mxu0
      %v413 = vadd.f32 %v200, %v412
      %v414 = vpop.f32.mrb[0].mxu0
      %415 = vmatprep.mubr.bf16.mxu0 0
      %416 = vmatmul.mubr.bf16.gmra.mrb[0].mxu0 %v268
      %v417 = vpop.f32.mrb[0].mxu0
      %v418 = vadd.f32 %v205, %v417
      %v419 = vpop.f32.mrb[0].mxu0
      %v420 = vpop.f32.mrb[0].mxu0
      %v421 = vadd.f32 %v210, %v420
      %v422 = vpop.f32.mrb[0].mxu0
      %423 = vmatprep.mubr.bf16.mxu0 0
      %424 = vmatmul.mubr.bf16.gmra.mrb[0].mxu0 %v271
      %v425 = vpop.f32.mrb[0].mxu0
      %v426 = vadd.f32 %v215, %v425
      %v427 = vpop.f32.mrb[0].mxu0
      %v428 = vpop.f32.mrb[0].mxu0
      %v429 = vadd.f32 %v220, %v428
      %v430 = vpop.f32.mrb[0].mxu0
      %431 = vmatprep.mubr.bf16.mxu0 0
      %432 = vmatmul.mubr.bf16.gmra.mrb[0].mxu0 %v274
      %v433 = vpop.f32.mrb[0].mxu0
      %v434 = vadd.f32 %v225, %v433
      %v435 = vpop.f32.mrb[0].mxu0
      %v436 = vpop.f32.mrb[0].mxu0
      %v437 = vadd.f32 %v230, %v436
      %v438 = vpop.f32.mrb[0].mxu0
      %439 = vdwg.mxu0
      %v440 = vmax.f32 %v410, 0.0
      %v441 = vmax.f32 %v413, 0.0
      %v442 = vmax.f32 %v418, 0.0
      %v443 = vmax.f32 %v421, 0.0
      %v444 = vmax.f32 %v426, 0.0
      %v445 = vmax.f32 %v429, 0.0
      %v446 = vmax.f32 %v434, 0.0
      %v447 = vmax.f32 %v437, 0.0
      %v448 = vmax.f32 %v348, %v440
      %v449 = vmax.f32 %v349, %v441
      %v450 = vmax.f32 %v350, %v442
      %v451 = vmax.f32 %v351, %v443
      %v452 = vmax.f32 %v352, %v444
      %v453 = vmax.f32 %v353, %v445
      %v454 = vmax.f32 %v354, %v446
      %v455 = vmax.f32 %v355, %v447
      %s456 = scalar_lea.vmem %s165, 32
      %v457 = vld [vmem:[%s456] sm:$0xf]
      %v458 = vld [vmem:[%s456 + $0x4] sm:$0xf]
      %v459 = vld [vmem:[%s456 + $0x8] sm:$0xf]
      %v460 = vld [vmem:[%s456 + $0xc] sm:$0x3]
      %v465 = vunpack.c.l.b16 %v457
      %v466 = vunpack.c.l.b16 %v458
      %v467 = vunpack.c.l.b16 %v459
      %v468 = vunpack.c.l.b16 %v460
      %v469 = vpack.c.b16 %v466, %v465
      %v470 = vpack.c.b16 %v468, %v467
      %v473 = vand.u32 %v470, %v279
      %475 = vmatprep.subr.bf16.mxu0 0
      %476 = vmatpush1.bf16.msra.mxu0 %v469
      %477 = vmatprep.subr.bf16.mxu0 0
      %478 = vmatpush1.bf16.msra.mxu0 %v473
      %479 = vmatprep.subr.bf16.mxu0 0
      %480 = vmatpush1.bf16.msra.mxu0 0
      %481 = vmatprep.subr.bf16.mxu0 0
      %482 = vmatpush1.bf16.msra.mxu0 0
      %483 = vmatprep.subr.bf16.mxu0 0
      %484 = vmatpush1.bf16.msra.mxu0 0
      %485 = vmatprep.subr.bf16.mxu0 0
      %486 = vmatpush1.bf16.msra.mxu0 0
      %487 = vmatprep.subr.bf16.mxu0 0
      %488 = vmatpush1.bf16.msra.mxu0 0
      %489 = vmatprep.subr.bf16.mxu0 0
      %490 = vmatpush1.bf16.msra.mxu0 0
      %491 = vmatprep.subr.bf16.mxu0 0
      %492 = vmatpush1.bf16.msra.mxu0 0
      %493 = vmatprep.subr.bf16.mxu0 0
      %494 = vmatpush1.bf16.msra.mxu0 0
      %495 = vmatprep.subr.bf16.mxu0 0
      %496 = vmatpush1.bf16.msra.mxu0 0
      %497 = vmatprep.subr.bf16.mxu0 0
      %498 = vmatpush1.bf16.msra.mxu0 0
      %499 = vmatprep.subr.bf16.mxu0 0
      %500 = vmatpush1.bf16.msra.mxu0 0
      %501 = vmatprep.subr.bf16.mxu0 0
      %502 = vmatpush1.bf16.msra.mxu0 0
      %503 = vmatprep.subr.bf16.mxu0 0
      %504 = vmatpush1.bf16.msra.mxu0 0
      %505 = vmatprep.subr.bf16.mxu0 0
      %506 = vmatpush1.bf16.msra.mxu0 0
      %507 = vmatprep.mubr.bf16.mxu0 0
      %508 = vmatmul.mubr.bf16.gmra.mrb[0].mxu0 %v265
      %v509 = vpop.f32.mrb[0].mxu0
      %v510 = vadd.f32 %v195, %v509
      %v511 = vpop.f32.mrb[0].mxu0
      %v512 = vpop.f32.mrb[0].mxu0
      %v513 = vadd.f32 %v200, %v512
      %v514 = vpop.f32.mrb[0].mxu0
      %515 = vmatprep.mubr.bf16.mxu0 0
      %516 = vmatmul.mubr.bf16.gmra.mrb[0].mxu0 %v268
      %v517 = vpop.f32.mrb[0].mxu0
      %v518 = vadd.f32 %v205, %v517
      %v519 = vpop.f32.mrb[0].mxu0
      %v520 = vpop.f32.mrb[0].mxu0
      %v521 = vadd.f32 %v210, %v520
      %v522 = vpop.f32.mrb[0].mxu0
      %523 = vmatprep.mubr.bf16.mxu0 0
      %524 = vmatmul.mubr.bf16.gmra.mrb[0].mxu0 %v271
      %v525 = vpop.f32.mrb[0].mxu0
      %v526 = vadd.f32 %v215, %v525
      %v527 = vpop.f32.mrb[0].mxu0
      %v528 = vpop.f32.mrb[0].mxu0
      %v529 = vadd.f32 %v220, %v528
      %v530 = vpop.f32.mrb[0].mxu0
      %531 = vmatprep.mubr.bf16.mxu0 0
      %532 = vmatmul.mubr.bf16.gmra.mrb[0].mxu0 %v274
      %v533 = vpop.f32.mrb[0].mxu0
      %v534 = vadd.f32 %v225, %v533
      %v535 = vpop.f32.mrb[0].mxu0
      %v536 = vpop.f32.mrb[0].mxu0
      %v537 = vadd.f32 %v230, %v536
      %v538 = vpop.f32.mrb[0].mxu0
      %539 = vdwg.mxu0
      %v540 = vmax.f32 %v510, 0.0
      %v541 = vmax.f32 %v513, 0.0
      %v542 = vmax.f32 %v518, 0.0
      %v543 = vmax.f32 %v521, 0.0
      %v544 = vmax.f32 %v526, 0.0
      %v545 = vmax.f32 %v529, 0.0
      %v546 = vmax.f32 %v534, 0.0
      %v547 = vmax.f32 %v537, 0.0
      %v548 = vmax.f32 %v448, %v540
      %v549 = vmax.f32 %v449, %v541
      %v550 = vmax.f32 %v450, %v542
      %v551 = vmax.f32 %v451, %v543
      %v552 = vmax.f32 %v452, %v544
      %v553 = vmax.f32 %v453, %v545
      %v554 = vmax.f32 %v454, %v546
      %v555 = vmax.f32 %v455, %v547
      %s556 = scalar_lea.vmem %s165, 48
      %v557 = vld [vmem:[%s556] sm:$0xf]
      %v558 = vld [vmem:[%s556 + $0x4] sm:$0xf]
      %v559 = vld [vmem:[%s556 + $0x8] sm:$0xf]
      %v560 = vld [vmem:[%s556 + $0xc] sm:$0x3]
      %v565 = vunpack.c.l.b16 %v557
      %v566 = vunpack.c.l.b16 %v558
      %v567 = vunpack.c.l.b16 %v559
      %v568 = vunpack.c.l.b16 %v560
      %v569 = vpack.c.b16 %v566, %v565
      %v570 = vpack.c.b16 %v568, %v567
      %v573 = vand.u32 %v570, %v279
      %575 = vmatprep.subr.bf16.mxu0 0
      %576 = vmatpush1.bf16.msra.mxu0 %v569
      %577 = vmatprep.subr.bf16.mxu0 0
      %578 = vmatpush1.bf16.msra.mxu0 %v573
      %579 = vmatprep.subr.bf16.mxu0 0
      %580 = vmatpush1.bf16.msra.mxu0 0
      %581 = vmatprep.subr.bf16.mxu0 0
      %582 = vmatpush1.bf16.msra.mxu0 0
      %583 = vmatprep.subr.bf16.mxu0 0
      %584 = vmatpush1.bf16.msra.mxu0 0
      %585 = vmatprep.subr.bf16.mxu0 0
      %586 = vmatpush1.bf16.msra.mxu0 0
      %587 = vmatprep.subr.bf16.mxu0 0
      %588 = vmatpush1.bf16.msra.mxu0 0
      %589 = vmatprep.subr.bf16.mxu0 0
      %590 = vmatpush1.bf16.msra.mxu0 0
      %591 = vmatprep.subr.bf16.mxu0 0
      %592 = vmatpush1.bf16.msra.mxu0 0
      %593 = vmatprep.subr.bf16.mxu0 0
      %594 = vmatpush1.bf16.msra.mxu0 0
      %595 = vmatprep.subr.bf16.mxu0 0
      %596 = vmatpush1.bf16.msra.mxu0 0
      %597 = vmatprep.subr.bf16.mxu0 0
      %598 = vmatpush1.bf16.msra.mxu0 0
      %599 = vmatprep.subr.bf16.mxu0 0
      %600 = vmatpush1.bf16.msra.mxu0 0
      %601 = vmatprep.subr.bf16.mxu0 0
      %602 = vmatpush1.bf16.msra.mxu0 0
      %603 = vmatprep.subr.bf16.mxu0 0
      %604 = vmatpush1.bf16.msra.mxu0 0
      %605 = vmatprep.subr.bf16.mxu0 0
      %606 = vmatpush1.bf16.msra.mxu0 0
      %607 = vmatprep.mubr.bf16.mxu0 0
      %608 = vmatmul.mubr.bf16.gmra.mrb[0].mxu0 %v265
      %v609 = vpop.f32.mrb[0].mxu0
      %v610 = vadd.f32 %v195, %v609
      %v611 = vpop.f32.mrb[0].mxu0
      %v612 = vpop.f32.mrb[0].mxu0
      %v613 = vadd.f32 %v200, %v612
      %v614 = vpop.f32.mrb[0].mxu0
      %615 = vmatprep.mubr.bf16.mxu0 0
      %616 = vmatmul.mubr.bf16.gmra.mrb[0].mxu0 %v268
      %v617 = vpop.f32.mrb[0].mxu0
      %v618 = vadd.f32 %v205, %v617
      %v619 = vpop.f32.mrb[0].mxu0
      %v620 = vpop.f32.mrb[0].mxu0
      %v621 = vadd.f32 %v210, %v620
      %v622 = vpop.f32.mrb[0].mxu0
      %623 = vmatprep.mubr.bf16.mxu0 0
      %624 = vmatmul.mubr.bf16.gmra.mrb[0].mxu0 %v271
      %v625 = vpop.f32.mrb[0].mxu0
      %v626 = vadd.f32 %v215, %v625
      %v627 = vpop.f32.mrb[0].mxu0
      %v628 = vpop.f32.mrb[0].mxu0
      %v629 = vadd.f32 %v220, %v628
      %v630 = vpop.f32.mrb[0].mxu0
      %631 = vmatprep.mubr.bf16.mxu0 0
      %632 = vmatmul.mubr.bf16.gmra.mrb[0].mxu0 %v274
      %v633 = vpop.f32.mrb[0].mxu0
      %v634 = vadd.f32 %v225, %v633
      %v635 = vpop.f32.mrb[0].mxu0
      %v636 = vpop.f32.mrb[0].mxu0
      %v637 = vadd.f32 %v230, %v636
      %v638 = vpop.f32.mrb[0].mxu0
      %639 = vdwg.mxu0
      %v640 = vmax.f32 %v610, 0.0
      %v641 = vmax.f32 %v613, 0.0
      %v642 = vmax.f32 %v618, 0.0
      %v643 = vmax.f32 %v621, 0.0
      %v644 = vmax.f32 %v626, 0.0
      %v645 = vmax.f32 %v629, 0.0
      %v646 = vmax.f32 %v634, 0.0
      %v647 = vmax.f32 %v637, 0.0
      %v648 = vmax.f32 %v548, %v640
      %v649 = vmax.f32 %v549, %v641
      %v650 = vmax.f32 %v550, %v642
      %v651 = vmax.f32 %v551, %v643
      %v652 = vmax.f32 %v552, %v644
      %v653 = vmax.f32 %v553, %v645
      %v654 = vmax.f32 %v554, %v646
      %v655 = vmax.f32 %v555, %v647
      %s656 = scalar_lea.vmem %s165, 64
      %v657 = vld [vmem:[%s656] sm:$0xf]
      %v658 = vld [vmem:[%s656 + $0x4] sm:$0xf]
      %v659 = vld [vmem:[%s656 + $0x8] sm:$0xf]
      %v660 = vld [vmem:[%s656 + $0xc] sm:$0x3]
      %v665 = vunpack.c.l.b16 %v657
      %v666 = vunpack.c.l.b16 %v658
      %v667 = vunpack.c.l.b16 %v659
      %v668 = vunpack.c.l.b16 %v660
      %v669 = vpack.c.b16 %v666, %v665
      %v670 = vpack.c.b16 %v668, %v667
      %v673 = vand.u32 %v670, %v279
      %675 = vmatprep.subr.bf16.mxu0 0
      %676 = vmatpush1.bf16.msra.mxu0 %v669
      %677 = vmatprep.subr.bf16.mxu0 0
      %678 = vmatpush1.bf16.msra.mxu0 %v673
      %679 = vmatprep.subr.bf16.mxu0 0
      %680 = vmatpush1.bf16.msra.mxu0 0
      %681 = vmatprep.subr.bf16.mxu0 0
      %682 = vmatpush1.bf16.msra.mxu0 0
      %683 = vmatprep.subr.bf16.mxu0 0
      %684 = vmatpush1.bf16.msra.mxu0 0
      %685 = vmatprep.subr.bf16.mxu0 0
      %686 = vmatpush1.bf16.msra.mxu0 0
      %687 = vmatprep.subr.bf16.mxu0 0
      %688 = vmatpush1.bf16.msra.mxu0 0
      %689 = vmatprep.subr.bf16.mxu0 0
      %690 = vmatpush1.bf16.msra.mxu0 0
      %691 = vmatprep.subr.bf16.mxu0 0
      %692 = vmatpush1.bf16.msra.mxu0 0
      %693 = vmatprep.subr.bf16.mxu0 0
      %694 = vmatpush1.bf16.msra.mxu0 0
      %695 = vmatprep.subr.bf16.mxu0 0
      %696 = vmatpush1.bf16.msra.mxu0 0
      %697 = vmatprep.subr.bf16.mxu0 0
      %698 = vmatpush1.bf16.msra.mxu0 0
      %699 = vmatprep.subr.bf16.mxu0 0
      %700 = vmatpush1.bf16.msra.mxu0 0
      %701 = vmatprep.subr.bf16.mxu0 0
      %702 = vmatpush1.bf16.msra.mxu0 0
      %703 = vmatprep.subr.bf16.mxu0 0
      %704 = vmatpush1.bf16.msra.mxu0 0
      %705 = vmatprep.subr.bf16.mxu0 0
      %706 = vmatpush1.bf16.msra.mxu0 0
      %707 = vmatprep.mubr.bf16.mxu0 0
      %708 = vmatmul.mubr.bf16.gmra.mrb[0].mxu0 %v265
      %v709 = vpop.f32.mrb[0].mxu0
      %v710 = vadd.f32 %v195, %v709
      %v711 = vpop.f32.mrb[0].mxu0
      %v712 = vpop.f32.mrb[0].mxu0
      %v713 = vadd.f32 %v200, %v712
      %v714 = vpop.f32.mrb[0].mxu0
      %715 = vmatprep.mubr.bf16.mxu0 0
      %716 = vmatmul.mubr.bf16.gmra.mrb[0].mxu0 %v268
      %v717 = vpop.f32.mrb[0].mxu0
      %v718 = vadd.f32 %v205, %v717
      %v719 = vpop.f32.mrb[0].mxu0
      %v720 = vpop.f32.mrb[0].mxu0
      %v721 = vadd.f32 %v210, %v720
      %v722 = vpop.f32.mrb[0].mxu0
      %723 = vmatprep.mubr.bf16.mxu0 0
      %724 = vmatmul.mubr.bf16.gmra.mrb[0].mxu0 %v271
      %v725 = vpop.f32.mrb[0].mxu0
      %v726 = vadd.f32 %v215, %v725
      %v727 = vpop.f32.mrb[0].mxu0
      %v728 = vpop.f32.mrb[0].mxu0
      %v729 = vadd.f32 %v220, %v728
      %v730 = vpop.f32.mrb[0].mxu0
      %731 = vmatprep.mubr.bf16.mxu0 0
      %732 = vmatmul.mubr.bf16.gmra.mrb[0].mxu0 %v274
      %v733 = vpop.f32.mrb[0].mxu0
      %v734 = vadd.f32 %v225, %v733
      %v735 = vpop.f32.mrb[0].mxu0
      %v736 = vpop.f32.mrb[0].mxu0
      %v737 = vadd.f32 %v230, %v736
      %v738 = vpop.f32.mrb[0].mxu0
      %739 = vdwg.mxu0
      %v740 = vmax.f32 %v710, 0.0
      %v741 = vmax.f32 %v713, 0.0
      %v742 = vmax.f32 %v718, 0.0
      %v743 = vmax.f32 %v721, 0.0
      %v744 = vmax.f32 %v726, 0.0
      %v745 = vmax.f32 %v729, 0.0
      %v746 = vmax.f32 %v734, 0.0
      %v747 = vmax.f32 %v737, 0.0
      %s748 = scalar_lea.vmem %s165, 80
      %v749 = vld [vmem:[%s748] sm:$0xf]
      %v750 = vld [vmem:[%s748 + $0x4] sm:$0xf]
      %v751 = vld [vmem:[%s748 + $0x8] sm:$0xf]
      %v752 = vld [vmem:[%s748 + $0xc] sm:$0x3]
      %v757 = vunpack.c.l.b16 %v749
      %v758 = vunpack.c.l.b16 %v750
      %v759 = vunpack.c.l.b16 %v751
      %v760 = vunpack.c.l.b16 %v752
      %v761 = vpack.c.b16 %v758, %v757
      %v762 = vpack.c.b16 %v760, %v759
      %v765 = vand.u32 %v762, %v279
      %767 = vmatprep.subr.bf16.mxu0 0
      %768 = vmatpush1.bf16.msra.mxu0 %v761
      %769 = vmatprep.subr.bf16.mxu0 0
      %770 = vmatpush1.bf16.msra.mxu0 %v765
      %771 = vmatprep.subr.bf16.mxu0 0
      %772 = vmatpush1.bf16.msra.mxu0 0
      %773 = vmatprep.subr.bf16.mxu0 0
      %774 = vmatpush1.bf16.msra.mxu0 0
      %775 = vmatprep.subr.bf16.mxu0 0
      %776 = vmatpush1.bf16.msra.mxu0 0
      %777 = vmatprep.subr.bf16.mxu0 0
      %778 = vmatpush1.bf16.msra.mxu0 0
      %779 = vmatprep.subr.bf16.mxu0 0
      %780 = vmatpush1.bf16.msra.mxu0 0
      %781 = vmatprep.subr.bf16.mxu0 0
      %782 = vmatpush1.bf16.msra.mxu0 0
      %783 = vmatprep.subr.bf16.mxu0 0
      %784 = vmatpush1.bf16.msra.mxu0 0
      %785 = vmatprep.subr.bf16.mxu0 0
      %786 = vmatpush1.bf16.msra.mxu0 0
      %787 = vmatprep.subr.bf16.mxu0 0
      %788 = vmatpush1.bf16.msra.mxu0 0
      %789 = vmatprep.subr.bf16.mxu0 0
      %790 = vmatpush1.bf16.msra.mxu0 0
      %791 = vmatprep.subr.bf16.mxu0 0
      %792 = vmatpush1.bf16.msra.mxu0 0
      %793 = vmatprep.subr.bf16.mxu0 0
      %794 = vmatpush1.bf16.msra.mxu0 0
      %795 = vmatprep.subr.bf16.mxu0 0
      %796 = vmatpush1.bf16.msra.mxu0 0
      %797 = vmatprep.subr.bf16.mxu0 0
      %798 = vmatpush1.bf16.msra.mxu0 0
      %799 = vmatprep.mubr.bf16.mxu0 0
      %800 = vmatmul.mubr.bf16.gmra.mrb[0].mxu0 %v265
      %v801 = vpop.f32.mrb[0].mxu0
      %v802 = vadd.f32 %v195, %v801
      %v803 = vpop.f32.mrb[0].mxu0
      %v804 = vpop.f32.mrb[0].mxu0
      %v805 = vadd.f32 %v200, %v804
      %v806 = vpop.f32.mrb[0].mxu0
      %807 = vmatprep.mubr.bf16.mxu0 0
      %808 = vmatmul.mubr.bf16.gmra.mrb[0].mxu0 %v268
      %v809 = vpop.f32.mrb[0].mxu0
      %v810 = vadd.f32 %v205, %v809
      %v811 = vpop.f32.mrb[0].mxu0
      %v812 = vpop.f32.mrb[0].mxu0
      %v813 = vadd.f32 %v210, %v812
      %v814 = vpop.f32.mrb[0].mxu0
      %815 = vmatprep.mubr.bf16.mxu0 0
      %816 = vmatmul.mubr.bf16.gmra.mrb[0].mxu0 %v271
      %v817 = vpop.f32.mrb[0].mxu0
      %v818 = vadd.f32 %v215, %v817
      %v819 = vpop.f32.mrb[0].mxu0
      %v820 = vpop.f32.mrb[0].mxu0
      %v821 = vadd.f32 %v220, %v820
      %v822 = vpop.f32.mrb[0].mxu0
      %823 = vmatprep.mubr.bf16.mxu0 0
      %824 = vmatmul.mubr.bf16.gmra.mrb[0].mxu0 %v274
      %v825 = vpop.f32.mrb[0].mxu0
      %v826 = vadd.f32 %v225, %v825
      %v827 = vpop.f32.mrb[0].mxu0
      %v828 = vpop.f32.mrb[0].mxu0
      %v829 = vadd.f32 %v230, %v828
      %v830 = vpop.f32.mrb[0].mxu0
      %831 = vdwg.mxu0
      %v832 = vmax.f32 %v802, 0.0
      %v833 = vmax.f32 %v805, 0.0
      %v834 = vmax.f32 %v810, 0.0
      %v835 = vmax.f32 %v813, 0.0
      %v836 = vmax.f32 %v818, 0.0
      %v837 = vmax.f32 %v821, 0.0
      %v838 = vmax.f32 %v826, 0.0
      %v839 = vmax.f32 %v829, 0.0
      %v840 = vmax.f32 %v740, %v832
      %v841 = vmax.f32 %v741, %v833
      %v842 = vmax.f32 %v742, %v834
      %v843 = vmax.f32 %v743, %v835
      %v844 = vmax.f32 %v744, %v836
      %v845 = vmax.f32 %v745, %v837
      %v846 = vmax.f32 %v746, %v838
      %v847 = vmax.f32 %v747, %v839
      %s848 = scalar_lea.vmem %s165, 96
      %v849 = vld [vmem:[%s848] sm:$0xf]
      %v850 = vld [vmem:[%s848 + $0x4] sm:$0xf]
      %v851 = vld [vmem:[%s848 + $0x8] sm:$0xf]
      %v852 = vld [vmem:[%s848 + $0xc] sm:$0x3]
      %v857 = vunpack.c.l.b16 %v849
      %v858 = vunpack.c.l.b16 %v850
      %v859 = vunpack.c.l.b16 %v851
      %v860 = vunpack.c.l.b16 %v852
      %v861 = vpack.c.b16 %v858, %v857
      %v862 = vpack.c.b16 %v860, %v859
      %v865 = vand.u32 %v862, %v279
      %867 = vmatprep.subr.bf16.mxu0 0
      %868 = vmatpush1.bf16.msra.mxu0 %v861
      %869 = vmatprep.subr.bf16.mxu0 0
      %870 = vmatpush1.bf16.msra.mxu0 %v865
      %871 = vmatprep.subr.bf16.mxu0 0
      %872 = vmatpush1.bf16.msra.mxu0 0
      %873 = vmatprep.subr.bf16.mxu0 0
      %874 = vmatpush1.bf16.msra.mxu0 0
      %875 = vmatprep.subr.bf16.mxu0 0
      %876 = vmatpush1.bf16.msra.mxu0 0
      %877 = vmatprep.subr.bf16.mxu0 0
      %878 = vmatpush1.bf16.msra.mxu0 0
      %879 = vmatprep.subr.bf16.mxu0 0
      %880 = vmatpush1.bf16.msra.mxu0 0
      %881 = vmatprep.subr.bf16.mxu0 0
      %882 = vmatpush1.bf16.msra.mxu0 0
      %883 = vmatprep.subr.bf16.mxu0 0
      %884 = vmatpush1.bf16.msra.mxu0 0
      %885 = vmatprep.subr.bf16.mxu0 0
      %886 = vmatpush1.bf16.msra.mxu0 0
      %887 = vmatprep.subr.bf16.mxu0 0
      %888 = vmatpush1.bf16.msra.mxu0 0
      %889 = vmatprep.subr.bf16.mxu0 0
      %890 = vmatpush1.bf16.msra.mxu0 0
      %891 = vmatprep.subr.bf16.mxu0 0
      %892 = vmatpush1.bf16.msra.mxu0 0
      %893 = vmatprep.subr.bf16.mxu0 0
      %894 = vmatpush1.bf16.msra.mxu0 0
      %895 = vmatprep.subr.bf16.mxu0 0
      %896 = vmatpush1.bf16.msra.mxu0 0
      %897 = vmatprep.subr.bf16.mxu0 0
      %898 = vmatpush1.bf16.msra.mxu0 0
      %899 = vmatprep.mubr.bf16.mxu0 0
      %900 = vmatmul.mubr.bf16.gmra.mrb[0].mxu0 %v265
      %v901 = vpop.f32.mrb[0].mxu0
      %v902 = vadd.f32 %v195, %v901
      %v903 = vpop.f32.mrb[0].mxu0
      %v904 = vpop.f32.mrb[0].mxu0
      %v905 = vadd.f32 %v200, %v904
      %v906 = vpop.f32.mrb[0].mxu0
      %907 = vmatprep.mubr.bf16.mxu0 0
      %908 = vmatmul.mubr.bf16.gmra.mrb[0].mxu0 %v268
      %v909 = vpop.f32.mrb[0].mxu0
      %v910 = vadd.f32 %v205, %v909
      %v911 = vpop.f32.mrb[0].mxu0
      %v912 = vpop.f32.mrb[0].mxu0
      %v913 = vadd.f32 %v210, %v912
      %v914 = vpop.f32.mrb[0].mxu0
      %915 = vmatprep.mubr.bf16.mxu0 0
      %916 = vmatmul.mubr.bf16.gmra.mrb[0].mxu0 %v271
      %v917 = vpop.f32.mrb[0].mxu0
      %v918 = vadd.f32 %v215, %v917
      %v919 = vpop.f32.mrb[0].mxu0
      %v920 = vpop.f32.mrb[0].mxu0
      %v921 = vadd.f32 %v220, %v920
      %v922 = vpop.f32.mrb[0].mxu0
      %923 = vmatprep.mubr.bf16.mxu0 0
      %924 = vmatmul.mubr.bf16.gmra.mrb[0].mxu0 %v274
      %v925 = vpop.f32.mrb[0].mxu0
      %v926 = vadd.f32 %v225, %v925
      %v927 = vpop.f32.mrb[0].mxu0
      %v928 = vpop.f32.mrb[0].mxu0
      %v929 = vadd.f32 %v230, %v928
      %v930 = vpop.f32.mrb[0].mxu0
      %931 = vdwg.mxu0
      %v932 = vmax.f32 %v902, 0.0
      %v933 = vmax.f32 %v905, 0.0
      %v934 = vmax.f32 %v910, 0.0
      %v935 = vmax.f32 %v913, 0.0
      %v936 = vmax.f32 %v918, 0.0
      %v937 = vmax.f32 %v921, 0.0
      %v938 = vmax.f32 %v926, 0.0
      %v939 = vmax.f32 %v929, 0.0
      %v940 = vmax.f32 %v840, %v932
      %v941 = vmax.f32 %v841, %v933
      %v942 = vmax.f32 %v842, %v934
      %v943 = vmax.f32 %v843, %v935
      %v944 = vmax.f32 %v844, %v936
      %v945 = vmax.f32 %v845, %v937
      %v946 = vmax.f32 %v846, %v938
      %v947 = vmax.f32 %v847, %v939
      %s948 = scalar_lea.vmem %s165, 112
      %v949 = vld [vmem:[%s948] sm:$0xf]
      %v950 = vld [vmem:[%s948 + $0x4] sm:$0xf]
      %v951 = vld [vmem:[%s948 + $0x8] sm:$0xf]
      %v952 = vld [vmem:[%s948 + $0xc] sm:$0x3]
      %v957 = vunpack.c.l.b16 %v949
      %v958 = vunpack.c.l.b16 %v950
      %v959 = vunpack.c.l.b16 %v951
      %v960 = vunpack.c.l.b16 %v952
      %v961 = vpack.c.b16 %v958, %v957
      %v962 = vpack.c.b16 %v960, %v959
      %v965 = vand.u32 %v962, %v279
      %967 = vmatprep.subr.bf16.mxu0 0
      %968 = vmatpush1.bf16.msra.mxu0 %v961
      %969 = vmatprep.subr.bf16.mxu0 0
      %970 = vmatpush1.bf16.msra.mxu0 %v965
      %971 = vmatprep.subr.bf16.mxu0 0
      %972 = vmatpush1.bf16.msra.mxu0 0
      %973 = vmatprep.subr.bf16.mxu0 0
      %974 = vmatpush1.bf16.msra.mxu0 0
      %975 = vmatprep.subr.bf16.mxu0 0
      %976 = vmatpush1.bf16.msra.mxu0 0
      %977 = vmatprep.subr.bf16.mxu0 0
      %978 = vmatpush1.bf16.msra.mxu0 0
      %979 = vmatprep.subr.bf16.mxu0 0
      %980 = vmatpush1.bf16.msra.mxu0 0
      %981 = vmatprep.subr.bf16.mxu0 0
      %982 = vmatpush1.bf16.msra.mxu0 0
      %983 = vmatprep.subr.bf16.mxu0 0
      %984 = vmatpush1.bf16.msra.mxu0 0
      %985 = vmatprep.subr.bf16.mxu0 0
      %986 = vmatpush1.bf16.msra.mxu0 0
      %987 = vmatprep.subr.bf16.mxu0 0
      %988 = vmatpush1.bf16.msra.mxu0 0
      %989 = vmatprep.subr.bf16.mxu0 0
      %990 = vmatpush1.bf16.msra.mxu0 0
      %991 = vmatprep.subr.bf16.mxu0 0
      %992 = vmatpush1.bf16.msra.mxu0 0
      %993 = vmatprep.subr.bf16.mxu0 0
      %994 = vmatpush1.bf16.msra.mxu0 0
      %995 = vmatprep.subr.bf16.mxu0 0
      %996 = vmatpush1.bf16.msra.mxu0 0
      %997 = vmatprep.subr.bf16.mxu0 0
      %998 = vmatpush1.bf16.msra.mxu0 0
      %999 = vmatprep.mubr.bf16.mxu0 0
      %1000 = vmatmul.mubr.bf16.gmra.mrb[0].mxu0 %v265
      %v1001 = vpop.f32.mrb[0].mxu0
      %v1002 = vadd.f32 %v195, %v1001
      %v1003 = vpop.f32.mrb[0].mxu0
      %v1004 = vpop.f32.mrb[0].mxu0
      %v1005 = vadd.f32 %v200, %v1004
      %v1006 = vpop.f32.mrb[0].mxu0
      %1007 = vmatprep.mubr.bf16.mxu0 0
      %1008 = vmatmul.mubr.bf16.gmra.mrb[0].mxu0 %v268
      %v1009 = vpop.f32.mrb[0].mxu0
      %v1010 = vadd.f32 %v205, %v1009
      %v1011 = vpop.f32.mrb[0].mxu0
      %v1012 = vpop.f32.mrb[0].mxu0
      %v1013 = vadd.f32 %v210, %v1012
      %v1014 = vpop.f32.mrb[0].mxu0
      %1015 = vmatprep.mubr.bf16.mxu0 0
      %1016 = vmatmul.mubr.bf16.gmra.mrb[0].mxu0 %v271
      %v1017 = vpop.f32.mrb[0].mxu0
      %v1018 = vadd.f32 %v215, %v1017
      %v1019 = vpop.f32.mrb[0].mxu0
      %v1020 = vpop.f32.mrb[0].mxu0
      %v1021 = vadd.f32 %v220, %v1020
      %v1022 = vpop.f32.mrb[0].mxu0
      %1023 = vmatprep.mubr.bf16.mxu0 0
      %1024 = vmatmul.mubr.bf16.gmra.mrb[0].mxu0 %v274
      %v1025 = vpop.f32.mrb[0].mxu0
      %v1026 = vadd.f32 %v225, %v1025
      %v1027 = vpop.f32.mrb[0].mxu0
      %v1028 = vpop.f32.mrb[0].mxu0
      %v1029 = vadd.f32 %v230, %v1028
      %v1030 = vpop.f32.mrb[0].mxu0
      %1031 = vdwg.mxu0
      %v1032 = vmax.f32 %v1002, 0.0
      %v1033 = vmax.f32 %v1005, 0.0
      %v1034 = vmax.f32 %v1010, 0.0
      %v1035 = vmax.f32 %v1013, 0.0
      %v1036 = vmax.f32 %v1018, 0.0
      %v1037 = vmax.f32 %v1021, 0.0
      %v1038 = vmax.f32 %v1026, 0.0
      %v1039 = vmax.f32 %v1029, 0.0
      %v1040 = vmax.f32 %v940, %v1032
      %v1041 = vmax.f32 %v941, %v1033
      %v1042 = vmax.f32 %v942, %v1034
      %v1043 = vmax.f32 %v943, %v1035
      %v1044 = vmax.f32 %v944, %v1036
      %v1045 = vmax.f32 %v945, %v1037
      %v1046 = vmax.f32 %v946, %v1038
      %v1047 = vmax.f32 %v947, %v1039
      %v1048 = vadd.f32 %v648, %v1040
      %v1049 = vadd.f32 %v649, %v1041
      %v1050 = vadd.f32 %v650, %v1042
      %v1051 = vadd.f32 %v651, %v1043
      %v1052 = vadd.f32 %v652, %v1044
      %v1053 = vadd.f32 %v653, %v1045
      %v1054 = vadd.f32 %v654, %v1046
      %v1055 = vadd.f32 %v655, %v1047
      %s1056 = scalar_lea.vmem %s165, 128
      %v1057 = vld [vmem:[%s1056] sm:$0xf]
      %v1058 = vld [vmem:[%s1056 + $0x4] sm:$0xf]
      %v1059 = vld [vmem:[%s1056 + $0x8] sm:$0xf]
      %v1060 = vld [vmem:[%s1056 + $0xc] sm:$0x3]
      %v1065 = vunpack.c.l.b16 %v1057
      %v1066 = vunpack.c.l.b16 %v1058
      %v1067 = vunpack.c.l.b16 %v1059
      %v1068 = vunpack.c.l.b16 %v1060
      %v1069 = vpack.c.b16 %v1066, %v1065
      %v1070 = vpack.c.b16 %v1068, %v1067
      %v1073 = vand.u32 %v1070, %v279
      %1075 = vmatprep.subr.bf16.mxu0 0
      %1076 = vmatpush1.bf16.msra.mxu0 %v1069
      %1077 = vmatprep.subr.bf16.mxu0 0
      %1078 = vmatpush1.bf16.msra.mxu0 %v1073
      %1079 = vmatprep.subr.bf16.mxu0 0
      %1080 = vmatpush1.bf16.msra.mxu0 0
      %1081 = vmatprep.subr.bf16.mxu0 0
      %1082 = vmatpush1.bf16.msra.mxu0 0
      %1083 = vmatprep.subr.bf16.mxu0 0
      %1084 = vmatpush1.bf16.msra.mxu0 0
      %1085 = vmatprep.subr.bf16.mxu0 0
      %1086 = vmatpush1.bf16.msra.mxu0 0
      %1087 = vmatprep.subr.bf16.mxu0 0
      %1088 = vmatpush1.bf16.msra.mxu0 0
      %1089 = vmatprep.subr.bf16.mxu0 0
      %1090 = vmatpush1.bf16.msra.mxu0 0
      %1091 = vmatprep.subr.bf16.mxu0 0
      %1092 = vmatpush1.bf16.msra.mxu0 0
      %1093 = vmatprep.subr.bf16.mxu0 0
      %1094 = vmatpush1.bf16.msra.mxu0 0
      %1095 = vmatprep.subr.bf16.mxu0 0
      %1096 = vmatpush1.bf16.msra.mxu0 0
      %1097 = vmatprep.subr.bf16.mxu0 0
      %1098 = vmatpush1.bf16.msra.mxu0 0
      %1099 = vmatprep.subr.bf16.mxu0 0
      %1100 = vmatpush1.bf16.msra.mxu0 0
      %1101 = vmatprep.subr.bf16.mxu0 0
      %1102 = vmatpush1.bf16.msra.mxu0 0
      %1103 = vmatprep.subr.bf16.mxu0 0
      %1104 = vmatpush1.bf16.msra.mxu0 0
      %1105 = vmatprep.subr.bf16.mxu0 0
      %1106 = vmatpush1.bf16.msra.mxu0 0
      %1107 = vmatprep.mubr.bf16.mxu0 0
      %1108 = vmatmul.mubr.bf16.gmra.mrb[0].mxu0 %v265
      %v1109 = vpop.f32.mrb[0].mxu0
      %v1110 = vadd.f32 %v195, %v1109
      %v1111 = vpop.f32.mrb[0].mxu0
      %v1112 = vpop.f32.mrb[0].mxu0
      %v1113 = vadd.f32 %v200, %v1112
      %v1114 = vpop.f32.mrb[0].mxu0
      %1115 = vmatprep.mubr.bf16.mxu0 0
      %1116 = vmatmul.mubr.bf16.gmra.mrb[0].mxu0 %v268
      %v1117 = vpop.f32.mrb[0].mxu0
      %v1118 = vadd.f32 %v205, %v1117
      %v1119 = vpop.f32.mrb[0].mxu0
      %v1120 = vpop.f32.mrb[0].mxu0
      %v1121 = vadd.f32 %v210, %v1120
      %v1122 = vpop.f32.mrb[0].mxu0
      %1123 = vmatprep.mubr.bf16.mxu0 0
      %1124 = vmatmul.mubr.bf16.gmra.mrb[0].mxu0 %v271
      %v1125 = vpop.f32.mrb[0].mxu0
      %v1126 = vadd.f32 %v215, %v1125
      %v1127 = vpop.f32.mrb[0].mxu0
      %v1128 = vpop.f32.mrb[0].mxu0
      %v1129 = vadd.f32 %v220, %v1128
      %v1130 = vpop.f32.mrb[0].mxu0
      %1131 = vmatprep.mubr.bf16.mxu0 0
      %1132 = vmatmul.mubr.bf16.gmra.mrb[0].mxu0 %v274
      %v1133 = vpop.f32.mrb[0].mxu0
      %v1134 = vadd.f32 %v225, %v1133
      %v1135 = vpop.f32.mrb[0].mxu0
      %v1136 = vpop.f32.mrb[0].mxu0
      %v1137 = vadd.f32 %v230, %v1136
      %v1138 = vpop.f32.mrb[0].mxu0
      %1139 = vdwg.mxu0
      %v1140 = vmax.f32 %v1110, 0.0
      %v1141 = vmax.f32 %v1113, 0.0
      %v1142 = vmax.f32 %v1118, 0.0
      %v1143 = vmax.f32 %v1121, 0.0
      %v1144 = vmax.f32 %v1126, 0.0
      %v1145 = vmax.f32 %v1129, 0.0
      %v1146 = vmax.f32 %v1134, 0.0
      %v1147 = vmax.f32 %v1137, 0.0
      %s1148 = scalar_lea.vmem %s165, 144
      %v1149 = vld [vmem:[%s1148] sm:$0xf]
      %v1150 = vld [vmem:[%s1148 + $0x4] sm:$0xf]
      %v1151 = vld [vmem:[%s1148 + $0x8] sm:$0xf]
      %v1152 = vld [vmem:[%s1148 + $0xc] sm:$0x3]
      %v1157 = vunpack.c.l.b16 %v1149
      %v1158 = vunpack.c.l.b16 %v1150
      %v1159 = vunpack.c.l.b16 %v1151
      %v1160 = vunpack.c.l.b16 %v1152
      %v1161 = vpack.c.b16 %v1158, %v1157
      %v1162 = vpack.c.b16 %v1160, %v1159
      %v1165 = vand.u32 %v1162, %v279
      %1167 = vmatprep.subr.bf16.mxu0 0
      %1168 = vmatpush1.bf16.msra.mxu0 %v1161
      %1169 = vmatprep.subr.bf16.mxu0 0
      %1170 = vmatpush1.bf16.msra.mxu0 %v1165
      %1171 = vmatprep.subr.bf16.mxu0 0
      %1172 = vmatpush1.bf16.msra.mxu0 0
      %1173 = vmatprep.subr.bf16.mxu0 0
      %1174 = vmatpush1.bf16.msra.mxu0 0
      %1175 = vmatprep.subr.bf16.mxu0 0
      %1176 = vmatpush1.bf16.msra.mxu0 0
      %1177 = vmatprep.subr.bf16.mxu0 0
      %1178 = vmatpush1.bf16.msra.mxu0 0
      %1179 = vmatprep.subr.bf16.mxu0 0
      %1180 = vmatpush1.bf16.msra.mxu0 0
      %1181 = vmatprep.subr.bf16.mxu0 0
      %1182 = vmatpush1.bf16.msra.mxu0 0
      %1183 = vmatprep.subr.bf16.mxu0 0
      %1184 = vmatpush1.bf16.msra.mxu0 0
      %1185 = vmatprep.subr.bf16.mxu0 0
      %1186 = vmatpush1.bf16.msra.mxu0 0
      %1187 = vmatprep.subr.bf16.mxu0 0
      %1188 = vmatpush1.bf16.msra.mxu0 0
      %1189 = vmatprep.subr.bf16.mxu0 0
      %1190 = vmatpush1.bf16.msra.mxu0 0
      %1191 = vmatprep.subr.bf16.mxu0 0
      %1192 = vmatpush1.bf16.msra.mxu0 0
      %1193 = vmatprep.subr.bf16.mxu0 0
      %1194 = vmatpush1.bf16.msra.mxu0 0
      %1195 = vmatprep.subr.bf16.mxu0 0
      %1196 = vmatpush1.bf16.msra.mxu0 0
      %1197 = vmatprep.subr.bf16.mxu0 0
      %1198 = vmatpush1.bf16.msra.mxu0 0
      %1199 = vmatprep.mubr.bf16.mxu0 0
      %1200 = vmatmul.mubr.bf16.gmra.mrb[0].mxu0 %v265
      %v1201 = vpop.f32.mrb[0].mxu0
      %v1202 = vadd.f32 %v195, %v1201
      %v1203 = vpop.f32.mrb[0].mxu0
      %v1204 = vpop.f32.mrb[0].mxu0
      %v1205 = vadd.f32 %v200, %v1204
      %v1206 = vpop.f32.mrb[0].mxu0
      %1207 = vmatprep.mubr.bf16.mxu0 0
      %1208 = vmatmul.mubr.bf16.gmra.mrb[0].mxu0 %v268
      %v1209 = vpop.f32.mrb[0].mxu0
      %v1210 = vadd.f32 %v205, %v1209
      %v1211 = vpop.f32.mrb[0].mxu0
      %v1212 = vpop.f32.mrb[0].mxu0
      %v1213 = vadd.f32 %v210, %v1212
      %v1214 = vpop.f32.mrb[0].mxu0
      %1215 = vmatprep.mubr.bf16.mxu0 0
      %1216 = vmatmul.mubr.bf16.gmra.mrb[0].mxu0 %v271
      %v1217 = vpop.f32.mrb[0].mxu0
      %v1218 = vadd.f32 %v215, %v1217
      %v1219 = vpop.f32.mrb[0].mxu0
      %v1220 = vpop.f32.mrb[0].mxu0
      %v1221 = vadd.f32 %v220, %v1220
      %v1222 = vpop.f32.mrb[0].mxu0
      %1223 = vmatprep.mubr.bf16.mxu0 0
      %1224 = vmatmul.mubr.bf16.gmra.mrb[0].mxu0 %v274
      %v1225 = vpop.f32.mrb[0].mxu0
      %v1226 = vadd.f32 %v225, %v1225
      %v1227 = vpop.f32.mrb[0].mxu0
      %v1228 = vpop.f32.mrb[0].mxu0
      %v1229 = vadd.f32 %v230, %v1228
      %v1230 = vpop.f32.mrb[0].mxu0
      %1231 = vdwg.mxu0
      %v1232 = vmax.f32 %v1202, 0.0
      %v1233 = vmax.f32 %v1205, 0.0
      %v1234 = vmax.f32 %v1210, 0.0
      %v1235 = vmax.f32 %v1213, 0.0
      %v1236 = vmax.f32 %v1218, 0.0
      %v1237 = vmax.f32 %v1221, 0.0
      %v1238 = vmax.f32 %v1226, 0.0
      %v1239 = vmax.f32 %v1229, 0.0
      %v1240 = vmax.f32 %v1140, %v1232
      %v1241 = vmax.f32 %v1141, %v1233
      %v1242 = vmax.f32 %v1142, %v1234
      %v1243 = vmax.f32 %v1143, %v1235
      %v1244 = vmax.f32 %v1144, %v1236
      %v1245 = vmax.f32 %v1145, %v1237
      %v1246 = vmax.f32 %v1146, %v1238
      %v1247 = vmax.f32 %v1147, %v1239
      %s1248 = scalar_lea.vmem %s165, 160
      %v1249 = vld [vmem:[%s1248] sm:$0xf]
      %v1250 = vld [vmem:[%s1248 + $0x4] sm:$0xf]
      %v1251 = vld [vmem:[%s1248 + $0x8] sm:$0xf]
      %v1252 = vld [vmem:[%s1248 + $0xc] sm:$0x3]
      %v1257 = vunpack.c.l.b16 %v1249
      %v1258 = vunpack.c.l.b16 %v1250
      %v1259 = vunpack.c.l.b16 %v1251
      %v1260 = vunpack.c.l.b16 %v1252
      %v1261 = vpack.c.b16 %v1258, %v1257
      %v1262 = vpack.c.b16 %v1260, %v1259
      %v1265 = vand.u32 %v1262, %v279
      %1267 = vmatprep.subr.bf16.mxu0 0
      %1268 = vmatpush1.bf16.msra.mxu0 %v1261
      %1269 = vmatprep.subr.bf16.mxu0 0
      %1270 = vmatpush1.bf16.msra.mxu0 %v1265
      %1271 = vmatprep.subr.bf16.mxu0 0
      %1272 = vmatpush1.bf16.msra.mxu0 0
      %1273 = vmatprep.subr.bf16.mxu0 0
      %1274 = vmatpush1.bf16.msra.mxu0 0
      %1275 = vmatprep.subr.bf16.mxu0 0
      %1276 = vmatpush1.bf16.msra.mxu0 0
      %1277 = vmatprep.subr.bf16.mxu0 0
      %1278 = vmatpush1.bf16.msra.mxu0 0
      %1279 = vmatprep.subr.bf16.mxu0 0
      %1280 = vmatpush1.bf16.msra.mxu0 0
      %1281 = vmatprep.subr.bf16.mxu0 0
      %1282 = vmatpush1.bf16.msra.mxu0 0
      %1283 = vmatprep.subr.bf16.mxu0 0
      %1284 = vmatpush1.bf16.msra.mxu0 0
      %1285 = vmatprep.subr.bf16.mxu0 0
      %1286 = vmatpush1.bf16.msra.mxu0 0
      %1287 = vmatprep.subr.bf16.mxu0 0
      %1288 = vmatpush1.bf16.msra.mxu0 0
      %1289 = vmatprep.subr.bf16.mxu0 0
      %1290 = vmatpush1.bf16.msra.mxu0 0
      %1291 = vmatprep.subr.bf16.mxu0 0
      %1292 = vmatpush1.bf16.msra.mxu0 0
      %1293 = vmatprep.subr.bf16.mxu0 0
      %1294 = vmatpush1.bf16.msra.mxu0 0
      %1295 = vmatprep.subr.bf16.mxu0 0
      %1296 = vmatpush1.bf16.msra.mxu0 0
      %1297 = vmatprep.subr.bf16.mxu0 0
      %1298 = vmatpush1.bf16.msra.mxu0 0
      %1299 = vmatprep.mubr.bf16.mxu0 0
      %1300 = vmatmul.mubr.bf16.gmra.mrb[0].mxu0 %v265
      %v1301 = vpop.f32.mrb[0].mxu0
      %v1302 = vadd.f32 %v195, %v1301
      %v1303 = vpop.f32.mrb[0].mxu0
      %v1304 = vpop.f32.mrb[0].mxu0
      %v1305 = vadd.f32 %v200, %v1304
      %v1306 = vpop.f32.mrb[0].mxu0
      %1307 = vmatprep.mubr.bf16.mxu0 0
      %1308 = vmatmul.mubr.bf16.gmra.mrb[0].mxu0 %v268
      %v1309 = vpop.f32.mrb[0].mxu0
      %v1310 = vadd.f32 %v205, %v1309
      %v1311 = vpop.f32.mrb[0].mxu0
      %v1312 = vpop.f32.mrb[0].mxu0
      %v1313 = vadd.f32 %v210, %v1312
      %v1314 = vpop.f32.mrb[0].mxu0
      %1315 = vmatprep.mubr.bf16.mxu0 0
      %1316 = vmatmul.mubr.bf16.gmra.mrb[0].mxu0 %v271
      %v1317 = vpop.f32.mrb[0].mxu0
      %v1318 = vadd.f32 %v215, %v1317
      %v1319 = vpop.f32.mrb[0].mxu0
      %v1320 = vpop.f32.mrb[0].mxu0
      %v1321 = vadd.f32 %v220, %v1320
      %v1322 = vpop.f32.mrb[0].mxu0
      %1323 = vmatprep.mubr.bf16.mxu0 0
      %1324 = vmatmul.mubr.bf16.gmra.mrb[0].mxu0 %v274
      %v1325 = vpop.f32.mrb[0].mxu0
      %v1326 = vadd.f32 %v225, %v1325
      %v1327 = vpop.f32.mrb[0].mxu0
      %v1328 = vpop.f32.mrb[0].mxu0
      %v1329 = vadd.f32 %v230, %v1328
      %v1330 = vpop.f32.mrb[0].mxu0
      %1331 = vdwg.mxu0
      %v1332 = vmax.f32 %v1302, 0.0
      %v1333 = vmax.f32 %v1305, 0.0
      %v1334 = vmax.f32 %v1310, 0.0
      %v1335 = vmax.f32 %v1313, 0.0
      %v1336 = vmax.f32 %v1318, 0.0
      %v1337 = vmax.f32 %v1321, 0.0
      %v1338 = vmax.f32 %v1326, 0.0
      %v1339 = vmax.f32 %v1329, 0.0
      %v1340 = vmax.f32 %v1240, %v1332
      %v1341 = vmax.f32 %v1241, %v1333
      %v1342 = vmax.f32 %v1242, %v1334
      %v1343 = vmax.f32 %v1243, %v1335
      %v1344 = vmax.f32 %v1244, %v1336
      %v1345 = vmax.f32 %v1245, %v1337
      %v1346 = vmax.f32 %v1246, %v1338
      %v1347 = vmax.f32 %v1247, %v1339
      %s1348 = scalar_lea.vmem %s165, 176
      %v1349 = vld [vmem:[%s1348] sm:$0xf]
      %v1350 = vld [vmem:[%s1348 + $0x4] sm:$0xf]
      %v1351 = vld [vmem:[%s1348 + $0x8] sm:$0xf]
      %v1352 = vld [vmem:[%s1348 + $0xc] sm:$0x3]
      %v1357 = vunpack.c.l.b16 %v1349
      %v1358 = vunpack.c.l.b16 %v1350
      %v1359 = vunpack.c.l.b16 %v1351
      %v1360 = vunpack.c.l.b16 %v1352
      %v1361 = vpack.c.b16 %v1358, %v1357
      %v1362 = vpack.c.b16 %v1360, %v1359
      %v1365 = vand.u32 %v1362, %v279
      %1367 = vmatprep.subr.bf16.mxu0 0
      %1368 = vmatpush1.bf16.msra.mxu0 %v1361
      %1369 = vmatprep.subr.bf16.mxu0 0
      %1370 = vmatpush1.bf16.msra.mxu0 %v1365
      %1371 = vmatprep.subr.bf16.mxu0 0
      %1372 = vmatpush1.bf16.msra.mxu0 0
      %1373 = vmatprep.subr.bf16.mxu0 0
      %1374 = vmatpush1.bf16.msra.mxu0 0
      %1375 = vmatprep.subr.bf16.mxu0 0
      %1376 = vmatpush1.bf16.msra.mxu0 0
      %1377 = vmatprep.subr.bf16.mxu0 0
      %1378 = vmatpush1.bf16.msra.mxu0 0
      %1379 = vmatprep.subr.bf16.mxu0 0
      %1380 = vmatpush1.bf16.msra.mxu0 0
      %1381 = vmatprep.subr.bf16.mxu0 0
      %1382 = vmatpush1.bf16.msra.mxu0 0
      %1383 = vmatprep.subr.bf16.mxu0 0
      %1384 = vmatpush1.bf16.msra.mxu0 0
      %1385 = vmatprep.subr.bf16.mxu0 0
      %1386 = vmatpush1.bf16.msra.mxu0 0
      %1387 = vmatprep.subr.bf16.mxu0 0
      %1388 = vmatpush1.bf16.msra.mxu0 0
      %1389 = vmatprep.subr.bf16.mxu0 0
      %1390 = vmatpush1.bf16.msra.mxu0 0
      %1391 = vmatprep.subr.bf16.mxu0 0
      %1392 = vmatpush1.bf16.msra.mxu0 0
      %1393 = vmatprep.subr.bf16.mxu0 0
      %1394 = vmatpush1.bf16.msra.mxu0 0
      %1395 = vmatprep.subr.bf16.mxu0 0
      %1396 = vmatpush1.bf16.msra.mxu0 0
      %1397 = vmatprep.subr.bf16.mxu0 0
      %1398 = vmatpush1.bf16.msra.mxu0 0
      %1399 = vmatprep.mubr.bf16.mxu0 0
      %1400 = vmatmul.mubr.bf16.gmra.mrb[0].mxu0 %v265
      %v1401 = vpop.f32.mrb[0].mxu0
      %v1402 = vadd.f32 %v195, %v1401
      %v1403 = vpop.f32.mrb[0].mxu0
      %v1404 = vpop.f32.mrb[0].mxu0
      %v1405 = vadd.f32 %v200, %v1404
      %v1406 = vpop.f32.mrb[0].mxu0
      %1407 = vmatprep.mubr.bf16.mxu0 0
      %1408 = vmatmul.mubr.bf16.gmra.mrb[0].mxu0 %v268
      %v1409 = vpop.f32.mrb[0].mxu0
      %v1410 = vadd.f32 %v205, %v1409
      %v1411 = vpop.f32.mrb[0].mxu0
      %v1412 = vpop.f32.mrb[0].mxu0
      %v1413 = vadd.f32 %v210, %v1412
      %v1414 = vpop.f32.mrb[0].mxu0
      %1415 = vmatprep.mubr.bf16.mxu0 0
      %1416 = vmatmul.mubr.bf16.gmra.mrb[0].mxu0 %v271
      %v1417 = vpop.f32.mrb[0].mxu0
      %v1418 = vadd.f32 %v215, %v1417
      %v1419 = vpop.f32.mrb[0].mxu0
      %v1420 = vpop.f32.mrb[0].mxu0
      %v1421 = vadd.f32 %v220, %v1420
      %v1422 = vpop.f32.mrb[0].mxu0
      %1423 = vmatprep.mubr.bf16.mxu0 0
      %1424 = vmatmul.mubr.bf16.gmra.mrb[0].mxu0 %v274
      %v1425 = vpop.f32.mrb[0].mxu0
      %v1426 = vadd.f32 %v225, %v1425
      %v1427 = vpop.f32.mrb[0].mxu0
      %v1428 = vpop.f32.mrb[0].mxu0
      %v1429 = vadd.f32 %v230, %v1428
      %v1430 = vpop.f32.mrb[0].mxu0
      %1431 = vdwg.mxu0
      %v1432 = vmax.f32 %v1402, 0.0
      %v1433 = vmax.f32 %v1405, 0.0
      %v1434 = vmax.f32 %v1410, 0.0
      %v1435 = vmax.f32 %v1413, 0.0
      %v1436 = vmax.f32 %v1418, 0.0
      %v1437 = vmax.f32 %v1421, 0.0
      %v1438 = vmax.f32 %v1426, 0.0
      %v1439 = vmax.f32 %v1429, 0.0
      %v1440 = vmax.f32 %v1340, %v1432
      %v1441 = vmax.f32 %v1341, %v1433
      %v1442 = vmax.f32 %v1342, %v1434
      %v1443 = vmax.f32 %v1343, %v1435
      %v1444 = vmax.f32 %v1344, %v1436
      %v1445 = vmax.f32 %v1345, %v1437
      %v1446 = vmax.f32 %v1346, %v1438
      %v1447 = vmax.f32 %v1347, %v1439
      %v1448 = vadd.f32 %v1048, %v1440
      %v1449 = vadd.f32 %v1049, %v1441
      %v1450 = vadd.f32 %v1050, %v1442
      %v1451 = vadd.f32 %v1051, %v1443
      %v1452 = vadd.f32 %v1052, %v1444
      %v1453 = vadd.f32 %v1053, %v1445
      %v1454 = vadd.f32 %v1054, %v1446
      %v1455 = vadd.f32 %v1055, %v1447
      %s1456 = scalar_lea.vmem %s165, 192
      %v1457 = vld [vmem:[%s1456] sm:$0xf]
      %v1458 = vld [vmem:[%s1456 + $0x4] sm:$0xf]
      %v1459 = vld [vmem:[%s1456 + $0x8] sm:$0xf]
      %v1460 = vld [vmem:[%s1456 + $0xc] sm:$0x3]
      %v1465 = vunpack.c.l.b16 %v1457
      %v1466 = vunpack.c.l.b16 %v1458
      %v1467 = vunpack.c.l.b16 %v1459
      %v1468 = vunpack.c.l.b16 %v1460
      %v1469 = vpack.c.b16 %v1466, %v1465
      %v1470 = vpack.c.b16 %v1468, %v1467
      %v1473 = vand.u32 %v1470, %v279
      %1475 = vmatprep.subr.bf16.mxu0 0
      %1476 = vmatpush1.bf16.msra.mxu0 %v1469
      %1477 = vmatprep.subr.bf16.mxu0 0
      %1478 = vmatpush1.bf16.msra.mxu0 %v1473
      %1479 = vmatprep.subr.bf16.mxu0 0
      %1480 = vmatpush1.bf16.msra.mxu0 0
      %1481 = vmatprep.subr.bf16.mxu0 0
      %1482 = vmatpush1.bf16.msra.mxu0 0
      %1483 = vmatprep.subr.bf16.mxu0 0
      %1484 = vmatpush1.bf16.msra.mxu0 0
      %1485 = vmatprep.subr.bf16.mxu0 0
      %1486 = vmatpush1.bf16.msra.mxu0 0
      %1487 = vmatprep.subr.bf16.mxu0 0
      %1488 = vmatpush1.bf16.msra.mxu0 0
      %1489 = vmatprep.subr.bf16.mxu0 0
      %1490 = vmatpush1.bf16.msra.mxu0 0
      %1491 = vmatprep.subr.bf16.mxu0 0
      %1492 = vmatpush1.bf16.msra.mxu0 0
      %1493 = vmatprep.subr.bf16.mxu0 0
      %1494 = vmatpush1.bf16.msra.mxu0 0
      %1495 = vmatprep.subr.bf16.mxu0 0
      %1496 = vmatpush1.bf16.msra.mxu0 0
      %1497 = vmatprep.subr.bf16.mxu0 0
      %1498 = vmatpush1.bf16.msra.mxu0 0
      %1499 = vmatprep.subr.bf16.mxu0 0
      %1500 = vmatpush1.bf16.msra.mxu0 0
      %1501 = vmatprep.subr.bf16.mxu0 0
      %1502 = vmatpush1.bf16.msra.mxu0 0
      %1503 = vmatprep.subr.bf16.mxu0 0
      %1504 = vmatpush1.bf16.msra.mxu0 0
      %1505 = vmatprep.subr.bf16.mxu0 0
      %1506 = vmatpush1.bf16.msra.mxu0 0
      %1507 = vmatprep.mubr.bf16.mxu0 0
      %1508 = vmatmul.mubr.bf16.gmra.mrb[0].mxu0 %v265
      %v1509 = vpop.f32.mrb[0].mxu0
      %v1510 = vadd.f32 %v195, %v1509
      %v1511 = vpop.f32.mrb[0].mxu0
      %v1512 = vpop.f32.mrb[0].mxu0
      %v1513 = vadd.f32 %v200, %v1512
      %v1514 = vpop.f32.mrb[0].mxu0
      %1515 = vmatprep.mubr.bf16.mxu0 0
      %1516 = vmatmul.mubr.bf16.gmra.mrb[0].mxu0 %v268
      %v1517 = vpop.f32.mrb[0].mxu0
      %v1518 = vadd.f32 %v205, %v1517
      %v1519 = vpop.f32.mrb[0].mxu0
      %v1520 = vpop.f32.mrb[0].mxu0
      %v1521 = vadd.f32 %v210, %v1520
      %v1522 = vpop.f32.mrb[0].mxu0
      %1523 = vmatprep.mubr.bf16.mxu0 0
      %1524 = vmatmul.mubr.bf16.gmra.mrb[0].mxu0 %v271
      %v1525 = vpop.f32.mrb[0].mxu0
      %v1526 = vadd.f32 %v215, %v1525
      %v1527 = vpop.f32.mrb[0].mxu0
      %v1528 = vpop.f32.mrb[0].mxu0
      %v1529 = vadd.f32 %v220, %v1528
      %v1530 = vpop.f32.mrb[0].mxu0
      %1531 = vmatprep.mubr.bf16.mxu0 0
      %1532 = vmatmul.mubr.bf16.gmra.mrb[0].mxu0 %v274
      %v1533 = vpop.f32.mrb[0].mxu0
      %v1534 = vadd.f32 %v225, %v1533
      %v1535 = vpop.f32.mrb[0].mxu0
      %v1536 = vpop.f32.mrb[0].mxu0
      %v1537 = vadd.f32 %v230, %v1536
      %v1538 = vpop.f32.mrb[0].mxu0
      %1539 = vdwg.mxu0
      %v1540 = vmax.f32 %v1510, 0.0
      %v1541 = vmax.f32 %v1513, 0.0
      %v1542 = vmax.f32 %v1518, 0.0
      %v1543 = vmax.f32 %v1521, 0.0
      %v1544 = vmax.f32 %v1526, 0.0
      %v1545 = vmax.f32 %v1529, 0.0
      %v1546 = vmax.f32 %v1534, 0.0
      %v1547 = vmax.f32 %v1537, 0.0
      %s1548 = scalar_lea.vmem %s165, 208
      %v1549 = vld [vmem:[%s1548] sm:$0xf]
      %v1550 = vld [vmem:[%s1548 + $0x4] sm:$0xf]
      %v1551 = vld [vmem:[%s1548 + $0x8] sm:$0xf]
      %v1552 = vld [vmem:[%s1548 + $0xc] sm:$0x3]
      %v1557 = vunpack.c.l.b16 %v1549
      %v1558 = vunpack.c.l.b16 %v1550
      %v1559 = vunpack.c.l.b16 %v1551
      %v1560 = vunpack.c.l.b16 %v1552
      %v1561 = vpack.c.b16 %v1558, %v1557
      %v1562 = vpack.c.b16 %v1560, %v1559
      %v1565 = vand.u32 %v1562, %v279
      %1567 = vmatprep.subr.bf16.mxu0 0
      %1568 = vmatpush1.bf16.msra.mxu0 %v1561
      %1569 = vmatprep.subr.bf16.mxu0 0
      %1570 = vmatpush1.bf16.msra.mxu0 %v1565
      %1571 = vmatprep.subr.bf16.mxu0 0
      %1572 = vmatpush1.bf16.msra.mxu0 0
      %1573 = vmatprep.subr.bf16.mxu0 0
      %1574 = vmatpush1.bf16.msra.mxu0 0
      %1575 = vmatprep.subr.bf16.mxu0 0
      %1576 = vmatpush1.bf16.msra.mxu0 0
      %1577 = vmatprep.subr.bf16.mxu0 0
      %1578 = vmatpush1.bf16.msra.mxu0 0
      %1579 = vmatprep.subr.bf16.mxu0 0
      %1580 = vmatpush1.bf16.msra.mxu0 0
      %1581 = vmatprep.subr.bf16.mxu0 0
      %1582 = vmatpush1.bf16.msra.mxu0 0
      %1583 = vmatprep.subr.bf16.mxu0 0
      %1584 = vmatpush1.bf16.msra.mxu0 0
      %1585 = vmatprep.subr.bf16.mxu0 0
      %1586 = vmatpush1.bf16.msra.mxu0 0
      %1587 = vmatprep.subr.bf16.mxu0 0
      %1588 = vmatpush1.bf16.msra.mxu0 0
      %1589 = vmatprep.subr.bf16.mxu0 0
      %1590 = vmatpush1.bf16.msra.mxu0 0
      %1591 = vmatprep.subr.bf16.mxu0 0
      %1592 = vmatpush1.bf16.msra.mxu0 0
      %1593 = vmatprep.subr.bf16.mxu0 0
      %1594 = vmatpush1.bf16.msra.mxu0 0
      %1595 = vmatprep.subr.bf16.mxu0 0
      %1596 = vmatpush1.bf16.msra.mxu0 0
      %1597 = vmatprep.subr.bf16.mxu0 0
      %1598 = vmatpush1.bf16.msra.mxu0 0
      %1599 = vmatprep.mubr.bf16.mxu0 0
      %1600 = vmatmul.mubr.bf16.gmra.mrb[0].mxu0 %v265
      %v1601 = vpop.f32.mrb[0].mxu0
      %v1602 = vadd.f32 %v195, %v1601
      %v1603 = vpop.f32.mrb[0].mxu0
      %v1604 = vpop.f32.mrb[0].mxu0
      %v1605 = vadd.f32 %v200, %v1604
      %v1606 = vpop.f32.mrb[0].mxu0
      %1607 = vmatprep.mubr.bf16.mxu0 0
      %1608 = vmatmul.mubr.bf16.gmra.mrb[0].mxu0 %v268
      %v1609 = vpop.f32.mrb[0].mxu0
      %v1610 = vadd.f32 %v205, %v1609
      %v1611 = vpop.f32.mrb[0].mxu0
      %v1612 = vpop.f32.mrb[0].mxu0
      %v1613 = vadd.f32 %v210, %v1612
      %v1614 = vpop.f32.mrb[0].mxu0
      %1615 = vmatprep.mubr.bf16.mxu0 0
      %1616 = vmatmul.mubr.bf16.gmra.mrb[0].mxu0 %v271
      %v1617 = vpop.f32.mrb[0].mxu0
      %v1618 = vadd.f32 %v215, %v1617
      %v1619 = vpop.f32.mrb[0].mxu0
      %v1620 = vpop.f32.mrb[0].mxu0
      %v1621 = vadd.f32 %v220, %v1620
      %v1622 = vpop.f32.mrb[0].mxu0
      %1623 = vmatprep.mubr.bf16.mxu0 0
      %1624 = vmatmul.mubr.bf16.gmra.mrb[0].mxu0 %v274
      %v1625 = vpop.f32.mrb[0].mxu0
      %v1626 = vadd.f32 %v225, %v1625
      %v1627 = vpop.f32.mrb[0].mxu0
      %v1628 = vpop.f32.mrb[0].mxu0
      %v1629 = vadd.f32 %v230, %v1628
      %v1630 = vpop.f32.mrb[0].mxu0
      %1631 = vdwg.mxu0
      %v1632 = vmax.f32 %v1602, 0.0
      %v1633 = vmax.f32 %v1605, 0.0
      %v1634 = vmax.f32 %v1610, 0.0
      %v1635 = vmax.f32 %v1613, 0.0
      %v1636 = vmax.f32 %v1618, 0.0
      %v1637 = vmax.f32 %v1621, 0.0
      %v1638 = vmax.f32 %v1626, 0.0
      %v1639 = vmax.f32 %v1629, 0.0
      %v1640 = vmax.f32 %v1540, %v1632
      %v1641 = vmax.f32 %v1541, %v1633
      %v1642 = vmax.f32 %v1542, %v1634
      %v1643 = vmax.f32 %v1543, %v1635
      %v1644 = vmax.f32 %v1544, %v1636
      %v1645 = vmax.f32 %v1545, %v1637
      %v1646 = vmax.f32 %v1546, %v1638
      %v1647 = vmax.f32 %v1547, %v1639
      %s1648 = scalar_lea.vmem %s165, 224
      %v1649 = vld [vmem:[%s1648] sm:$0xf]
      %v1650 = vld [vmem:[%s1648 + $0x4] sm:$0xf]
      %v1651 = vld [vmem:[%s1648 + $0x8] sm:$0xf]
      %v1652 = vld [vmem:[%s1648 + $0xc] sm:$0x3]
      %v1657 = vunpack.c.l.b16 %v1649
      %v1658 = vunpack.c.l.b16 %v1650
      %v1659 = vunpack.c.l.b16 %v1651
      %v1660 = vunpack.c.l.b16 %v1652
      %v1661 = vpack.c.b16 %v1658, %v1657
      %v1662 = vpack.c.b16 %v1660, %v1659
      %v1665 = vand.u32 %v1662, %v279
      %1667 = vmatprep.subr.bf16.mxu0 0
      %1668 = vmatpush1.bf16.msra.mxu0 %v1661
      %1669 = vmatprep.subr.bf16.mxu0 0
      %1670 = vmatpush1.bf16.msra.mxu0 %v1665
      %1671 = vmatprep.subr.bf16.mxu0 0
      %1672 = vmatpush1.bf16.msra.mxu0 0
      %1673 = vmatprep.subr.bf16.mxu0 0
      %1674 = vmatpush1.bf16.msra.mxu0 0
      %1675 = vmatprep.subr.bf16.mxu0 0
      %1676 = vmatpush1.bf16.msra.mxu0 0
      %1677 = vmatprep.subr.bf16.mxu0 0
      %1678 = vmatpush1.bf16.msra.mxu0 0
      %1679 = vmatprep.subr.bf16.mxu0 0
      %1680 = vmatpush1.bf16.msra.mxu0 0
      %1681 = vmatprep.subr.bf16.mxu0 0
      %1682 = vmatpush1.bf16.msra.mxu0 0
      %1683 = vmatprep.subr.bf16.mxu0 0
      %1684 = vmatpush1.bf16.msra.mxu0 0
      %1685 = vmatprep.subr.bf16.mxu0 0
      %1686 = vmatpush1.bf16.msra.mxu0 0
      %1687 = vmatprep.subr.bf16.mxu0 0
      %1688 = vmatpush1.bf16.msra.mxu0 0
      %1689 = vmatprep.subr.bf16.mxu0 0
      %1690 = vmatpush1.bf16.msra.mxu0 0
      %1691 = vmatprep.subr.bf16.mxu0 0
      %1692 = vmatpush1.bf16.msra.mxu0 0
      %1693 = vmatprep.subr.bf16.mxu0 0
      %1694 = vmatpush1.bf16.msra.mxu0 0
      %1695 = vmatprep.subr.bf16.mxu0 0
      %1696 = vmatpush1.bf16.msra.mxu0 0
      %1697 = vmatprep.subr.bf16.mxu0 0
      %1698 = vmatpush1.bf16.msra.mxu0 0
      %1699 = vmatprep.mubr.bf16.mxu0 0
      %1700 = vmatmul.mubr.bf16.gmra.mrb[0].mxu0 %v265
      %v1701 = vpop.f32.mrb[0].mxu0
      %v1702 = vadd.f32 %v195, %v1701
      %v1703 = vpop.f32.mrb[0].mxu0
      %v1704 = vpop.f32.mrb[0].mxu0
      %v1705 = vadd.f32 %v200, %v1704
      %v1706 = vpop.f32.mrb[0].mxu0
      %1707 = vmatprep.mubr.bf16.mxu0 0
      %1708 = vmatmul.mubr.bf16.gmra.mrb[0].mxu0 %v268
      %v1709 = vpop.f32.mrb[0].mxu0
      %v1710 = vadd.f32 %v205, %v1709
      %v1711 = vpop.f32.mrb[0].mxu0
      %v1712 = vpop.f32.mrb[0].mxu0
      %v1713 = vadd.f32 %v210, %v1712
      %v1714 = vpop.f32.mrb[0].mxu0
      %1715 = vmatprep.mubr.bf16.mxu0 0
      %1716 = vmatmul.mubr.bf16.gmra.mrb[0].mxu0 %v271
      %v1717 = vpop.f32.mrb[0].mxu0
      %v1718 = vadd.f32 %v215, %v1717
      %v1719 = vpop.f32.mrb[0].mxu0
      %v1720 = vpop.f32.mrb[0].mxu0
      %v1721 = vadd.f32 %v220, %v1720
      %v1722 = vpop.f32.mrb[0].mxu0
      %1723 = vmatprep.mubr.bf16.mxu0 0
      %1724 = vmatmul.mubr.bf16.gmra.mrb[0].mxu0 %v274
      %v1725 = vpop.f32.mrb[0].mxu0
      %v1726 = vadd.f32 %v225, %v1725
      %v1727 = vpop.f32.mrb[0].mxu0
      %v1728 = vpop.f32.mrb[0].mxu0
      %v1729 = vadd.f32 %v230, %v1728
      %v1730 = vpop.f32.mrb[0].mxu0
      %1731 = vdwg.mxu0
      %v1732 = vmax.f32 %v1702, 0.0
      %v1733 = vmax.f32 %v1705, 0.0
      %v1734 = vmax.f32 %v1710, 0.0
      %v1735 = vmax.f32 %v1713, 0.0
      %v1736 = vmax.f32 %v1718, 0.0
      %v1737 = vmax.f32 %v1721, 0.0
      %v1738 = vmax.f32 %v1726, 0.0
      %v1739 = vmax.f32 %v1729, 0.0
      %v1740 = vmax.f32 %v1640, %v1732
      %v1741 = vmax.f32 %v1641, %v1733
      %v1742 = vmax.f32 %v1642, %v1734
      %v1743 = vmax.f32 %v1643, %v1735
      %v1744 = vmax.f32 %v1644, %v1736
      %v1745 = vmax.f32 %v1645, %v1737
      %v1746 = vmax.f32 %v1646, %v1738
      %v1747 = vmax.f32 %v1647, %v1739
      %s1748 = scalar_lea.vmem %s165, 240
      %v1749 = vld [vmem:[%s1748] sm:$0xf]
      %v1750 = vld [vmem:[%s1748 + $0x4] sm:$0xf]
      %v1751 = vld [vmem:[%s1748 + $0x8] sm:$0xf]
      %v1752 = vld [vmem:[%s1748 + $0xc] sm:$0x3]
      %v1757 = vunpack.c.l.b16 %v1749
      %v1758 = vunpack.c.l.b16 %v1750
      %v1759 = vunpack.c.l.b16 %v1751
      %v1760 = vunpack.c.l.b16 %v1752
      %v1761 = vpack.c.b16 %v1758, %v1757
      %v1762 = vpack.c.b16 %v1760, %v1759
      %v1765 = vand.u32 %v1762, %v279
      %1767 = vmatprep.subr.bf16.mxu0 0
      %1768 = vmatpush1.bf16.msra.mxu0 %v1761
      %1769 = vmatprep.subr.bf16.mxu0 0
      %1770 = vmatpush1.bf16.msra.mxu0 %v1765
      %1771 = vmatprep.subr.bf16.mxu0 0
      %1772 = vmatpush1.bf16.msra.mxu0 0
      %1773 = vmatprep.subr.bf16.mxu0 0
      %1774 = vmatpush1.bf16.msra.mxu0 0
      %1775 = vmatprep.subr.bf16.mxu0 0
      %1776 = vmatpush1.bf16.msra.mxu0 0
      %1777 = vmatprep.subr.bf16.mxu0 0
      %1778 = vmatpush1.bf16.msra.mxu0 0
      %1779 = vmatprep.subr.bf16.mxu0 0
      %1780 = vmatpush1.bf16.msra.mxu0 0
      %1781 = vmatprep.subr.bf16.mxu0 0
      %1782 = vmatpush1.bf16.msra.mxu0 0
      %1783 = vmatprep.subr.bf16.mxu0 0
      %1784 = vmatpush1.bf16.msra.mxu0 0
      %1785 = vmatprep.subr.bf16.mxu0 0
      %1786 = vmatpush1.bf16.msra.mxu0 0
      %1787 = vmatprep.subr.bf16.mxu0 0
      %1788 = vmatpush1.bf16.msra.mxu0 0
      %1789 = vmatprep.subr.bf16.mxu0 0
      %1790 = vmatpush1.bf16.msra.mxu0 0
      %1791 = vmatprep.subr.bf16.mxu0 0
      %1792 = vmatpush1.bf16.msra.mxu0 0
      %1793 = vmatprep.subr.bf16.mxu0 0
      %1794 = vmatpush1.bf16.msra.mxu0 0
      %1795 = vmatprep.subr.bf16.mxu0 0
      %1796 = vmatpush1.bf16.msra.mxu0 0
      %1797 = vmatprep.subr.bf16.mxu0 0
      %1798 = vmatpush1.bf16.msra.mxu0 0
      %1799 = vmatprep.mubr.bf16.mxu0 0
      %1800 = vmatmul.mubr.bf16.gmra.mrb[0].mxu0 %v265
      %v1801 = vpop.f32.mrb[0].mxu0
      %v1802 = vadd.f32 %v195, %v1801
      %v1803 = vpop.f32.mrb[0].mxu0
      %v1804 = vpop.f32.mrb[0].mxu0
      %v1805 = vadd.f32 %v200, %v1804
      %v1806 = vpop.f32.mrb[0].mxu0
      %1807 = vmatprep.mubr.bf16.mxu0 0
      %1808 = vmatmul.mubr.bf16.gmra.mrb[0].mxu0 %v268
      %v1809 = vpop.f32.mrb[0].mxu0
      %v1810 = vadd.f32 %v205, %v1809
      %v1811 = vpop.f32.mrb[0].mxu0
      %v1812 = vpop.f32.mrb[0].mxu0
      %v1813 = vadd.f32 %v210, %v1812
      %v1814 = vpop.f32.mrb[0].mxu0
      %1815 = vmatprep.mubr.bf16.mxu0 0
      %1816 = vmatmul.mubr.bf16.gmra.mrb[0].mxu0 %v271
      %v1817 = vpop.f32.mrb[0].mxu0
      %v1818 = vadd.f32 %v215, %v1817
      %v1819 = vpop.f32.mrb[0].mxu0
      %v1820 = vpop.f32.mrb[0].mxu0
      %v1821 = vadd.f32 %v220, %v1820
      %v1822 = vpop.f32.mrb[0].mxu0
      %1823 = vmatprep.mubr.bf16.mxu0 0
      %1824 = vmatmul.mubr.bf16.gmra.mrb[0].mxu0 %v274
      %v1825 = vpop.f32.mrb[0].mxu0
      %v1826 = vadd.f32 %v225, %v1825
      %v1827 = vpop.f32.mrb[0].mxu0
      %v1828 = vpop.f32.mrb[0].mxu0
      %v1829 = vadd.f32 %v230, %v1828
      %v1830 = vpop.f32.mrb[0].mxu0
      %1831 = vdwg.mxu0
      %v1832 = vmax.f32 %v1802, 0.0
      %v1833 = vmax.f32 %v1805, 0.0
      %v1834 = vmax.f32 %v1810, 0.0
      %v1835 = vmax.f32 %v1813, 0.0
      %v1836 = vmax.f32 %v1818, 0.0
      %v1837 = vmax.f32 %v1821, 0.0
      %v1838 = vmax.f32 %v1826, 0.0
      %v1839 = vmax.f32 %v1829, 0.0
      %v1840 = vmax.f32 %v1740, %v1832
      %v1841 = vmax.f32 %v1741, %v1833
      %v1842 = vmax.f32 %v1742, %v1834
      %v1843 = vmax.f32 %v1743, %v1835
      %v1844 = vmax.f32 %v1744, %v1836
      %v1845 = vmax.f32 %v1745, %v1837
      %v1846 = vmax.f32 %v1746, %v1838
      %v1847 = vmax.f32 %v1747, %v1839
      %v1848 = vadd.f32 %v1448, %v1840
      %v1849 = vadd.f32 %v1449, %v1841
      %v1850 = vadd.f32 %v1450, %v1842
      %v1851 = vadd.f32 %v1451, %v1843
      %v1852 = vadd.f32 %v1452, %v1844
      %v1853 = vadd.f32 %v1453, %v1845
      %v1854 = vadd.f32 %v1454, %v1846
      %v1855 = vadd.f32 %v1455, %v1847
      %v1856 = vmul.f32 %v1848, 0.25
      %v1857 = vmul.f32 %v1849, 0.25
      %v1858 = vmul.f32 %v1850, 0.25
      %v1859 = vmul.f32 %v1851, 0.25
      %v1860 = vmul.f32 %v1852, 0.25
      %v1861 = vmul.f32 %v1853, 0.25
      %v1862 = vmul.f32 %v1854, 0.25
      %v1863 = vmul.f32 %v1855, 0.25
      %vm1864 = vcmask 400384
      %1865 = vst.msk [vmem:[%s170] sm:$0xff] %vm1864, %v1856
      %1866 = vst.msk [vmem:[%s170 + $0x8] sm:$0xff] %vm1864, %v1857
      %1867 = vst.msk [vmem:[%s170 + $0x10] sm:$0xff] %vm1864, %v1858
      %1868 = vst.msk [vmem:[%s170 + $0x18] sm:$0xff] %vm1864, %v1859
      %1869 = vst.msk [vmem:[%s170 + $0x20] sm:$0xff] %vm1864, %v1860
      %1870 = vst.msk [vmem:[%s170 + $0x28] sm:$0xff] %vm1864, %v1861
      %1871 = vst.msk [vmem:[%s170 + $0x30] sm:$0xff] %vm1864, %v1862
      %1872 = vst.msk [vmem:[%s170 + $0x38] sm:$0xff] %vm1864, %v1863
      %p1873 = scmp.lt.s32.totalorder %s14, 1
      %s1874 = scalar_select %p1873, %s14, 1
      %s1875 = smul.addr %s1874, 8
      %s1876 = smul.addr %s1875, 8
      %s1877 = scalar_lea.vmem %s3, %s1876
      // Predicated region
      $region33: #{vgg_forward.2} parent=31 // pred_check
        %p1878 = pneg %p100
      $region34: #{vgg_forward.2} parent=31 // pred_check_branch
        %1880 = sbr.rel (%p1878) target = $region36
      $region35: #{vgg_forward.2} parent=31 // pred_region
        _
      $region36: #{vgg_forward.2} parent=31 // pred_fallthru
        _
    $region32: #{vgg_forward.2} parent=5 // pred_fallthru
      _
    %p1881 = scmp.le.s32.totalorder 2, %s9
    // Predicated region
    $region37: #{vgg_forward.2} parent=5 // pred_check
      %p1882 = pneg %p1881
    $region38: #{vgg_forward.2} parent=5 // pred_check_branch
      %1884 = sbr.rel (%p1882) target = $region40
    $region39: #{vgg_forward.2} parent=5 // pred_region
      %s1885 = ssub.s32 %s9, 2
      // Predicated region
      $region41: #{vgg_forward.2} parent=39 // pred_check
        %p1886 = pneg %p106
      $region42: #{vgg_forward.2} parent=39 // pred_check_branch
        %1888 = sbr.rel (%p1886) target = $region44
      $region43: #{vgg_forward.2} parent=39 // pred_region
        %p1889 = scmp.lt.s32.totalorder %s15, 1
        %s1890 = scalar_select %p1889, %s15, 1
        %s1891 = smul.addr %s1890, 8
        %s1892 = smul.addr %s1891, 8
        %s1893 = scalar_lea.vmem %s3, %s1892
      $region44: #{vgg_forward.2} parent=39 // pred_fallthru
        _
    $region40: #{vgg_forward.2} parent=5 // pred_fallthru
      _
  $region6: #{vgg_forward.2} parent=0 // loop_footer
    %s13 = sadd.s32 1, %s9
  $region7: #{vgg_forward.2} parent=0 // loop_footer_branch
    %8 = sbr.rel target = $region3
  $region8: #{vgg_forward.2} parent=0 // loop_exit
    _

// kernel: vgg_forward.3
$region0: #{vgg_forward.3}
  #allocation0 [shape = 'u32[]', space=smem, size = 0x4, offset = 0x4, fixed_abs, tag = 'smem constant byte address 0x4 - core index']
  #allocation1 [shape = 'u32[144,128]{1,0:T(1,128)}', space=vmem, size = 0x12000, scoped, tag = 'internal scratch']
  %s0 = inlined_call_operand.vmem [shape: f32[2,3136], index: 0, kind: input, shape index: {}]
  %s1 = inlined_call_operand.vmem [shape: f32[3136,32], index: 1, kind: input, shape index: {}]
  %s2 = inlined_call_operand.vmem [shape: f32[1,32], index: 2, kind: input, shape index: {}]
  %s3 = inlined_call_operand.vmem [shape: f32[32,10], index: 3, kind: input, shape index: {}]
  %s4 = inlined_call_operand.vmem [shape: f32[1,10], index: 4, kind: input, shape index: {}]
  %s5 = inlined_call_operand.hbm [shape: f32[2,10], index: 5, kind: output, shape index: {}]
  %s6 = sld [smem:[#allocation0]]
  $region30: #{vgg_forward.3} parent=0
    _
  %s8 = ssub.s32 1, %s6
  %s9 = scalar_select 0, %s8, %s6
  $region1: #{vgg_forward.3} parent=0
    #allocation2 [shape = 'u8[1024]{0}', space=vmem, size = 0x400, scoped, tag = 'output window, operand 0, single buffered']
    #allocation3 [shape = 's32[1]{0}', space=sflag, size = 0x4, scoped, tag = 'scoped memory for vgg_forward.3']
    %10 = vsyncpa [#allocation3], 0
    // Predicated region
    $region2: #{vgg_forward.3} parent=1 // pred_check
      _
    $region3: #{vgg_forward.3} parent=1 // pred_check_branch
      %12 = sbr.rel (0) target = $region5
    $region4: #{vgg_forward.3} parent=1 // pred_region
      _
    $region5: #{vgg_forward.3} parent=1 // pred_fallthru
      _
    // Predicated region
    $region6: #{vgg_forward.3} parent=1 // pred_check
      _
    $region7: #{vgg_forward.3} parent=1 // pred_check_branch
      %14 = sbr.rel (0) target = $region9
    $region8: #{vgg_forward.3} parent=1 // pred_region
      _
    $region9: #{vgg_forward.3} parent=1 // pred_fallthru
      _
    // Predicated region
    $region10: #{vgg_forward.3} parent=1 // pred_check
      _
    $region11: #{vgg_forward.3} parent=1 // pred_check_branch
      %16 = sbr.rel (0) target = $region13
    $region12: #{vgg_forward.3} parent=1 // pred_region
      _
    $region13: #{vgg_forward.3} parent=1 // pred_fallthru
      _
    // Predicated region
    $region14: #{vgg_forward.3} parent=1 // pred_check
      _
    $region15: #{vgg_forward.3} parent=1 // pred_check_branch
      %18 = sbr.rel (0) target = $region17
    $region16: #{vgg_forward.3} parent=1 // pred_region
      _
    $region17: #{vgg_forward.3} parent=1 // pred_fallthru
      _
    // Predicated region
    $region18: #{vgg_forward.3} parent=1 // pred_check
      _
    $region19: #{vgg_forward.3} parent=1 // pred_check_branch
      %20 = sbr.rel (0) target = $region21
    $region20: #{vgg_forward.3} parent=1 // pred_region
      _
    $region21: #{vgg_forward.3} parent=1 // pred_fallthru
      _
    %v21 = vld [vmem:[%s0] sm:$0xff]
    %v22 = vld [vmem:[%s0 + $0x8] sm:$0xff]
    %v23 = vld [vmem:[%s0 + $0x10] sm:$0xff]
    %v24 = vld [vmem:[%s0 + $0x18] sm:$0xff]
    %v25 = vld [vmem:[%s0 + $0x20] sm:$0xff]
    %v26 = vld [vmem:[%s0 + $0x28] sm:$0xff]
    %v27 = vld [vmem:[%s0 + $0x30] sm:$0x3]
    %v28 = vld [vmem:[%s1] sm:$0xff]
    %v29 = vld [vmem:[%s1 + $0x8] sm:$0xff]
    %v30 = vld [vmem:[%s1 + $0x10] sm:$0xff]
    %v31 = vld [vmem:[%s1 + $0x18] sm:$0xff]
    %v32 = vld [vmem:[%s1 + $0x20] sm:$0xff]
    %v33 = vld [vmem:[%s1 + $0x28] sm:$0xff]
    %v34 = vld [vmem:[%s1 + $0x30] sm:$0xff]
    %v35 = vld [vmem:[%s1 + $0x38] sm:$0xff]
    %v36 = vld [vmem:[%s1 + $0x40] sm:$0xff]
    %v37 = vld [vmem:[%s1 + $0x48] sm:$0xff]
    %v38 = vld [vmem:[%s1 + $0x50] sm:$0xff]
    %v39 = vld [vmem:[%s1 + $0x58] sm:$0xff]
    %v40 = vld [vmem:[%s1 + $0x60] sm:$0xff]
    %v41 = vld [vmem:[%s1 + $0x68] sm:$0xff]
    %v42 = vld [vmem:[%s1 + $0x70] sm:$0xff]
    %v43 = vld [vmem:[%s1 + $0x78] sm:$0xff]
    %v44 = vld [vmem:[%s1 + $0x80] sm:$0xff]
    %v45 = vld [vmem:[%s1 + $0x88] sm:$0xff]
    %v46 = vld [vmem:[%s1 + $0x90] sm:$0xff]
    %v47 = vld [vmem:[%s1 + $0x98] sm:$0xff]
    %v48 = vld [vmem:[%s1 + $0xa0] sm:$0xff]
    %v49 = vld [vmem:[%s1 + $0xa8] sm:$0xff]
    %v50 = vld [vmem:[%s1 + $0xb0] sm:$0xff]
    %v51 = vld [vmem:[%s1 + $0xb8] sm:$0xff]
    %v52 = vld [vmem:[%s1 + $0xc0] sm:$0xff]
    %v53 = vld [vmem:[%s1 + $0xc8] sm:$0xff]
    %v54 = vld [vmem:[%s1 + $0xd0] sm:$0xff]
    %v55 = vld [vmem:[%s1 + $0xd8] sm:$0xff]
    %v56 = vld [vmem:[%s1 + $0xe0] sm:$0xff]
    %v57 = vld [vmem:[%s1 + $0xe8] sm:$0xff]
    %v58 = vld [vmem:[%s1 + $0xf0] sm:$0xff]
    %v59 = vld [vmem:[%s1 + $0xf8] sm:$0xff]
    %v60 = vld [vmem:[%s1 + $0x100] sm:$0xff]
    %v61 = vld [vmem:[%s1 + $0x108] sm:$0xff]
    %v62 = vld [vmem:[%s1 + $0x110] sm:$0xff]
    %v63 = vld [vmem:[%s1 + $0x118] sm:$0xff]
    %v64 = vld [vmem:[%s1 + $0x120] sm:$0xff]
    %v65 = vld [vmem:[%s1 + $0x128] sm:$0xff]
    %v66 = vld [vmem:[%s1 + $0x130] sm:$0xff]
    %v67 = vld [vmem:[%s1 + $0x138] sm:$0xff]
    %v68 = vld [vmem:[%s1 + $0x140] sm:$0xff]
    %v69 = vld [vmem:[%s1 + $0x148] sm:$0xff]
    %v70 = vld [vmem:[%s1 + $0x150] sm:$0xff]
    %v71 = vld [vmem:[%s1 + $0x158] sm:$0xff]
    %v72 = vld [vmem:[%s1 + $0x160] sm:$0xff]
    %v73 = vld [vmem:[%s1 + $0x168] sm:$0xff]
    %v74 = vld [vmem:[%s1 + $0x170] sm:$0xff]
    %v75 = vld [vmem:[%s1 + $0x178] sm:$0xff]
    %v76 = vld [vmem:[%s1 + $0x180] sm:$0xff]
    %v77 = vld [vmem:[%s1 + $0x188] sm:$0xff]
    %v78 = vld [vmem:[%s1 + $0x190] sm:$0xff]
    %v79 = vld [vmem:[%s1 + $0x198] sm:$0xff]
    %v80 = vld [vmem:[%s1 + $0x1a0] sm:$0xff]
    %v81 = vld [vmem:[%s1 + $0x1a8] sm:$0xff]
    %v82 = vld [vmem:[%s1 + $0x1b0] sm:$0xff]
    %v83 = vld [vmem:[%s1 + $0x1b8] sm:$0xff]
    %v84 = vld [vmem:[%s1 + $0x1c0] sm:$0xff]
    %v85 = vld [vmem:[%s1 + $0x1c8] sm:$0xff]
    %v86 = vld [vmem:[%s1 + $0x1d0] sm:$0xff]
    %v87 = vld [vmem:[%s1 + $0x1d8] sm:$0xff]
    %v88 = vld [vmem:[%s1 + $0x1e0] sm:$0xff]
    %v89 = vld [vmem:[%s1 + $0x1e8] sm:$0xff]
    %v90 = vld [vmem:[%s1 + $0x1f0] sm:$0xff]
    %v91 = vld [vmem:[%s1 + $0x1f8] sm:$0xff]
    %v92 = vld [vmem:[%s1 + $0x200] sm:$0xff]
    %v93 = vld [vmem:[%s1 + $0x208] sm:$0xff]
    %v94 = vld [vmem:[%s1 + $0x210] sm:$0xff]
    %v95 = vld [vmem:[%s1 + $0x218] sm:$0xff]
    %v96 = vld [vmem:[%s1 + $0x220] sm:$0xff]
    %v97 = vld [vmem:[%s1 + $0x228] sm:$0xff]
    %v98 = vld [vmem:[%s1 + $0x230] sm:$0xff]
    %v99 = vld [vmem:[%s1 + $0x238] sm:$0xff]
    %v100 = vld [vmem:[%s1 + $0x240] sm:$0xff]
    %v101 = vld [vmem:[%s1 + $0x248] sm:$0xff]
    %v102 = vld [vmem:[%s1 + $0x250] sm:$0xff]
    %v103 = vld [vmem:[%s1 + $0x258] sm:$0xff]
    %v104 = vld [vmem:[%s1 + $0x260] sm:$0xff]
    %v105 = vld [vmem:[%s1 + $0x268] sm:$0xff]
    %v106 = vld [vmem:[%s1 + $0x270] sm:$0xff]
    %v107 = vld [vmem:[%s1 + $0x278] sm:$0xff]
    %v108 = vld [vmem:[%s1 + $0x280] sm:$0xff]
    %v109 = vld [vmem:[%s1 + $0x288] sm:$0xff]
    %v110 = vld [vmem:[%s1 + $0x290] sm:$0xff]
    %v111 = vld [vmem:[%s1 + $0x298] sm:$0xff]
    %v112 = vld [vmem:[%s1 + $0x2a0] sm:$0xff]
    %v113 = vld [vmem:[%s1 + $0x2a8] sm:$0xff]
    %v114 = vld [vmem:[%s1 + $0x2b0] sm:$0xff]
    %v115 = vld [vmem:[%s1 + $0x2b8] sm:$0xff]
    %v116 = vld [vmem:[%s1 + $0x2c0] sm:$0xff]
    %v117 = vld [vmem:[%s1 + $0x2c8] sm:$0xff]
    %v118 = vld [vmem:[%s1 + $0x2d0] sm:$0xff]
    %v119 = vld [vmem:[%s1 + $0x2d8] sm:$0xff]
    %v120 = vld [vmem:[%s1 + $0x2e0] sm:$0xff]
    %v121 = vld [vmem:[%s1 + $0x2e8] sm:$0xff]
    %v122 = vld [vmem:[%s1 + $0x2f0] sm:$0xff]
    %v123 = vld [vmem:[%s1 + $0x2f8] sm:$0xff]
    %v124 = vld [vmem:[%s1 + $0x300] sm:$0xff]
    %v125 = vld [vmem:[%s1 + $0x308] sm:$0xff]
    %v126 = vld [vmem:[%s1 + $0x310] sm:$0xff]
    %v127 = vld [vmem:[%s1 + $0x318] sm:$0xff]
    %v128 = vld [vmem:[%s1 + $0x320] sm:$0xff]
    %v129 = vld [vmem:[%s1 + $0x328] sm:$0xff]
    %v130 = vld [vmem:[%s1 + $0x330] sm:$0xff]
    %v131 = vld [vmem:[%s1 + $0x338] sm:$0xff]
    %v132 = vld [vmem:[%s1 + $0x340] sm:$0xff]
    %v133 = vld [vmem:[%s1 + $0x348] sm:$0xff]
    %v134 = vld [vmem:[%s1 + $0x350] sm:$0xff]
    %v135 = vld [vmem:[%s1 + $0x358] sm:$0xff]
    %v136 = vld [vmem:[%s1 + $0x360] sm:$0xff]
    %v137 = vld [vmem:[%s1 + $0x368] sm:$0xff]
    %v138 = vld [vmem:[%s1 + $0x370] sm:$0xff]
    %v139 = vld [vmem:[%s1 + $0x378] sm:$0xff]
    %v140 = vld [vmem:[%s1 + $0x380] sm:$0xff]
    %v141 = vld [vmem:[%s1 + $0x388] sm:$0xff]
    %v142 = vld [vmem:[%s1 + $0x390] sm:$0xff]
    %v143 = vld [vmem:[%s1 + $0x398] sm:$0xff]
    %v144 = vld [vmem:[%s1 + $0x3a0] sm:$0xff]
    %v145 = vld [vmem:[%s1 + $0x3a8] sm:$0xff]
    %v146 = vld [vmem:[%s1 + $0x3b0] sm:$0xff]
    %v147 = vld [vmem:[%s1 + $0x3b8] sm:$0xff]
    %v148 = vld [vmem:[%s1 + $0x3c0] sm:$0xff]
    %v149 = vld [vmem:[%s1 + $0x3c8] sm:$0xff]
    %v150 = vld [vmem:[%s1 + $0x3d0] sm:$0xff]
    %v151 = vld [vmem:[%s1 + $0x3d8] sm:$0xff]
    %v152 = vld [vmem:[%s1 + $0x3e0] sm:$0xff]
    %v153 = vld [vmem:[%s1 + $0x3e8] sm:$0xff]
    %v154 = vld [vmem:[%s1 + $0x3f0] sm:$0xff]
    %v155 = vld [vmem:[%s1 + $0x3f8] sm:$0xff]
    %v156 = vld [vmem:[%s1 + $0x400] sm:$0xff]
    %v157 = vld [vmem:[%s1 + $0x408] sm:$0xff]
    %v158 = vld [vmem:[%s1 + $0x410] sm:$0xff]
    %v159 = vld [vmem:[%s1 + $0x418] sm:$0xff]
    %v160 = vld [vmem:[%s1 + $0x420] sm:$0xff]
    %v161 = vld [vmem:[%s1 + $0x428] sm:$0xff]
    %v162 = vld [vmem:[%s1 + $0x430] sm:$0xff]
    %v163 = vld [vmem:[%s1 + $0x438] sm:$0xff]
    %v164 = vld [vmem:[%s1 + $0x440] sm:$0xff]
    %v165 = vld [vmem:[%s1 + $0x448] sm:$0xff]
    %v166 = vld [vmem:[%s1 + $0x450] sm:$0xff]
    %v167 = vld [vmem:[%s1 + $0x458] sm:$0xff]
    %v168 = vld [vmem:[%s1 + $0x460] sm:$0xff]
    %v169 = vld [vmem:[%s1 + $0x468] sm:$0xff]
    %v170 = vld [vmem:[%s1 + $0x470] sm:$0xff]
    %v171 = vld [vmem:[%s1 + $0x478] sm:$0xff]
    %v172 = vld [vmem:[%s1 + $0x480] sm:$0xff]
    %v173 = vld [vmem:[%s1 + $0x488] sm:$0xff]
    %v174 = vld [vmem:[%s1 + $0x490] sm:$0xff]
    %v175 = vld [vmem:[%s1 + $0x498] sm:$0xff]
    %v176 = vld [vmem:[%s1 + $0x4a0] sm:$0xff]
    %v177 = vld [vmem:[%s1 + $0x4a8] sm:$0xff]
    %v178 = vld [vmem:[%s1 + $0x4b0] sm:$0xff]
    %v179 = vld [vmem:[%s1 + $0x4b8] sm:$0xff]
    %v180 = vld [vmem:[%s1 + $0x4c0] sm:$0xff]
    %v181 = vld [vmem:[%s1 + $0x4c8] sm:$0xff]
    %v182 = vld [vmem:[%s1 + $0x4d0] sm:$0xff]
    %v183 = vld [vmem:[%s1 + $0x4d8] sm:$0xff]
    %v184 = vld [vmem:[%s1 + $0x4e0] sm:$0xff]
    %v185 = vld [vmem:[%s1 + $0x4e8] sm:$0xff]
    %v186 = vld [vmem:[%s1 + $0x4f0] sm:$0xff]
    %v187 = vld [vmem:[%s1 + $0x4f8] sm:$0xff]
    %v188 = vld [vmem:[%s1 + $0x500] sm:$0xff]
    %v189 = vld [vmem:[%s1 + $0x508] sm:$0xff]
    %v190 = vld [vmem:[%s1 + $0x510] sm:$0xff]
    %v191 = vld [vmem:[%s1 + $0x518] sm:$0xff]
    %v192 = vld [vmem:[%s1 + $0x520] sm:$0xff]
    %v193 = vld [vmem:[%s1 + $0x528] sm:$0xff]
    %v194 = vld [vmem:[%s1 + $0x530] sm:$0xff]
    %v195 = vld [vmem:[%s1 + $0x538] sm:$0xff]
    %v196 = vld [vmem:[%s1 + $0x540] sm:$0xff]
    %v197 = vld [vmem:[%s1 + $0x548] sm:$0xff]
    %v198 = vld [vmem:[%s1 + $0x550] sm:$0xff]
    %v199 = vld [vmem:[%s1 + $0x558] sm:$0xff]
    %v200 = vld [vmem:[%s1 + $0x560] sm:$0xff]
    %v201 = vld [vmem:[%s1 + $0x568] sm:$0xff]
    %v202 = vld [vmem:[%s1 + $0x570] sm:$0xff]
    %v203 = vld [vmem:[%s1 + $0x578] sm:$0xff]
    %v204 = vld [vmem:[%s1 + $0x580] sm:$0xff]
    %v205 = vld [vmem:[%s1 + $0x588] sm:$0xff]
    %v206 = vld [vmem:[%s1 + $0x590] sm:$0xff]
    %v207 = vld [vmem:[%s1 + $0x598] sm:$0xff]
    %v208 = vld [vmem:[%s1 + $0x5a0] sm:$0xff]
    %v209 = vld [vmem:[%s1 + $0x5a8] sm:$0xff]
    %v210 = vld [vmem:[%s1 + $0x5b0] sm:$0xff]
    %v211 = vld [vmem:[%s1 + $0x5b8] sm:$0xff]
    %v212 = vld [vmem:[%s1 + $0x5c0] sm:$0xff]
    %v213 = vld [vmem:[%s1 + $0x5c8] sm:$0xff]
    %v214 = vld [vmem:[%s1 + $0x5d0] sm:$0xff]
    %v215 = vld [vmem:[%s1 + $0x5d8] sm:$0xff]
    %v216 = vld [vmem:[%s1 + $0x5e0] sm:$0xff]
    %v217 = vld [vmem:[%s1 + $0x5e8] sm:$0xff]
    %v218 = vld [vmem:[%s1 + $0x5f0] sm:$0xff]
    %v219 = vld [vmem:[%s1 + $0x5f8] sm:$0xff]
    %v220 = vld [vmem:[%s1 + $0x600] sm:$0xff]
    %v221 = vld [vmem:[%s1 + $0x608] sm:$0xff]
    %v222 = vld [vmem:[%s1 + $0x610] sm:$0xff]
    %v223 = vld [vmem:[%s1 + $0x618] sm:$0xff]
    %v224 = vld [vmem:[%s1 + $0x620] sm:$0xff]
    %v225 = vld [vmem:[%s1 + $0x628] sm:$0xff]
    %v226 = vld [vmem:[%s1 + $0x630] sm:$0xff]
    %v227 = vld [vmem:[%s1 + $0x638] sm:$0xff]
    %v228 = vld [vmem:[%s1 + $0x640] sm:$0xff]
    %v229 = vld [vmem:[%s1 + $0x648] sm:$0xff]
    %v230 = vld [vmem:[%s1 + $0x650] sm:$0xff]
    %v231 = vld [vmem:[%s1 + $0x658] sm:$0xff]
    %v232 = vld [vmem:[%s1 + $0x660] sm:$0xff]
    %v233 = vld [vmem:[%s1 + $0x668] sm:$0xff]
    %v234 = vld [vmem:[%s1 + $0x670] sm:$0xff]
    %v235 = vld [vmem:[%s1 + $0x678] sm:$0xff]
    %v236 = vld [vmem:[%s1 + $0x680] sm:$0xff]
    %v237 = vld [vmem:[%s1 + $0x688] sm:$0xff]
    %v238 = vld [vmem:[%s1 + $0x690] sm:$0xff]
    %v239 = vld [vmem:[%s1 + $0x698] sm:$0xff]
    %v240 = vld [vmem:[%s1 + $0x6a0] sm:$0xff]
    %v241 = vld [vmem:[%s1 + $0x6a8] sm:$0xff]
    %v242 = vld [vmem:[%s1 + $0x6b0] sm:$0xff]
    %v243 = vld [vmem:[%s1 + $0x6b8] sm:$0xff]
    %v244 = vld [vmem:[%s1 + $0x6c0] sm:$0xff]
    %v245 = vld [vmem:[%s1 + $0x6c8] sm:$0xff]
    %v246 = vld [vmem:[%s1 + $0x6d0] sm:$0xff]
    %v247 = vld [vmem:[%s1 + $0x6d8] sm:$0xff]
    %v248 = vld [vmem:[%s1 + $0x6e0] sm:$0xff]
    %v249 = vld [vmem:[%s1 + $0x6e8] sm:$0xff]
    %v250 = vld [vmem:[%s1 + $0x6f0] sm:$0xff]
    %v251 = vld [vmem:[%s1 + $0x6f8] sm:$0xff]
    %v252 = vld [vmem:[%s1 + $0x700] sm:$0xff]
    %v253 = vld [vmem:[%s1 + $0x708] sm:$0xff]
    %v254 = vld [vmem:[%s1 + $0x710] sm:$0xff]
    %v255 = vld [vmem:[%s1 + $0x718] sm:$0xff]
    %v256 = vld [vmem:[%s1 + $0x720] sm:$0xff]
    %v257 = vld [vmem:[%s1 + $0x728] sm:$0xff]
    %v258 = vld [vmem:[%s1 + $0x730] sm:$0xff]
    %v259 = vld [vmem:[%s1 + $0x738] sm:$0xff]
    %v260 = vld [vmem:[%s1 + $0x740] sm:$0xff]
    %v261 = vld [vmem:[%s1 + $0x748] sm:$0xff]
    %v262 = vld [vmem:[%s1 + $0x750] sm:$0xff]
    %v263 = vld [vmem:[%s1 + $0x758] sm:$0xff]
    %v264 = vld [vmem:[%s1 + $0x760] sm:$0xff]
    %v265 = vld [vmem:[%s1 + $0x768] sm:$0xff]
    %v266 = vld [vmem:[%s1 + $0x770] sm:$0xff]
    %v267 = vld [vmem:[%s1 + $0x778] sm:$0xff]
    %v268 = vld [vmem:[%s1 + $0x780] sm:$0xff]
    %v269 = vld [vmem:[%s1 + $0x788] sm:$0xff]
    %v270 = vld [vmem:[%s1 + $0x790] sm:$0xff]
    %v271 = vld [vmem:[%s1 + $0x798] sm:$0xff]
    %v272 = vld [vmem:[%s1 + $0x7a0] sm:$0xff]
    %v273 = vld [vmem:[%s1 + $0x7a8] sm:$0xff]
    %v274 = vld [vmem:[%s1 + $0x7b0] sm:$0xff]
    %v275 = vld [vmem:[%s1 + $0x7b8] sm:$0xff]
    %v276 = vld [vmem:[%s1 + $0x7c0] sm:$0xff]
    %v277 = vld [vmem:[%s1 + $0x7c8] sm:$0xff]
    %v278 = vld [vmem:[%s1 + $0x7d0] sm:$0xff]
    %v279 = vld [vmem:[%s1 + $0x7d8] sm:$0xff]
    %v280 = vld [vmem:[%s1 + $0x7e0] sm:$0xff]
    %v281 = vld [vmem:[%s1 + $0x7e8] sm:$0xff]
    %v282 = vld [vmem:[%s1 + $0x7f0] sm:$0xff]
    %v283 = vld [vmem:[%s1 + $0x7f8] sm:$0xff]
    %v284 = vld [vmem:[%s1 + $0x800] sm:$0xff]
    %v285 = vld [vmem:[%s1 + $0x808] sm:$0xff]
    %v286 = vld [vmem:[%s1 + $0x810] sm:$0xff]
    %v287 = vld [vmem:[%s1 + $0x818] sm:$0xff]
    %v288 = vld [vmem:[%s1 + $0x820] sm:$0xff]
    %v289 = vld [vmem:[%s1 + $0x828] sm:$0xff]
    %v290 = vld [vmem:[%s1 + $0x830] sm:$0xff]
    %v291 = vld [vmem:[%s1 + $0x838] sm:$0xff]
    %v292 = vld [vmem:[%s1 + $0x840] sm:$0xff]
    %v293 = vld [vmem:[%s1 + $0x848] sm:$0xff]
    %v294 = vld [vmem:[%s1 + $0x850] sm:$0xff]
    %v295 = vld [vmem:[%s1 + $0x858] sm:$0xff]
    %v296 = vld [vmem:[%s1 + $0x860] sm:$0xff]
    %v297 = vld [vmem:[%s1 + $0x868] sm:$0xff]
    %v298 = vld [vmem:[%s1 + $0x870] sm:$0xff]
    %v299 = vld [vmem:[%s1 + $0x878] sm:$0xff]
    %v300 = vld [vmem:[%s1 + $0x880] sm:$0xff]
    %v301 = vld [vmem:[%s1 + $0x888] sm:$0xff]
    %v302 = vld [vmem:[%s1 + $0x890] sm:$0xff]
    %v303 = vld [vmem:[%s1 + $0x898] sm:$0xff]
    %v304 = vld [vmem:[%s1 + $0x8a0] sm:$0xff]
    %v305 = vld [vmem:[%s1 + $0x8a8] sm:$0xff]
    %v306 = vld [vmem:[%s1 + $0x8b0] sm:$0xff]
    %v307 = vld [vmem:[%s1 + $0x8b8] sm:$0xff]
    %v308 = vld [vmem:[%s1 + $0x8c0] sm:$0xff]
    %v309 = vld [vmem:[%s1 + $0x8c8] sm:$0xff]
    %v310 = vld [vmem:[%s1 + $0x8d0] sm:$0xff]
    %v311 = vld [vmem:[%s1 + $0x8d8] sm:$0xff]
    %v312 = vld [vmem:[%s1 + $0x8e0] sm:$0xff]
    %v313 = vld [vmem:[%s1 + $0x8e8] sm:$0xff]
    %v314 = vld [vmem:[%s1 + $0x8f0] sm:$0xff]
    %v315 = vld [vmem:[%s1 + $0x8f8] sm:$0xff]
    %v316 = vld [vmem:[%s1 + $0x900] sm:$0xff]
    %v317 = vld [vmem:[%s1 + $0x908] sm:$0xff]
    %v318 = vld [vmem:[%s1 + $0x910] sm:$0xff]
    %v319 = vld [vmem:[%s1 + $0x918] sm:$0xff]
    %v320 = vld [vmem:[%s1 + $0x920] sm:$0xff]
    %v321 = vld [vmem:[%s1 + $0x928] sm:$0xff]
    %v322 = vld [vmem:[%s1 + $0x930] sm:$0xff]
    %v323 = vld [vmem:[%s1 + $0x938] sm:$0xff]
    %v324 = vld [vmem:[%s1 + $0x940] sm:$0xff]
    %v325 = vld [vmem:[%s1 + $0x948] sm:$0xff]
    %v326 = vld [vmem:[%s1 + $0x950] sm:$0xff]
    %v327 = vld [vmem:[%s1 + $0x958] sm:$0xff]
    %v328 = vld [vmem:[%s1 + $0x960] sm:$0xff]
    %v329 = vld [vmem:[%s1 + $0x968] sm:$0xff]
    %v330 = vld [vmem:[%s1 + $0x970] sm:$0xff]
    %v331 = vld [vmem:[%s1 + $0x978] sm:$0xff]
    %v332 = vld [vmem:[%s1 + $0x980] sm:$0xff]
    %v333 = vld [vmem:[%s1 + $0x988] sm:$0xff]
    %v334 = vld [vmem:[%s1 + $0x990] sm:$0xff]
    %v335 = vld [vmem:[%s1 + $0x998] sm:$0xff]
    %v336 = vld [vmem:[%s1 + $0x9a0] sm:$0xff]
    %v337 = vld [vmem:[%s1 + $0x9a8] sm:$0xff]
    %v338 = vld [vmem:[%s1 + $0x9b0] sm:$0xff]
    %v339 = vld [vmem:[%s1 + $0x9b8] sm:$0xff]
    %v340 = vld [vmem:[%s1 + $0x9c0] sm:$0xff]
    %v341 = vld [vmem:[%s1 + $0x9c8] sm:$0xff]
    %v342 = vld [vmem:[%s1 + $0x9d0] sm:$0xff]
    %v343 = vld [vmem:[%s1 + $0x9d8] sm:$0xff]
    %v344 = vld [vmem:[%s1 + $0x9e0] sm:$0xff]
    %v345 = vld [vmem:[%s1 + $0x9e8] sm:$0xff]
    %v346 = vld [vmem:[%s1 + $0x9f0] sm:$0xff]
    %v347 = vld [vmem:[%s1 + $0x9f8] sm:$0xff]
    %v348 = vld [vmem:[%s1 + $0xa00] sm:$0xff]
    %v349 = vld [vmem:[%s1 + $0xa08] sm:$0xff]
    %v350 = vld [vmem:[%s1 + $0xa10] sm:$0xff]
    %v351 = vld [vmem:[%s1 + $0xa18] sm:$0xff]
    %v352 = vld [vmem:[%s1 + $0xa20] sm:$0xff]
    %v353 = vld [vmem:[%s1 + $0xa28] sm:$0xff]
    %v354 = vld [vmem:[%s1 + $0xa30] sm:$0xff]
    %v355 = vld [vmem:[%s1 + $0xa38] sm:$0xff]
    %v356 = vld [vmem:[%s1 + $0xa40] sm:$0xff]
    %v357 = vld [vmem:[%s1 + $0xa48] sm:$0xff]
    %v358 = vld [vmem:[%s1 + $0xa50] sm:$0xff]
    %v359 = vld [vmem:[%s1 + $0xa58] sm:$0xff]
    %v360 = vld [vmem:[%s1 + $0xa60] sm:$0xff]
    %v361 = vld [vmem:[%s1 + $0xa68] sm:$0xff]
    %v362 = vld [vmem:[%s1 + $0xa70] sm:$0xff]
    %v363 = vld [vmem:[%s1 + $0xa78] sm:$0xff]
    %v364 = vld [vmem:[%s1 + $0xa80] sm:$0xff]
    %v365 = vld [vmem:[%s1 + $0xa88] sm:$0xff]
    %v366 = vld [vmem:[%s1 + $0xa90] sm:$0xff]
    %v367 = vld [vmem:[%s1 + $0xa98] sm:$0xff]
    %v368 = vld [vmem:[%s1 + $0xaa0] sm:$0xff]
    %v369 = vld [vmem:[%s1 + $0xaa8] sm:$0xff]
    %v370 = vld [vmem:[%s1 + $0xab0] sm:$0xff]
    %v371 = vld [vmem:[%s1 + $0xab8] sm:$0xff]
    %v372 = vld [vmem:[%s1 + $0xac0] sm:$0xff]
    %v373 = vld [vmem:[%s1 + $0xac8] sm:$0xff]
    %v374 = vld [vmem:[%s1 + $0xad0] sm:$0xff]
    %v375 = vld [vmem:[%s1 + $0xad8] sm:$0xff]
    %v376 = vld [vmem:[%s1 + $0xae0] sm:$0xff]
    %v377 = vld [vmem:[%s1 + $0xae8] sm:$0xff]
    %v378 = vld [vmem:[%s1 + $0xaf0] sm:$0xff]
    %v379 = vld [vmem:[%s1 + $0xaf8] sm:$0xff]
    %v380 = vld [vmem:[%s1 + $0xb00] sm:$0xff]
    %v381 = vld [vmem:[%s1 + $0xb08] sm:$0xff]
    %v382 = vld [vmem:[%s1 + $0xb10] sm:$0xff]
    %v383 = vld [vmem:[%s1 + $0xb18] sm:$0xff]
    %v384 = vld [vmem:[%s1 + $0xb20] sm:$0xff]
    %v385 = vld [vmem:[%s1 + $0xb28] sm:$0xff]
    %v386 = vld [vmem:[%s1 + $0xb30] sm:$0xff]
    %v387 = vld [vmem:[%s1 + $0xb38] sm:$0xff]
    %v388 = vld [vmem:[%s1 + $0xb40] sm:$0xff]
    %v389 = vld [vmem:[%s1 + $0xb48] sm:$0xff]
    %v390 = vld [vmem:[%s1 + $0xb50] sm:$0xff]
    %v391 = vld [vmem:[%s1 + $0xb58] sm:$0xff]
    %v392 = vld [vmem:[%s1 + $0xb60] sm:$0xff]
    %v393 = vld [vmem:[%s1 + $0xb68] sm:$0xff]
    %v394 = vld [vmem:[%s1 + $0xb70] sm:$0xff]
    %v395 = vld [vmem:[%s1 + $0xb78] sm:$0xff]
    %v396 = vld [vmem:[%s1 + $0xb80] sm:$0xff]
    %v397 = vld [vmem:[%s1 + $0xb88] sm:$0xff]
    %v398 = vld [vmem:[%s1 + $0xb90] sm:$0xff]
    %v399 = vld [vmem:[%s1 + $0xb98] sm:$0xff]
    %v400 = vld [vmem:[%s1 + $0xba0] sm:$0xff]
    %v401 = vld [vmem:[%s1 + $0xba8] sm:$0xff]
    %v402 = vld [vmem:[%s1 + $0xbb0] sm:$0xff]
    %v403 = vld [vmem:[%s1 + $0xbb8] sm:$0xff]
    %v404 = vld [vmem:[%s1 + $0xbc0] sm:$0xff]
    %v405 = vld [vmem:[%s1 + $0xbc8] sm:$0xff]
    %v406 = vld [vmem:[%s1 + $0xbd0] sm:$0xff]
    %v407 = vld [vmem:[%s1 + $0xbd8] sm:$0xff]
    %v408 = vld [vmem:[%s1 + $0xbe0] sm:$0xff]
    %v409 = vld [vmem:[%s1 + $0xbe8] sm:$0xff]
    %v410 = vld [vmem:[%s1 + $0xbf0] sm:$0xff]
    %v411 = vld [vmem:[%s1 + $0xbf8] sm:$0xff]
    %v412 = vld [vmem:[%s1 + $0xc00] sm:$0xff]
    %v413 = vld [vmem:[%s1 + $0xc08] sm:$0xff]
    %v414 = vld [vmem:[%s1 + $0xc10] sm:$0xff]
    %v415 = vld [vmem:[%s1 + $0xc18] sm:$0xff]
    %v416 = vld [vmem:[%s1 + $0xc20] sm:$0xff]
    %v417 = vld [vmem:[%s1 + $0xc28] sm:$0xff]
    %v418 = vld [vmem:[%s1 + $0xc30] sm:$0xff]
    %v419 = vld [vmem:[%s1 + $0xc38] sm:$0xff]
    %v420 = vld [vmem:[%s2] sm:$0x1]
    %v422 = vlaneseq
    %v423 = vshrl.u32 %v422, 7
    %v424 = vsub.s32 0, %v423
    %v425 = vrot.slane %v420, %v424
    %v434 = vcombine.high %v21, %v21
    %v436 = vunpack.c.l.s4 1983009808
    %v437 = vunpack.c.0.s8 %v436
    %v438 = vlaneseq
    %v439 = vshrl.u32 %v438, 7
    %v440 = vsub.s32 %v437, %v439
    %v441 = vrot.slane %v21, %v440
    %v443 = vunpack.c.l.s4 1983009808
    %v444 = vunpack.c.0.s8 %v443
    %v445 = vlaneseq
    %v446 = vshrl.u32 %v445, 7
    %v447 = vsub.s32 %v444, %v446
    %v448 = vrot.slane %v434, %v447
    %v449 = vcombine.high %v441, %v441
    %v450 = vcombine.high %v448, %v448
    %v451 = vcombine.high %v22, %v22
    %v453 = vunpack.c.l.s4 1983009808
    %v454 = vunpack.c.0.s8 %v453
    %v455 = vlaneseq
    %v456 = vshrl.u32 %v455, 7
    %v457 = vsub.s32 %v454, %v456
    %v458 = vrot.slane %v22, %v457
    %v460 = vunpack.c.l.s4 1983009808
    %v461 = vunpack.c.0.s8 %v460
    %v462 = vlaneseq
    %v463 = vshrl.u32 %v462, 7
    %v464 = vsub.s32 %v461, %v463
    %v465 = vrot.slane %v451, %v464
    %v466 = vcombine.high %v458, %v458
    %v467 = vcombine.high %v465, %v465
    %v468 = vcombine.high %v23, %v23
    %v470 = vunpack.c.l.s4 1983009808
    %v471 = vunpack.c.0.s8 %v470
    %v472 = vlaneseq
    %v473 = vshrl.u32 %v472, 7
    %v474 = vsub.s32 %v471, %v473
    %v475 = vrot.slane %v23, %v474
    %v477 = vunpack.c.l.s4 1983009808
    %v478 = vunpack.c.0.s8 %v477
    %v479 = vlaneseq
    %v480 = vshrl.u32 %v479, 7
    %v481 = vsub.s32 %v478, %v480
    %v482 = vrot.slane %v468, %v481
    %v483 = vcombine.high %v475, %v475
    %v484 = vcombine.high %v482, %v482
    %v485 = vcombine.high %v24, %v24
    %v487 = vunpack.c.l.s4 1983009808
    %v488 = vunpack.c.0.s8 %v487
    %v489 = vlaneseq
    %v490 = vshrl.u32 %v489, 7
    %v491 = vsub.s32 %v488, %v490
    %v492 = vrot.slane %v24, %v491
    %v494 = vunpack.c.l.s4 1983009808
    %v495 = vunpack.c.0.s8 %v494
    %v496 = vlaneseq
    %v497 = vshrl.u32 %v496, 7
    %v498 = vsub.s32 %v495, %v497
    %v499 = vrot.slane %v485, %v498
    %v500 = vcombine.high %v492, %v492
    %v501 = vcombine.high %v499, %v499
    %v502 = vcombine.high %v25, %v25
    %v504 = vunpack.c.l.s4 1983009808
    %v505 = vunpack.c.0.s8 %v504
    %v506 = vlaneseq
    %v507 = vshrl.u32 %v506, 7
    %v508 = vsub.s32 %v505, %v507
    %v509 = vrot.slane %v25, %v508
    %v511 = vunpack.c.l.s4 1983009808
    %v512 = vunpack.c.0.s8 %v511
    %v513 = vlaneseq
    %v514 = vshrl.u32 %v513, 7
    %v515 = vsub.s32 %v512, %v514
    %v516 = vrot.slane %v502, %v515
    %v517 = vcombine.high %v509, %v509
    %v518 = vcombine.high %v516, %v516
    %v519 = vcombine.high %v26, %v26
    %v521 = vunpack.c.l.s4 1983009808
    %v522 = vunpack.c.0.s8 %v521
    %v523 = vlaneseq
    %v524 = vshrl.u32 %v523, 7
    %v525 = vsub.s32 %v522, %v524
    %v526 = vrot.slane %v26, %v525
    %v528 = vunpack.c.l.s4 1983009808
    %v529 = vunpack.c.0.s8 %v528
    %v530 = vlaneseq
    %v531 = vshrl.u32 %v530, 7
    %v532 = vsub.s32 %v529, %v531
    %v533 = vrot.slane %v519, %v532
    %v534 = vcombine.high %v526, %v526
    %v535 = vcombine.high %v533, %v533
    %v537 = vunpack.c.l.s4 1983009808
    %v538 = vunpack.c.0.s8 %v537
    %v539 = vlaneseq
    %v540 = vshrl.u32 %v539, 7
    %v541 = vsub.s32 %v538, %v540
    %v542 = vrot.slane %v27, %v541
    %vm567 = vcmask 523264
    %v568 = vsel %vm567, %v542, 0
    %570 = vmatprep.subr.mxu0 0.0
    %571 = vmatpush1.msra.mxu0 %v28
    %572 = vmatprep.subr.mxu0 0.0
    %573 = vmatpush1.msra.mxu0 %v29
    %574 = vmatprep.subr.mxu0 0.0
    %575 = vmatpush1.msra.mxu0 %v30
    %576 = vmatprep.subr.mxu0 0.0
    %577 = vmatpush1.msra.mxu0 %v31
    %578 = vmatprep.subr.mxu0 0.0
    %579 = vmatpush1.msra.mxu0 %v32
    %580 = vmatprep.subr.mxu0 0.0
    %581 = vmatpush1.msra.mxu0 %v33
    %582 = vmatprep.subr.mxu0 0.0
    %583 = vmatpush1.msra.mxu0 %v34
    %584 = vmatprep.subr.mxu0 0.0
    %585 = vmatpush1.msra.mxu0 %v35
    %586 = vmatprep.subr.mxu0 0.0
    %587 = vmatpush1.msra.mxu0 %v36
    %588 = vmatprep.subr.mxu0 0.0
    %589 = vmatpush1.msra.mxu0 %v37
    %590 = vmatprep.subr.mxu0 0.0
    %591 = vmatpush1.msra.mxu0 %v38
    %592 = vmatprep.subr.mxu0 0.0
    %593 = vmatpush1.msra.mxu0 %v39
    %594 = vmatprep.subr.mxu0 0.0
    %595 = vmatpush1.msra.mxu0 %v40
    %596 = vmatprep.subr.mxu0 0.0
    %597 = vmatpush1.msra.mxu0 %v41
    %598 = vmatprep.subr.mxu0 0.0
    %599 = vmatpush1.msra.mxu0 %v42
    %600 = vmatprep.subr.mxu0 0.0
    %601 = vmatpush1.msra.mxu0 %v43
    %602 = vmatprep.subr.mxu0 0.0
    %603 = vmatpush1.msra.mxu0 %v44
    %604 = vmatprep.subr.mxu0 0.0
    %605 = vmatpush1.msra.mxu0 %v45
    %606 = vmatprep.subr.mxu0 0.0
    %607 = vmatpush1.msra.mxu0 %v46
    %608 = vmatprep.subr.mxu0 0.0
    %609 = vmatpush1.msra.mxu0 %v47
    %610 = vmatprep.subr.mxu0 0.0
    %611 = vmatpush1.msra.mxu0 %v48
    %612 = vmatprep.subr.mxu0 0.0
    %613 = vmatpush1.msra.mxu0 %v49
    %614 = vmatprep.subr.mxu0 0.0
    %615 = vmatpush1.msra.mxu0 %v50
    %616 = vmatprep.subr.mxu0 0.0
    %617 = vmatpush1.msra.mxu0 %v51
    %618 = vmatprep.subr.mxu0 0.0
    %619 = vmatpush1.msra.mxu0 %v52
    %620 = vmatprep.subr.mxu0 0.0
    %621 = vmatpush1.msra.mxu0 %v53
    %622 = vmatprep.subr.mxu0 0.0
    %623 = vmatpush1.msra.mxu0 %v54
    %624 = vmatprep.subr.mxu0 0.0
    %625 = vmatpush1.msra.mxu0 %v55
    %626 = vmatprep.subr.mxu0 0.0
    %627 = vmatpush1.msra.mxu0 %v56
    %628 = vmatprep.subr.mxu0 0.0
    %629 = vmatpush1.msra.mxu0 %v57
    %630 = vmatprep.subr.mxu0 0.0
    %631 = vmatpush1.msra.mxu0 %v58
    %632 = vmatprep.subr.mxu0 0.0
    %633 = vmatpush1.msra.mxu0 %v59
    %634 = vmatprep.mubr.f32.mxu0 %v449
    %635 = vmatmul.mubr.f32.gmra.mrb[0].mxu0 %v441
    %v636 = vpop.f32.mrb[0].mxu0
    %v637 = vadd.f32 %v425, %v636
    %v638 = vpop.f32.mrb[0].mxu0
    %639 = vdwg.mxu0
    %640 = vmatprep.subr.mxu0 0.0
    %641 = vmatpush1.msra.mxu0 %v60
    %642 = vmatprep.subr.mxu0 0.0
    %643 = vmatpush1.msra.mxu0 %v61
    %644 = vmatprep.subr.mxu0 0.0
    %645 = vmatpush1.msra.mxu0 %v62
    %646 = vmatprep.subr.mxu0 0.0
    %647 = vmatpush1.msra.mxu0 %v63
    %648 = vmatprep.subr.mxu0 0.0
    %649 = vmatpush1.msra.mxu0 %v64
    %650 = vmatprep.subr.mxu0 0.0
    %651 = vmatpush1.msra.mxu0 %v65
    %652 = vmatprep.subr.mxu0 0.0
    %653 = vmatpush1.msra.mxu0 %v66
    %654 = vmatprep.subr.mxu0 0.0
    %655 = vmatpush1.msra.mxu0 %v67
    %656 = vmatprep.subr.mxu0 0.0
    %657 = vmatpush1.msra.mxu0 %v68
    %658 = vmatprep.subr.mxu0 0.0
    %659 = vmatpush1.msra.mxu0 %v69
    %660 = vmatprep.subr.mxu0 0.0
    %661 = vmatpush1.msra.mxu0 %v70
    %662 = vmatprep.subr.mxu0 0.0
    %663 = vmatpush1.msra.mxu0 %v71
    %664 = vmatprep.subr.mxu0 0.0
    %665 = vmatpush1.msra.mxu0 %v72
    %666 = vmatprep.subr.mxu0 0.0
    %667 = vmatpush1.msra.mxu0 %v73
    %668 = vmatprep.subr.mxu0 0.0
    %669 = vmatpush1.msra.mxu0 %v74
    %670 = vmatprep.subr.mxu0 0.0
    %671 = vmatpush1.msra.mxu0 %v75
    %672 = vmatprep.subr.mxu0 0.0
    %673 = vmatpush1.msra.mxu0 %v76
    %674 = vmatprep.subr.mxu0 0.0
    %675 = vmatpush1.msra.mxu0 %v77
    %676 = vmatprep.subr.mxu0 0.0
    %677 = vmatpush1.msra.mxu0 %v78
    %678 = vmatprep.subr.mxu0 0.0
    %679 = vmatpush1.msra.mxu0 %v79
    %680 = vmatprep.subr.mxu0 0.0
    %681 = vmatpush1.msra.mxu0 %v80
    %682 = vmatprep.subr.mxu0 0.0
    %683 = vmatpush1.msra.mxu0 %v81
    %684 = vmatprep.subr.mxu0 0.0
    %685 = vmatpush1.msra.mxu0 %v82
    %686 = vmatprep.subr.mxu0 0.0
    %687 = vmatpush1.msra.mxu0 %v83
    %688 = vmatprep.subr.mxu0 0.0
    %689 = vmatpush1.msra.mxu0 %v84
    %690 = vmatprep.subr.mxu0 0.0
    %691 = vmatpush1.msra.mxu0 %v85
    %692 = vmatprep.subr.mxu0 0.0
    %693 = vmatpush1.msra.mxu0 %v86
    %694 = vmatprep.subr.mxu0 0.0
    %695 = vmatpush1.msra.mxu0 %v87
    %696 = vmatprep.subr.mxu0 0.0
    %697 = vmatpush1.msra.mxu0 %v88
    %698 = vmatprep.subr.mxu0 0.0
    %699 = vmatpush1.msra.mxu0 %v89
    %700 = vmatprep.subr.mxu0 0.0
    %701 = vmatpush1.msra.mxu0 %v90
    %702 = vmatprep.subr.mxu0 0.0
    %703 = vmatpush1.msra.mxu0 %v91
    %704 = vmatprep.mubr.f32.mxu0 %v450
    %705 = vmatmul.mubr.f32.gmra.mrb[0].mxu0 %v448
    %v706 = vpop.f32.mrb[0].mxu0
    %v707 = vadd.f32 %v637, %v706
    %v708 = vpop.f32.mrb[0].mxu0
    %709 = vdwg.mxu0
    %710 = vmatprep.subr.mxu0 0.0
    %711 = vmatpush1.msra.mxu0 %v92
    %712 = vmatprep.subr.mxu0 0.0
    %713 = vmatpush1.msra.mxu0 %v93
    %714 = vmatprep.subr.mxu0 0.0
    %715 = vmatpush1.msra.mxu0 %v94
    %716 = vmatprep.subr.mxu0 0.0
    %717 = vmatpush1.msra.mxu0 %v95
    %718 = vmatprep.subr.mxu0 0.0
    %719 = vmatpush1.msra.mxu0 %v96
    %720 = vmatprep.subr.mxu0 0.0
    %721 = vmatpush1.msra.mxu0 %v97
    %722 = vmatprep.subr.mxu0 0.0
    %723 = vmatpush1.msra.mxu0 %v98
    %724 = vmatprep.subr.mxu0 0.0
    %725 = vmatpush1.msra.mxu0 %v99
    %726 = vmatprep.subr.mxu0 0.0
    %727 = vmatpush1.msra.mxu0 %v100
    %728 = vmatprep.subr.mxu0 0.0
    %729 = vmatpush1.msra.mxu0 %v101
    %730 = vmatprep.subr.mxu0 0.0
    %731 = vmatpush1.msra.mxu0 %v102
    %732 = vmatprep.subr.mxu0 0.0
    %733 = vmatpush1.msra.mxu0 %v103
    %734 = vmatprep.subr.mxu0 0.0
    %735 = vmatpush1.msra.mxu0 %v104
    %736 = vmatprep.subr.mxu0 0.0
    %737 = vmatpush1.msra.mxu0 %v105
    %738 = vmatprep.subr.mxu0 0.0
    %739 = vmatpush1.msra.mxu0 %v106
    %740 = vmatprep.subr.mxu0 0.0
    %741 = vmatpush1.msra.mxu0 %v107
    %742 = vmatprep.subr.mxu0 0.0
    %743 = vmatpush1.msra.mxu0 %v108
    %744 = vmatprep.subr.mxu0 0.0
    %745 = vmatpush1.msra.mxu0 %v109
    %746 = vmatprep.subr.mxu0 0.0
    %747 = vmatpush1.msra.mxu0 %v110
    %748 = vmatprep.subr.mxu0 0.0
    %749 = vmatpush1.msra.mxu0 %v111
    %750 = vmatprep.subr.mxu0 0.0
    %751 = vmatpush1.msra.mxu0 %v112
    %752 = vmatprep.subr.mxu0 0.0
    %753 = vmatpush1.msra.mxu0 %v113
    %754 = vmatprep.subr.mxu0 0.0
    %755 = vmatpush1.msra.mxu0 %v114
    %756 = vmatprep.subr.mxu0 0.0
    %757 = vmatpush1.msra.mxu0 %v115
    %758 = vmatprep.subr.mxu0 0.0
    %759 = vmatpush1.msra.mxu0 %v116
    %760 = vmatprep.subr.mxu0 0.0
    %761 = vmatpush1.msra.mxu0 %v117
    %762 = vmatprep.subr.mxu0 0.0
    %763 = vmatpush1.msra.mxu0 %v118
    %764 = vmatprep.subr.mxu0 0.0
    %765 = vmatpush1.msra.mxu0 %v119
    %766 = vmatprep.subr.mxu0 0.0
    %767 = vmatpush1.msra.mxu0 %v120
    %768 = vmatprep.subr.mxu0 0.0
    %769 = vmatpush1.msra.mxu0 %v121
    %770 = vmatprep.subr.mxu0 0.0
    %771 = vmatpush1.msra.mxu0 %v122
    %772 = vmatprep.subr.mxu0 0.0
    %773 = vmatpush1.msra.mxu0 %v123
    %774 = vmatprep.mubr.f32.mxu0 %v466
    %775 = vmatmul.mubr.f32.gmra.mrb[0].mxu0 %v458
    %v776 = vpop.f32.mrb[0].mxu0
    %v777 = vadd.f32 %v707, %v776
    %v778 = vpop.f32.mrb[0].mxu0
    %779 = vdwg.mxu0
    %780 = vmatprep.subr.mxu0 0.0
    %781 = vmatpush1.msra.mxu0 %v124
    %782 = vmatprep.subr.mxu0 0.0
    %783 = vmatpush1.msra.mxu0 %v125
    %784 = vmatprep.subr.mxu0 0.0
    %785 = vmatpush1.msra.mxu0 %v126
    %786 = vmatprep.subr.mxu0 0.0
    %787 = vmatpush1.msra.mxu0 %v127
    %788 = vmatprep.subr.mxu0 0.0
    %789 = vmatpush1.msra.mxu0 %v128
    %790 = vmatprep.subr.mxu0 0.0
    %791 = vmatpush1.msra.mxu0 %v129
    %792 = vmatprep.subr.mxu0 0.0
    %793 = vmatpush1.msra.mxu0 %v130
    %794 = vmatprep.subr.mxu0 0.0
    %795 = vmatpush1.msra.mxu0 %v131
    %796 = vmatprep.subr.mxu0 0.0
    %797 = vmatpush1.msra.mxu0 %v132
    %798 = vmatprep.subr.mxu0 0.0
    %799 = vmatpush1.msra.mxu0 %v133
    %800 = vmatprep.subr.mxu0 0.0
    %801 = vmatpush1.msra.mxu0 %v134
    %802 = vmatprep.subr.mxu0 0.0
    %803 = vmatpush1.msra.mxu0 %v135
    %804 = vmatprep.subr.mxu0 0.0
    %805 = vmatpush1.msra.mxu0 %v136
    %806 = vmatprep.subr.mxu0 0.0
    %807 = vmatpush1.msra.mxu0 %v137
    %808 = vmatprep.subr.mxu0 0.0
    %809 = vmatpush1.msra.mxu0 %v138
    %810 = vmatprep.subr.mxu0 0.0
    %811 = vmatpush1.msra.mxu0 %v139
    %812 = vmatprep.subr.mxu0 0.0
    %813 = vmatpush1.msra.mxu0 %v140
    %814 = vmatprep.subr.mxu0 0.0
    %815 = vmatpush1.msra.mxu0 %v141
    %816 = vmatprep.subr.mxu0 0.0
    %817 = vmatpush1.msra.mxu0 %v142
    %818 = vmatprep.subr.mxu0 0.0
    %819 = vmatpush1.msra.mxu0 %v143
    %820 = vmatprep.subr.mxu0 0.0
    %821 = vmatpush1.msra.mxu0 %v144
    %822 = vmatprep.subr.mxu0 0.0
    %823 = vmatpush1.msra.mxu0 %v145
    %824 = vmatprep.subr.mxu0 0.0
    %825 = vmatpush1.msra.mxu0 %v146
    %826 = vmatprep.subr.mxu0 0.0
    %827 = vmatpush1.msra.mxu0 %v147
    %828 = vmatprep.subr.mxu0 0.0
    %829 = vmatpush1.msra.mxu0 %v148
    %830 = vmatprep.subr.mxu0 0.0
    %831 = vmatpush1.msra.mxu0 %v149
    %832 = vmatprep.subr.mxu0 0.0
    %833 = vmatpush1.msra.mxu0 %v150
    %834 = vmatprep.subr.mxu0 0.0
    %835 = vmatpush1.msra.mxu0 %v151
    %836 = vmatprep.subr.mxu0 0.0
    %837 = vmatpush1.msra.mxu0 %v152
    %838 = vmatprep.subr.mxu0 0.0
    %839 = vmatpush1.msra.mxu0 %v153
    %840 = vmatprep.subr.mxu0 0.0
    %841 = vmatpush1.msra.mxu0 %v154
    %842 = vmatprep.subr.mxu0 0.0
    %843 = vmatpush1.msra.mxu0 %v155
    %844 = vmatprep.mubr.f32.mxu0 %v467
    %845 = vmatmul.mubr.f32.gmra.mrb[0].mxu0 %v465
    %v846 = vpop.f32.mrb[0].mxu0
    %v847 = vadd.f32 %v777, %v846
    %v848 = vpop.f32.mrb[0].mxu0
    %849 = vdwg.mxu0
    %850 = vmatprep.subr.mxu0 0.0
    %851 = vmatpush1.msra.mxu0 %v156
    %852 = vmatprep.subr.mxu0 0.0
    %853 = vmatpush1.msra.mxu0 %v157
    %854 = vmatprep.subr.mxu0 0.0
    %855 = vmatpush1.msra.mxu0 %v158
    %856 = vmatprep.subr.mxu0 0.0
    %857 = vmatpush1.msra.mxu0 %v159
    %858 = vmatprep.subr.mxu0 0.0
    %859 = vmatpush1.msra.mxu0 %v160
    %860 = vmatprep.subr.mxu0 0.0
    %861 = vmatpush1.msra.mxu0 %v161
    %862 = vmatprep.subr.mxu0 0.0
    %863 = vmatpush1.msra.mxu0 %v162
    %864 = vmatprep.subr.mxu0 0.0
    %865 = vmatpush1.msra.mxu0 %v163
    %866 = vmatprep.subr.mxu0 0.0
    %867 = vmatpush1.msra.mxu0 %v164
    %868 = vmatprep.subr.mxu0 0.0
    %869 = vmatpush1.msra.mxu0 %v165
    %870 = vmatprep.subr.mxu0 0.0
    %871 = vmatpush1.msra.mxu0 %v166
    %872 = vmatprep.subr.mxu0 0.0
    %873 = vmatpush1.msra.mxu0 %v167
    %874 = vmatprep.subr.mxu0 0.0
    %875 = vmatpush1.msra.mxu0 %v168
    %876 = vmatprep.subr.mxu0 0.0
    %877 = vmatpush1.msra.mxu0 %v169
    %878 = vmatprep.subr.mxu0 0.0
    %879 = vmatpush1.msra.mxu0 %v170
    %880 = vmatprep.subr.mxu0 0.0
    %881 = vmatpush1.msra.mxu0 %v171
    %882 = vmatprep.subr.mxu0 0.0
    %883 = vmatpush1.msra.mxu0 %v172
    %884 = vmatprep.subr.mxu0 0.0
    %885 = vmatpush1.msra.mxu0 %v173
    %886 = vmatprep.subr.mxu0 0.0
    %887 = vmatpush1.msra.mxu0 %v174
    %888 = vmatprep.subr.mxu0 0.0
    %889 = vmatpush1.msra.mxu0 %v175
    %890 = vmatprep.subr.mxu0 0.0
    %891 = vmatpush1.msra.mxu0 %v176
    %892 = vmatprep.subr.mxu0 0.0
    %893 = vmatpush1.msra.mxu0 %v177
    %894 = vmatprep.subr.mxu0 0.0
    %895 = vmatpush1.msra.mxu0 %v178
    %896 = vmatprep.subr.mxu0 0.0
    %897 = vmatpush1.msra.mxu0 %v179
    %898 = vmatprep.subr.mxu0 0.0
    %899 = vmatpush1.msra.mxu0 %v180
    %900 = vmatprep.subr.mxu0 0.0
    %901 = vmatpush1.msra.mxu0 %v181
    %902 = vmatprep.subr.mxu0 0.0
    %903 = vmatpush1.msra.mxu0 %v182
    %904 = vmatprep.subr.mxu0 0.0
    %905 = vmatpush1.msra.mxu0 %v183
    %906 = vmatprep.subr.mxu0 0.0
    %907 = vmatpush1.msra.mxu0 %v184
    %908 = vmatprep.subr.mxu0 0.0
    %909 = vmatpush1.msra.mxu0 %v185
    %910 = vmatprep.subr.mxu0 0.0
    %911 = vmatpush1.msra.mxu0 %v186
    %912 = vmatprep.subr.mxu0 0.0
    %913 = vmatpush1.msra.mxu0 %v187
    %914 = vmatprep.mubr.f32.mxu0 %v483
    %915 = vmatmul.mubr.f32.gmra.mrb[0].mxu0 %v475
    %v916 = vpop.f32.mrb[0].mxu0
    %v917 = vadd.f32 %v847, %v916
    %v918 = vpop.f32.mrb[0].mxu0
    %919 = vdwg.mxu0
    %920 = vmatprep.subr.mxu0 0.0
    %921 = vmatpush1.msra.mxu0 %v188
    %922 = vmatprep.subr.mxu0 0.0
    %923 = vmatpush1.msra.mxu0 %v189
    %924 = vmatprep.subr.mxu0 0.0
    %925 = vmatpush1.msra.mxu0 %v190
    %926 = vmatprep.subr.mxu0 0.0
    %927 = vmatpush1.msra.mxu0 %v191
    %928 = vmatprep.subr.mxu0 0.0
    %929 = vmatpush1.msra.mxu0 %v192
    %930 = vmatprep.subr.mxu0 0.0
    %931 = vmatpush1.msra.mxu0 %v193
    %932 = vmatprep.subr.mxu0 0.0
    %933 = vmatpush1.msra.mxu0 %v194
    %934 = vmatprep.subr.mxu0 0.0
    %935 = vmatpush1.msra.mxu0 %v195
    %936 = vmatprep.subr.mxu0 0.0
    %937 = vmatpush1.msra.mxu0 %v196
    %938 = vmatprep.subr.mxu0 0.0
    %939 = vmatpush1.msra.mxu0 %v197
    %940 = vmatprep.subr.mxu0 0.0
    %941 = vmatpush1.msra.mxu0 %v198
    %942 = vmatprep.subr.mxu0 0.0
    %943 = vmatpush1.msra.mxu0 %v199
    %944 = vmatprep.subr.mxu0 0.0
    %945 = vmatpush1.msra.mxu0 %v200
    %946 = vmatprep.subr.mxu0 0.0
    %947 = vmatpush1.msra.mxu0 %v201
    %948 = vmatprep.subr.mxu0 0.0
    %949 = vmatpush1.msra.mxu0 %v202
    %950 = vmatprep.subr.mxu0 0.0
    %951 = vmatpush1.msra.mxu0 %v203
    %952 = vmatprep.subr.mxu0 0.0
    %953 = vmatpush1.msra.mxu0 %v204
    %954 = vmatprep.subr.mxu0 0.0
    %955 = vmatpush1.msra.mxu0 %v205
    %956 = vmatprep.subr.mxu0 0.0
    %957 = vmatpush1.msra.mxu0 %v206
    %958 = vmatprep.subr.mxu0 0.0
    %959 = vmatpush1.msra.mxu0 %v207
    %960 = vmatprep.subr.mxu0 0.0
    %961 = vmatpush1.msra.mxu0 %v208
    %962 = vmatprep.subr.mxu0 0.0
    %963 = vmatpush1.msra.mxu0 %v209
    %964 = vmatprep.subr.mxu0 0.0
    %965 = vmatpush1.msra.mxu0 %v210
    %966 = vmatprep.subr.mxu0 0.0
    %967 = vmatpush1.msra.mxu0 %v211
    %968 = vmatprep.subr.mxu0 0.0
    %969 = vmatpush1.msra.mxu0 %v212
    %970 = vmatprep.subr.mxu0 0.0
    %971 = vmatpush1.msra.mxu0 %v213
    %972 = vmatprep.subr.mxu0 0.0
    %973 = vmatpush1.msra.mxu0 %v214
    %974 = vmatprep.subr.mxu0 0.0
    %975 = vmatpush1.msra.mxu0 %v215
    %976 = vmatprep.subr.mxu0 0.0
    %977 = vmatpush1.msra.mxu0 %v216
    %978 = vmatprep.subr.mxu0 0.0
    %979 = vmatpush1.msra.mxu0 %v217
    %980 = vmatprep.subr.mxu0 0.0
    %981 = vmatpush1.msra.mxu0 %v218
    %982 = vmatprep.subr.mxu0 0.0
    %983 = vmatpush1.msra.mxu0 %v219
    %984 = vmatprep.mubr.f32.mxu0 %v484
    %985 = vmatmul.mubr.f32.gmra.mrb[0].mxu0 %v482
    %v986 = vpop.f32.mrb[0].mxu0
    %v987 = vadd.f32 %v917, %v986
    %v988 = vpop.f32.mrb[0].mxu0
    %989 = vdwg.mxu0
    %990 = vmatprep.subr.mxu0 0.0
    %991 = vmatpush1.msra.mxu0 %v220
    %992 = vmatprep.subr.mxu0 0.0
    %993 = vmatpush1.msra.mxu0 %v221
    %994 = vmatprep.subr.mxu0 0.0
    %995 = vmatpush1.msra.mxu0 %v222
    %996 = vmatprep.subr.mxu0 0.0
    %997 = vmatpush1.msra.mxu0 %v223
    %998 = vmatprep.subr.mxu0 0.0
    %999 = vmatpush1.msra.mxu0 %v224
    %1000 = vmatprep.subr.mxu0 0.0
    %1001 = vmatpush1.msra.mxu0 %v225
    %1002 = vmatprep.subr.mxu0 0.0
    %1003 = vmatpush1.msra.mxu0 %v226
    %1004 = vmatprep.subr.mxu0 0.0
    %1005 = vmatpush1.msra.mxu0 %v227
    %1006 = vmatprep.subr.mxu0 0.0
    %1007 = vmatpush1.msra.mxu0 %v228
    %1008 = vmatprep.subr.mxu0 0.0
    %1009 = vmatpush1.msra.mxu0 %v229
    %1010 = vmatprep.subr.mxu0 0.0
    %1011 = vmatpush1.msra.mxu0 %v230
    %1012 = vmatprep.subr.mxu0 0.0
    %1013 = vmatpush1.msra.mxu0 %v231
    %1014 = vmatprep.subr.mxu0 0.0
    %1015 = vmatpush1.msra.mxu0 %v232
    %1016 = vmatprep.subr.mxu0 0.0
    %1017 = vmatpush1.msra.mxu0 %v233
    %1018 = vmatprep.subr.mxu0 0.0
    %1019 = vmatpush1.msra.mxu0 %v234
    %1020 = vmatprep.subr.mxu0 0.0
    %1021 = vmatpush1.msra.mxu0 %v235
    %1022 = vmatprep.subr.mxu0 0.0
    %1023 = vmatpush1.msra.mxu0 %v236
    %1024 = vmatprep.subr.mxu0 0.0
    %1025 = vmatpush1.msra.mxu0 %v237
    %1026 = vmatprep.subr.mxu0 0.0
    %1027 = vmatpush1.msra.mxu0 %v238
    %1028 = vmatprep.subr.mxu0 0.0
    %1029 = vmatpush1.msra.mxu0 %v239
    %1030 = vmatprep.subr.mxu0 0.0
    %1031 = vmatpush1.msra.mxu0 %v240
    %1032 = vmatprep.subr.mxu0 0.0
    %1033 = vmatpush1.msra.mxu0 %v241
    %1034 = vmatprep.subr.mxu0 0.0
    %1035 = vmatpush1.msra.mxu0 %v242
    %1036 = vmatprep.subr.mxu0 0.0
    %1037 = vmatpush1.msra.mxu0 %v243
    %1038 = vmatprep.subr.mxu0 0.0
    %1039 = vmatpush1.msra.mxu0 %v244
    %1040 = vmatprep.subr.mxu0 0.0
    %1041 = vmatpush1.msra.mxu0 %v245
    %1042 = vmatprep.subr.mxu0 0.0
    %1043 = vmatpush1.msra.mxu0 %v246
    %1044 = vmatprep.subr.mxu0 0.0
    %1045 = vmatpush1.msra.mxu0 %v247
    %1046 = vmatprep.subr.mxu0 0.0
    %1047 = vmatpush1.msra.mxu0 %v248
    %1048 = vmatprep.subr.mxu0 0.0
    %1049 = vmatpush1.msra.mxu0 %v249
    %1050 = vmatprep.subr.mxu0 0.0
    %1051 = vmatpush1.msra.mxu0 %v250
    %1052 = vmatprep.subr.mxu0 0.0
    %1053 = vmatpush1.msra.mxu0 %v251
    %1054 = vmatprep.mubr.f32.mxu0 %v500
    %1055 = vmatmul.mubr.f32.gmra.mrb[0].mxu0 %v492
    %v1056 = vpop.f32.mrb[0].mxu0
    %v1057 = vadd.f32 %v987, %v1056
    %v1058 = vpop.f32.mrb[0].mxu0
    %1059 = vdwg.mxu0
    %1060 = vmatprep.subr.mxu0 0.0
    %1061 = vmatpush1.msra.mxu0 %v252
    %1062 = vmatprep.subr.mxu0 0.0
    %1063 = vmatpush1.msra.mxu0 %v253
    %1064 = vmatprep.subr.mxu0 0.0
    %1065 = vmatpush1.msra.mxu0 %v254
    %1066 = vmatprep.subr.mxu0 0.0
    %1067 = vmatpush1.msra.mxu0 %v255
    %1068 = vmatprep.subr.mxu0 0.0
    %1069 = vmatpush1.msra.mxu0 %v256
    %1070 = vmatprep.subr.mxu0 0.0
    %1071 = vmatpush1.msra.mxu0 %v257
    %1072 = vmatprep.subr.mxu0 0.0
    %1073 = vmatpush1.msra.mxu0 %v258
    %1074 = vmatprep.subr.mxu0 0.0
    %1075 = vmatpush1.msra.mxu0 %v259
    %1076 = vmatprep.subr.mxu0 0.0
    %1077 = vmatpush1.msra.mxu0 %v260
    %1078 = vmatprep.subr.mxu0 0.0
    %1079 = vmatpush1.msra.mxu0 %v261
    %1080 = vmatprep.subr.mxu0 0.0
    %1081 = vmatpush1.msra.mxu0 %v262
    %1082 = vmatprep.subr.mxu0 0.0
    %1083 = vmatpush1.msra.mxu0 %v263
    %1084 = vmatprep.subr.mxu0 0.0
    %1085 = vmatpush1.msra.mxu0 %v264
    %1086 = vmatprep.subr.mxu0 0.0
    %1087 = vmatpush1.msra.mxu0 %v265
    %1088 = vmatprep.subr.mxu0 0.0
    %1089 = vmatpush1.msra.mxu0 %v266
    %1090 = vmatprep.subr.mxu0 0.0
    %1091 = vmatpush1.msra.mxu0 %v267
    %1092 = vmatprep.subr.mxu0 0.0
    %1093 = vmatpush1.msra.mxu0 %v268
    %1094 = vmatprep.subr.mxu0 0.0
    %1095 = vmatpush1.msra.mxu0 %v269
    %1096 = vmatprep.subr.mxu0 0.0
    %1097 = vmatpush1.msra.mxu0 %v270
    %1098 = vmatprep.subr.mxu0 0.0
    %1099 = vmatpush1.msra.mxu0 %v271
    %1100 = vmatprep.subr.mxu0 0.0
    %1101 = vmatpush1.msra.mxu0 %v272
    %1102 = vmatprep.subr.mxu0 0.0
    %1103 = vmatpush1.msra.mxu0 %v273
    %1104 = vmatprep.subr.mxu0 0.0
    %1105 = vmatpush1.msra.mxu0 %v274
    %1106 = vmatprep.subr.mxu0 0.0
    %1107 = vmatpush1.msra.mxu0 %v275
    %1108 = vmatprep.subr.mxu0 0.0
    %1109 = vmatpush1.msra.mxu0 %v276
    %1110 = vmatprep.subr.mxu0 0.0
    %1111 = vmatpush1.msra.mxu0 %v277
    %1112 = vmatprep.subr.mxu0 0.0
    %1113 = vmatpush1.msra.mxu0 %v278
    %1114 = vmatprep.subr.mxu0 0.0
    %1115 = vmatpush1.msra.mxu0 %v279
    %1116 = vmatprep.subr.mxu0 0.0
    %1117 = vmatpush1.msra.mxu0 %v280
    %1118 = vmatprep.subr.mxu0 0.0
    %1119 = vmatpush1.msra.mxu0 %v281
    %1120 = vmatprep.subr.mxu0 0.0
    %1121 = vmatpush1.msra.mxu0 %v282
    %1122 = vmatprep.subr.mxu0 0.0
    %1123 = vmatpush1.msra.mxu0 %v283
    %1124 = vmatprep.mubr.f32.mxu0 %v501
    %1125 = vmatmul.mubr.f32.gmra.mrb[0].mxu0 %v499
    %v1126 = vpop.f32.mrb[0].mxu0
    %v1127 = vadd.f32 %v1057, %v1126
    %v1128 = vpop.f32.mrb[0].mxu0
    %1129 = vdwg.mxu0
    %1130 = vmatprep.subr.mxu0 0.0
    %1131 = vmatpush1.msra.mxu0 %v284
    %1132 = vmatprep.subr.mxu0 0.0
    %1133 = vmatpush1.msra.mxu0 %v285
    %1134 = vmatprep.subr.mxu0 0.0
    %1135 = vmatpush1.msra.mxu0 %v286
    %1136 = vmatprep.subr.mxu0 0.0
    %1137 = vmatpush1.msra.mxu0 %v287
    %1138 = vmatprep.subr.mxu0 0.0
    %1139 = vmatpush1.msra.mxu0 %v288
    %1140 = vmatprep.subr.mxu0 0.0
    %1141 = vmatpush1.msra.mxu0 %v289
    %1142 = vmatprep.subr.mxu0 0.0
    %1143 = vmatpush1.msra.mxu0 %v290
    %1144 = vmatprep.subr.mxu0 0.0
    %1145 = vmatpush1.msra.mxu0 %v291
    %1146 = vmatprep.subr.mxu0 0.0
    %1147 = vmatpush1.msra.mxu0 %v292
    %1148 = vmatprep.subr.mxu0 0.0
    %1149 = vmatpush1.msra.mxu0 %v293
    %1150 = vmatprep.subr.mxu0 0.0
    %1151 = vmatpush1.msra.mxu0 %v294
    %1152 = vmatprep.subr.mxu0 0.0
    %1153 = vmatpush1.msra.mxu0 %v295
    %1154 = vmatprep.subr.mxu0 0.0
    %1155 = vmatpush1.msra.mxu0 %v296
    %1156 = vmatprep.subr.mxu0 0.0
    %1157 = vmatpush1.msra.mxu0 %v297
    %1158 = vmatprep.subr.mxu0 0.0
    %1159 = vmatpush1.msra.mxu0 %v298
    %1160 = vmatprep.subr.mxu0 0.0
    %1161 = vmatpush1.msra.mxu0 %v299
    %1162 = vmatprep.subr.mxu0 0.0
    %1163 = vmatpush1.msra.mxu0 %v300
    %1164 = vmatprep.subr.mxu0 0.0
    %1165 = vmatpush1.msra.mxu0 %v301
    %1166 = vmatprep.subr.mxu0 0.0
    %1167 = vmatpush1.msra.mxu0 %v302
    %1168 = vmatprep.subr.mxu0 0.0
    %1169 = vmatpush1.msra.mxu0 %v303
    %1170 = vmatprep.subr.mxu0 0.0
    %1171 = vmatpush1.msra.mxu0 %v304
    %1172 = vmatprep.subr.mxu0 0.0
    %1173 = vmatpush1.msra.mxu0 %v305
    %1174 = vmatprep.subr.mxu0 0.0
    %1175 = vmatpush1.msra.mxu0 %v306
    %1176 = vmatprep.subr.mxu0 0.0
    %1177 = vmatpush1.msra.mxu0 %v307
    %1178 = vmatprep.subr.mxu0 0.0
    %1179 = vmatpush1.msra.mxu0 %v308
    %1180 = vmatprep.subr.mxu0 0.0
    %1181 = vmatpush1.msra.mxu0 %v309
    %1182 = vmatprep.subr.mxu0 0.0
    %1183 = vmatpush1.msra.mxu0 %v310
    %1184 = vmatprep.subr.mxu0 0.0
    %1185 = vmatpush1.msra.mxu0 %v311
    %1186 = vmatprep.subr.mxu0 0.0
    %1187 = vmatpush1.msra.mxu0 %v312
    %1188 = vmatprep.subr.mxu0 0.0
    %1189 = vmatpush1.msra.mxu0 %v313
    %1190 = vmatprep.subr.mxu0 0.0
    %1191 = vmatpush1.msra.mxu0 %v314
    %1192 = vmatprep.subr.mxu0 0.0
    %1193 = vmatpush1.msra.mxu0 %v315
    %1194 = vmatprep.mubr.f32.mxu0 %v517
    %1195 = vmatmul.mubr.f32.gmra.mrb[0].mxu0 %v509
    %v1196 = vpop.f32.mrb[0].mxu0
    %v1197 = vadd.f32 %v1127, %v1196
    %v1198 = vpop.f32.mrb[0].mxu0
    %1199 = vdwg.mxu0
    %1200 = vmatprep.subr.mxu0 0.0
    %1201 = vmatpush1.msra.mxu0 %v316
    %1202 = vmatprep.subr.mxu0 0.0
    %1203 = vmatpush1.msra.mxu0 %v317
    %1204 = vmatprep.subr.mxu0 0.0
    %1205 = vmatpush1.msra.mxu0 %v318
    %1206 = vmatprep.subr.mxu0 0.0
    %1207 = vmatpush1.msra.mxu0 %v319
    %1208 = vmatprep.subr.mxu0 0.0
    %1209 = vmatpush1.msra.mxu0 %v320
    %1210 = vmatprep.subr.mxu0 0.0
    %1211 = vmatpush1.msra.mxu0 %v321
    %1212 = vmatprep.subr.mxu0 0.0
    %1213 = vmatpush1.msra.mxu0 %v322
    %1214 = vmatprep.subr.mxu0 0.0
    %1215 = vmatpush1.msra.mxu0 %v323
    %1216 = vmatprep.subr.mxu0 0.0
    %1217 = vmatpush1.msra.mxu0 %v324
    %1218 = vmatprep.subr.mxu0 0.0
    %1219 = vmatpush1.msra.mxu0 %v325
    %1220 = vmatprep.subr.mxu0 0.0
    %1221 = vmatpush1.msra.mxu0 %v326
    %1222 = vmatprep.subr.mxu0 0.0
    %1223 = vmatpush1.msra.mxu0 %v327
    %1224 = vmatprep.subr.mxu0 0.0
    %1225 = vmatpush1.msra.mxu0 %v328
    %1226 = vmatprep.subr.mxu0 0.0
    %1227 = vmatpush1.msra.mxu0 %v329
    %1228 = vmatprep.subr.mxu0 0.0
    %1229 = vmatpush1.msra.mxu0 %v330
    %1230 = vmatprep.subr.mxu0 0.0
    %1231 = vmatpush1.msra.mxu0 %v331
    %1232 = vmatprep.subr.mxu0 0.0
    %1233 = vmatpush1.msra.mxu0 %v332
    %1234 = vmatprep.subr.mxu0 0.0
    %1235 = vmatpush1.msra.mxu0 %v333
    %1236 = vmatprep.subr.mxu0 0.0
    %1237 = vmatpush1.msra.mxu0 %v334
    %1238 = vmatprep.subr.mxu0 0.0
    %1239 = vmatpush1.msra.mxu0 %v335
    %1240 = vmatprep.subr.mxu0 0.0
    %1241 = vmatpush1.msra.mxu0 %v336
    %1242 = vmatprep.subr.mxu0 0.0
    %1243 = vmatpush1.msra.mxu0 %v337
    %1244 = vmatprep.subr.mxu0 0.0
    %1245 = vmatpush1.msra.mxu0 %v338
    %1246 = vmatprep.subr.mxu0 0.0
    %1247 = vmatpush1.msra.mxu0 %v339
    %1248 = vmatprep.subr.mxu0 0.0
    %1249 = vmatpush1.msra.mxu0 %v340
    %1250 = vmatprep.subr.mxu0 0.0
    %1251 = vmatpush1.msra.mxu0 %v341
    %1252 = vmatprep.subr.mxu0 0.0
    %1253 = vmatpush1.msra.mxu0 %v342
    %1254 = vmatprep.subr.mxu0 0.0
    %1255 = vmatpush1.msra.mxu0 %v343
    %1256 = vmatprep.subr.mxu0 0.0
    %1257 = vmatpush1.msra.mxu0 %v344
    %1258 = vmatprep.subr.mxu0 0.0
    %1259 = vmatpush1.msra.mxu0 %v345
    %1260 = vmatprep.subr.mxu0 0.0
    %1261 = vmatpush1.msra.mxu0 %v346
    %1262 = vmatprep.subr.mxu0 0.0
    %1263 = vmatpush1.msra.mxu0 %v347
    %1264 = vmatprep.mubr.f32.mxu0 %v518
    %1265 = vmatmul.mubr.f32.gmra.mrb[0].mxu0 %v516
    %v1266 = vpop.f32.mrb[0].mxu0
    %v1267 = vadd.f32 %v1197, %v1266
    %v1268 = vpop.f32.mrb[0].mxu0
    %1269 = vdwg.mxu0
    %1270 = vmatprep.subr.mxu0 0.0
    %1271 = vmatpush1.msra.mxu0 %v348
    %1272 = vmatprep.subr.mxu0 0.0
    %1273 = vmatpush1.msra.mxu0 %v349
    %1274 = vmatprep.subr.mxu0 0.0
    %1275 = vmatpush1.msra.mxu0 %v350
    %1276 = vmatprep.subr.mxu0 0.0
    %1277 = vmatpush1.msra.mxu0 %v351
    %1278 = vmatprep.subr.mxu0 0.0
    %1279 = vmatpush1.msra.mxu0 %v352
    %1280 = vmatprep.subr.mxu0 0.0
    %1281 = vmatpush1.msra.mxu0 %v353
    %1282 = vmatprep.subr.mxu0 0.0
    %1283 = vmatpush1.msra.mxu0 %v354
    %1284 = vmatprep.subr.mxu0 0.0
    %1285 = vmatpush1.msra.mxu0 %v355
    %1286 = vmatprep.subr.mxu0 0.0
    %1287 = vmatpush1.msra.mxu0 %v356
    %1288 = vmatprep.subr.mxu0 0.0
    %1289 = vmatpush1.msra.mxu0 %v357
    %1290 = vmatprep.subr.mxu0 0.0
    %1291 = vmatpush1.msra.mxu0 %v358
    %1292 = vmatprep.subr.mxu0 0.0
    %1293 = vmatpush1.msra.mxu0 %v359
    %1294 = vmatprep.subr.mxu0 0.0
    %1295 = vmatpush1.msra.mxu0 %v360
    %1296 = vmatprep.subr.mxu0 0.0
    %1297 = vmatpush1.msra.mxu0 %v361
    %1298 = vmatprep.subr.mxu0 0.0
    %1299 = vmatpush1.msra.mxu0 %v362
    %1300 = vmatprep.subr.mxu0 0.0
    %1301 = vmatpush1.msra.mxu0 %v363
    %1302 = vmatprep.subr.mxu0 0.0
    %1303 = vmatpush1.msra.mxu0 %v364
    %1304 = vmatprep.subr.mxu0 0.0
    %1305 = vmatpush1.msra.mxu0 %v365
    %1306 = vmatprep.subr.mxu0 0.0
    %1307 = vmatpush1.msra.mxu0 %v366
    %1308 = vmatprep.subr.mxu0 0.0
    %1309 = vmatpush1.msra.mxu0 %v367
    %1310 = vmatprep.subr.mxu0 0.0
    %1311 = vmatpush1.msra.mxu0 %v368
    %1312 = vmatprep.subr.mxu0 0.0
    %1313 = vmatpush1.msra.mxu0 %v369
    %1314 = vmatprep.subr.mxu0 0.0
    %1315 = vmatpush1.msra.mxu0 %v370
    %1316 = vmatprep.subr.mxu0 0.0
    %1317 = vmatpush1.msra.mxu0 %v371
    %1318 = vmatprep.subr.mxu0 0.0
    %1319 = vmatpush1.msra.mxu0 %v372
    %1320 = vmatprep.subr.mxu0 0.0
    %1321 = vmatpush1.msra.mxu0 %v373
    %1322 = vmatprep.subr.mxu0 0.0
    %1323 = vmatpush1.msra.mxu0 %v374
    %1324 = vmatprep.subr.mxu0 0.0
    %1325 = vmatpush1.msra.mxu0 %v375
    %1326 = vmatprep.subr.mxu0 0.0
    %1327 = vmatpush1.msra.mxu0 %v376
    %1328 = vmatprep.subr.mxu0 0.0
    %1329 = vmatpush1.msra.mxu0 %v377
    %1330 = vmatprep.subr.mxu0 0.0
    %1331 = vmatpush1.msra.mxu0 %v378
    %1332 = vmatprep.subr.mxu0 0.0
    %1333 = vmatpush1.msra.mxu0 %v379
    %1334 = vmatprep.mubr.f32.mxu0 %v534
    %1335 = vmatmul.mubr.f32.gmra.mrb[0].mxu0 %v526
    %v1336 = vpop.f32.mrb[0].mxu0
    %v1337 = vadd.f32 %v1267, %v1336
    %v1338 = vpop.f32.mrb[0].mxu0
    %1339 = vdwg.mxu0
    %1340 = vmatprep.subr.mxu0 0.0
    %1341 = vmatpush1.msra.mxu0 %v380
    %1342 = vmatprep.subr.mxu0 0.0
    %1343 = vmatpush1.msra.mxu0 %v381
    %1344 = vmatprep.subr.mxu0 0.0
    %1345 = vmatpush1.msra.mxu0 %v382
    %1346 = vmatprep.subr.mxu0 0.0
    %1347 = vmatpush1.msra.mxu0 %v383
    %1348 = vmatprep.subr.mxu0 0.0
    %1349 = vmatpush1.msra.mxu0 %v384
    %1350 = vmatprep.subr.mxu0 0.0
    %1351 = vmatpush1.msra.mxu0 %v385
    %1352 = vmatprep.subr.mxu0 0.0
    %1353 = vmatpush1.msra.mxu0 %v386
    %1354 = vmatprep.subr.mxu0 0.0
    %1355 = vmatpush1.msra.mxu0 %v387
    %1356 = vmatprep.subr.mxu0 0.0
    %1357 = vmatpush1.msra.mxu0 %v388
    %1358 = vmatprep.subr.mxu0 0.0
    %1359 = vmatpush1.msra.mxu0 %v389
    %1360 = vmatprep.subr.mxu0 0.0
    %1361 = vmatpush1.msra.mxu0 %v390
    %1362 = vmatprep.subr.mxu0 0.0
    %1363 = vmatpush1.msra.mxu0 %v391
    %1364 = vmatprep.subr.mxu0 0.0
    %1365 = vmatpush1.msra.mxu0 %v392
    %1366 = vmatprep.subr.mxu0 0.0
    %1367 = vmatpush1.msra.mxu0 %v393
    %1368 = vmatprep.subr.mxu0 0.0
    %1369 = vmatpush1.msra.mxu0 %v394
    %1370 = vmatprep.subr.mxu0 0.0
    %1371 = vmatpush1.msra.mxu0 %v395
    %1372 = vmatprep.subr.mxu0 0.0
    %1373 = vmatpush1.msra.mxu0 %v396
    %1374 = vmatprep.subr.mxu0 0.0
    %1375 = vmatpush1.msra.mxu0 %v397
    %1376 = vmatprep.subr.mxu0 0.0
    %1377 = vmatpush1.msra.mxu0 %v398
    %1378 = vmatprep.subr.mxu0 0.0
    %1379 = vmatpush1.msra.mxu0 %v399
    %1380 = vmatprep.subr.mxu0 0.0
    %1381 = vmatpush1.msra.mxu0 %v400
    %1382 = vmatprep.subr.mxu0 0.0
    %1383 = vmatpush1.msra.mxu0 %v401
    %1384 = vmatprep.subr.mxu0 0.0
    %1385 = vmatpush1.msra.mxu0 %v402
    %1386 = vmatprep.subr.mxu0 0.0
    %1387 = vmatpush1.msra.mxu0 %v403
    %1388 = vmatprep.subr.mxu0 0.0
    %1389 = vmatpush1.msra.mxu0 %v404
    %1390 = vmatprep.subr.mxu0 0.0
    %1391 = vmatpush1.msra.mxu0 %v405
    %1392 = vmatprep.subr.mxu0 0.0
    %1393 = vmatpush1.msra.mxu0 %v406
    %1394 = vmatprep.subr.mxu0 0.0
    %1395 = vmatpush1.msra.mxu0 %v407
    %1396 = vmatprep.subr.mxu0 0.0
    %1397 = vmatpush1.msra.mxu0 %v408
    %1398 = vmatprep.subr.mxu0 0.0
    %1399 = vmatpush1.msra.mxu0 %v409
    %1400 = vmatprep.subr.mxu0 0.0
    %1401 = vmatpush1.msra.mxu0 %v410
    %1402 = vmatprep.subr.mxu0 0.0
    %1403 = vmatpush1.msra.mxu0 %v411
    %1404 = vmatprep.mubr.f32.mxu0 %v535
    %1405 = vmatmul.mubr.f32.gmra.mrb[0].mxu0 %v533
    %v1406 = vpop.f32.mrb[0].mxu0
    %v1407 = vadd.f32 %v1337, %v1406
    %v1408 = vpop.f32.mrb[0].mxu0
    %1409 = vdwg.mxu0
    %1410 = vmatprep.subr.mxu0 0.0
    %1411 = vmatpush1.msra.mxu0 %v412
    %1412 = vmatprep.subr.mxu0 0.0
    %1413 = vmatpush1.msra.mxu0 %v413
    %1414 = vmatprep.subr.mxu0 0.0
    %1415 = vmatpush1.msra.mxu0 %v414
    %1416 = vmatprep.subr.mxu0 0.0
    %1417 = vmatpush1.msra.mxu0 %v415
    %1418 = vmatprep.subr.mxu0 0.0
    %1419 = vmatpush1.msra.mxu0 %v416
    %1420 = vmatprep.subr.mxu0 0.0
    %1421 = vmatpush1.msra.mxu0 %v417
    %1422 = vmatprep.subr.mxu0 0.0
    %1423 = vmatpush1.msra.mxu0 %v418
    %1424 = vmatprep.subr.mxu0 0.0
    %1425 = vmatpush1.msra.mxu0 %v419
    %1426 = vmatprep.subr.mxu0 0.0
    %1427 = vmatpush1.msra.mxu0 0.0
    %1428 = vmatprep.subr.mxu0 0.0
    %1429 = vmatpush1.msra.mxu0 0.0
    %1430 = vmatprep.subr.mxu0 0.0
    %1431 = vmatpush1.msra.mxu0 0.0
    %1432 = vmatprep.subr.mxu0 0.0
    %1433 = vmatpush1.msra.mxu0 0.0
    %1434 = vmatprep.subr.mxu0 0.0
    %1435 = vmatpush1.msra.mxu0 0.0
    %1436 = vmatprep.subr.mxu0 0.0
    %1437 = vmatpush1.msra.mxu0 0.0
    %1438 = vmatprep.subr.mxu0 0.0
    %1439 = vmatpush1.msra.mxu0 0.0
    %1440 = vmatprep.subr.mxu0 0.0
    %1441 = vmatpush1.msra.mxu0 0.0
    %1442 = vmatprep.subr.mxu0 0.0
    %1443 = vmatpush1.msra.mxu0 0.0
    %1444 = vmatprep.subr.mxu0 0.0
    %1445 = vmatpush1.msra.mxu0 0.0
    %1446 = vmatprep.subr.mxu0 0.0
    %1447 = vmatpush1.msra.mxu0 0.0
    %1448 = vmatprep.subr.mxu0 0.0
    %1449 = vmatpush1.msra.mxu0 0.0
    %1450 = vmatprep.subr.mxu0 0.0
    %1451 = vmatpush1.msra.mxu0 0.0
    %1452 = vmatprep.subr.mxu0 0.0
    %1453 = vmatpush1.msra.mxu0 0.0
    %1454 = vmatprep.subr.mxu0 0.0
    %1455 = vmatpush1.msra.mxu0 0.0
    %1456 = vmatprep.subr.mxu0 0.0
    %1457 = vmatpush1.msra.mxu0 0.0
    %1458 = vmatprep.subr.mxu0 0.0
    %1459 = vmatpush1.msra.mxu0 0.0
    %1460 = vmatprep.subr.mxu0 0.0
    %1461 = vmatpush1.msra.mxu0 0.0
    %1462 = vmatprep.subr.mxu0 0.0
    %1463 = vmatpush1.msra.mxu0 0.0
    %1464 = vmatprep.subr.mxu0 0.0
    %1465 = vmatpush1.msra.mxu0 0.0
    %1466 = vmatprep.subr.mxu0 0.0
    %1467 = vmatpush1.msra.mxu0 0.0
    %1468 = vmatprep.subr.mxu0 0.0
    %1469 = vmatpush1.msra.mxu0 0.0
    %1470 = vmatprep.subr.mxu0 0.0
    %1471 = vmatpush1.msra.mxu0 0.0
    %1472 = vmatprep.subr.mxu0 0.0
    %1473 = vmatpush1.msra.mxu0 0.0
    %1474 = vmatprep.mubr.f32.mxu0 0.0
    %1475 = vmatmul.mubr.f32.gmra.mrb[0].mxu0 %v568
    %v1476 = vpop.f32.mrb[0].mxu0
    %v1477 = vadd.f32 %v1407, %v1476
    %v1478 = vpop.f32.mrb[0].mxu0
    %1479 = vdwg.mxu0
    %v1480 = vmax.f32 %v1477, 0.0
    %v1481 = vld [vmem:[%s3] sm:$0xff]
    %v1482 = vld [vmem:[%s3 + $0x8] sm:$0xff]
    %v1483 = vld [vmem:[%s3 + $0x10] sm:$0xff]
    %v1484 = vld [vmem:[%s3 + $0x18] sm:$0xff]
    %v1485 = vld [vmem:[%s4] sm:$0x1]
    %v1487 = vlaneseq
    %v1488 = vshrl.u32 %v1487, 7
    %v1489 = vsub.s32 0, %v1488
    %v1490 = vrot.slane %v1485, %v1489
    %vm1492 = vcmask 261120
    %v1494 = vsel %vm1492, %v1480, 0
    %1496 = vmatprep.subr.mxu0 0.0
    %1497 = vmatpush1.msra.mxu0 %v1481
    %1498 = vmatprep.subr.mxu0 0.0
    %1499 = vmatpush1.msra.mxu0 %v1482
    %1500 = vmatprep.subr.mxu0 0.0
    %1501 = vmatpush1.msra.mxu0 %v1483
    %1502 = vmatprep.subr.mxu0 0.0
    %1503 = vmatpush1.msra.mxu0 %v1484
    %1504 = vmatprep.subr.mxu0 0.0
    %1505 = vmatpush1.msra.mxu0 0.0
    %1506 = vmatprep.subr.mxu0 0.0
    %1507 = vmatpush1.msra.mxu0 0.0
    %1508 = vmatprep.subr.mxu0 0.0
    %1509 = vmatpush1.msra.mxu0 0.0
    %1510 = vmatprep.subr.mxu0 0.0
    %1511 = vmatpush1.msra.mxu0 0.0
    %1512 = vmatprep.subr.mxu0 0.0
    %1513 = vmatpush1.msra.mxu0 0.0
    %1514 = vmatprep.subr.mxu0 0.0
    %1515 = vmatpush1.msra.mxu0 0.0
    %1516 = vmatprep.subr.mxu0 0.0
    %1517 = vmatpush1.msra.mxu0 0.0
    %1518 = vmatprep.subr.mxu0 0.0
    %1519 = vmatpush1.msra.mxu0 0.0
    %1520 = vmatprep.subr.mxu0 0.0
    %1521 = vmatpush1.msra.mxu0 0.0
    %1522 = vmatprep.subr.mxu0 0.0
    %1523 = vmatpush1.msra.mxu0 0.0
    %1524 = vmatprep.subr.mxu0 0.0
    %1525 = vmatpush1.msra.mxu0 0.0
    %1526 = vmatprep.subr.mxu0 0.0
    %1527 = vmatpush1.msra.mxu0 0.0
    %1528 = vmatprep.subr.mxu0 0.0
    %1529 = vmatpush1.msra.mxu0 0.0
    %1530 = vmatprep.subr.mxu0 0.0
    %1531 = vmatpush1.msra.mxu0 0.0
    %1532 = vmatprep.subr.mxu0 0.0
    %1533 = vmatpush1.msra.mxu0 0.0
    %1534 = vmatprep.subr.mxu0 0.0
    %1535 = vmatpush1.msra.mxu0 0.0
    %1536 = vmatprep.subr.mxu0 0.0
    %1537 = vmatpush1.msra.mxu0 0.0
    %1538 = vmatprep.subr.mxu0 0.0
    %1539 = vmatpush1.msra.mxu0 0.0
    %1540 = vmatprep.subr.mxu0 0.0
    %1541 = vmatpush1.msra.mxu0 0.0
    %1542 = vmatprep.subr.mxu0 0.0
    %1543 = vmatpush1.msra.mxu0 0.0
    %1544 = vmatprep.subr.mxu0 0.0
    %1545 = vmatpush1.msra.mxu0 0.0
    %1546 = vmatprep.subr.mxu0 0.0
    %1547 = vmatpush1.msra.mxu0 0.0
    %1548 = vmatprep.subr.mxu0 0.0
    %1549 = vmatpush1.msra.mxu0 0.0
    %1550 = vmatprep.subr.mxu0 0.0
    %1551 = vmatpush1.msra.mxu0 0.0
    %1552 = vmatprep.subr.mxu0 0.0
    %1553 = vmatpush1.msra.mxu0 0.0
    %1554 = vmatprep.subr.mxu0 0.0
    %1555 = vmatpush1.msra.mxu0 0.0
    %1556 = vmatprep.subr.mxu0 0.0
    %1557 = vmatpush1.msra.mxu0 0.0
    %1558 = vmatprep.subr.mxu0 0.0
    %1559 = vmatpush1.msra.mxu0 0.0
    %1560 = vmatprep.mubr.f32.mxu0 0.0
    %1561 = vmatmul.mubr.f32.gmra.mrb[0].mxu0 %v1494
    %v1562 = vpop.f32.mrb[0].mxu0
    %v1563 = vadd.f32 %v1490, %v1562
    %v1564 = vpop.f32.mrb[0].mxu0
    %1565 = vdwg.mxu0
    %vm1566 = vcmask 74752
    %1567 = vst.msk [vmem:[#allocation2] sm:$0x3] %vm1566, %v1563
    // Predicated region
    $region22: #{vgg_forward.3} parent=1 // pred_check
      _
    $region23: #{vgg_forward.3} parent=1 // pred_check_branch
      %1569 = sbr.rel (0) target = $region25
    $region24: #{vgg_forward.3} parent=1 // pred_region
      %s1571 = ssub.s32 32, 32
      %1572 = vsyncadd [#allocation3], %s1571
      %s1574 = sshll.u32 [#allocation2], 4
      %s1575 = int_to_ptr.vmem [resolvable:$true] %s1574
      %1577 = dma.vmem_to_hbm [thread:$0]  %s1575, 32, %s5, [#allocation3]
    $region25: #{vgg_forward.3} parent=1 // pred_fallthru
      _
    // Predicated region
    $region26: #{vgg_forward.3} parent=1 // pred_check
      _
    $region27: #{vgg_forward.3} parent=1 // pred_check_branch
      %1579 = sbr.rel (0) target = $region29
    $region28: #{vgg_forward.3} parent=1 // pred_region
      %1580 = dma.done [#allocation3], 32
    $region29: #{vgg_forward.3} parent=1 // pred_fallthru
      _
    %1581 = vsyncpa [#allocation3], 1

</llo_original>
